<compile_context>
chip_gen: v7x
topology: tpu7x:2x2x1
jax: 0.10.0
libtpu: 0.0.40
codegen_flags: <defaults>
</compile_context>

<pallas_src>
import functools
import numpy as np

import jax
import jax.numpy as jnp
from jax.experimental import pallas as pl
from jax.experimental.pallas import tpu as pltpu


# ---------------------------------------------------------------------------
# One-time parameter re-layout (plain JAX / numpy, outside the hot path)
# ---------------------------------------------------------------------------
def _band_selectors(k, p, j):
    """t[kw, pp, jj] = 1 iff pp == jj + kw  (shape (k, p, j))."""
    t = np.zeros((k, p, j), np.float32)
    for kw in range(k):
        for jj in range(j):
            t[kw, jj + kw, jj] = 1.0
    return t


def _col_pool_selectors(channels, width):
    """Even/odd column selectors, block-diagonal per channel."""
    wo = width // 2
    a = np.zeros((channels * width, channels * wo), np.float32)
    b = np.zeros((channels * width, channels * wo), np.float32)
    for c in range(channels):
        for pj in range(wo):
            a[c * width + 2 * pj, c * wo + pj] = 1.0
            b[c * width + 2 * pj + 1, c * wo + pj] = 1.0
    return a, b


def prepare_params(params):
    """Re-layout PyTorch-style LeNet params into the kernel operand set."""
    w1 = jnp.asarray(params["conv1_w"], jnp.float32)   # (6, 1, 5, 5)
    b1 = jnp.asarray(params["conv1_b"], jnp.float32)
    w2 = jnp.asarray(params["conv2_w"], jnp.float32)   # (16, 6, 5, 5)
    b2 = jnp.asarray(params["conv2_b"], jnp.float32)
    fw1 = jnp.asarray(params["fc1_w"], jnp.float32)    # (120, 400)
    fb1 = jnp.asarray(params["fc1_b"], jnp.float32)
    fw2 = jnp.asarray(params["fc2_w"], jnp.float32)    # (84, 120)
    fb2 = jnp.asarray(params["fc2_b"], jnp.float32)
    fw3 = jnp.asarray(params["fc3_w"], jnp.float32)    # (10, 84)
    fb3 = jnp.asarray(params["fc3_b"], jnp.float32)

    # conv1 as ONE banded GEMM (column padding folded into the weights):
    # m1s[kh*28 + c, oc*28 + j] = w1[oc, 0, kh, c + 2 - j]   (0 when out of band)
    t1 = jnp.asarray(_band_selectors(5, 32, 28))
    m1 = jnp.einsum("ohw,wpj->hpoj", w1[:, 0], t1).reshape(5, 32, 6 * 28)
    m1s = m1[:, 2:30, :].reshape(5 * 28, 6 * 28)                  # (140, 168)
    b1row = jnp.repeat(b1, 28).reshape(1, 6 * 28)

    # conv2 (valid, 6 -> 16 channels) as ONE banded GEMM:
    # m2s[kh*84 + c*14 + p, oc*10 + j] = w2[oc, c, kh, p - j]
    t2 = jnp.asarray(_band_selectors(5, 14, 10))
    m2s = jnp.einsum("ochw,wpj->hcpoj", w2, t2).reshape(5 * 6 * 14, 16 * 10)  # (420, 160)
    b2row = jnp.repeat(b2, 10).reshape(1, 16 * 10)

    # 2x2 max-pool column-selection matrices (exact 0/1 gathers, run on MXU).
    c1a, c1b = (jnp.asarray(m) for m in _col_pool_selectors(6, 28))   # (168, 84)
    c2a, c2b = (jnp.asarray(m) for m in _col_pool_selectors(16, 10))  # (160, 80)

    # fc1 as ONE GEMM; rows ordered (pooled_row pi, channel oc, pooled_col pj)
    # to match the in-kernel lane concatenation of the 5 pooled row blocks:
    # wf1s[pi*80 + oc*5 + pj, k] = fc1_w[k, oc*25 + pi*5 + pj]
    wf1s = jnp.transpose(fw1.reshape(120, 16, 5, 5), (2, 1, 3, 0)).reshape(400, 120)
    fb1row = fb1.reshape(1, 120)
    wf2 = fw2.T                                                    # (120, 84)
    fb2row = fb2.reshape(1, 84)
    # fc3 padded to 128 output lanes -> lane-dense, unmasked output stores.
    wf3p = jnp.zeros((84, 128), jnp.float32).at[:, :10].set(fw3.T)
    fb3p = jnp.zeros((1, 128), jnp.float32).at[0, :10].set(fb3)

    return (m1s, b1row, c1a, c1b,
            m2s, b2row, c2a, c2b,
            wf1s, fb1row, wf2, fb2row, wf3p, fb3p)


# ---------------------------------------------------------------------------
# Fused Pallas kernel: one grid step == TB images, whole network in VMEM.
# All activations keep rows ordered (spatial_row, image_in_block).
# ---------------------------------------------------------------------------
def _lenet_kernel(x_ref, m1_ref, b1_ref, c1a_ref, c1b_ref,
                  m2_ref, b2_ref, c2a_ref, c2b_ref,
                  wf1_ref, fb1_ref, wf2_ref, fb2_ref, wf3_ref, fb3_ref,
                  out_ref, xp_ref, *, tb):
    f32 = jnp.float32
    dot = functools.partial(jnp.dot, preferred_element_type=f32)

    # Row-pad the TB images into the (32*tb, 28) scratch (rows = (pad_row, b)).
    # Only the 4*tb padding rows are zeroed; the data rows are overwritten.
    # (Never gate this on program_id -- unsafe under "parallel" semantics.)
    xp_ref[0:2 * tb, :] = jnp.zeros((2 * tb, 28), f32)
    xp_ref[30 * tb:32 * tb, :] = jnp.zeros((2 * tb, 28), f32)
    xp_ref[2 * tb:30 * tb, :] = x_ref[...]

    # conv1 (5x5, pad=2) + bias + ReLU as ONE GEMM:
    # LHS row (i*tb + b), lanes kh*28 + c = padded pixel (i+kh, c) of image b.
    lhs1 = jnp.concatenate(
        [xp_ref[kh * tb:(kh + 28) * tb, :] for kh in range(5)], axis=1)   # (28*tb, 140)
    y1 = jnp.maximum(dot(lhs1, m1_ref[...]) + b1_ref[...], 0.0)           # (28*tb, 168)

    # 2x2 max-pool: columns via 0/1 selector GEMMs, rows via aligned reshape+max.
    h1 = jnp.maximum(dot(y1, c1a_ref[...]), dot(y1, c1b_ref[...]))        # (28*tb, 84)
    h1 = h1.reshape(14, 2 * tb, 84)
    a1 = jnp.maximum(h1[:, :tb, :], h1[:, tb:, :]).reshape(14 * tb, 84)   # (14*tb, 84)

    # conv2 (5x5 valid, 6 -> 16) + bias + ReLU as ONE GEMM.
    lhs2 = jnp.concatenate(
        [a1[kh * tb:(kh + 10) * tb, :] for kh in range(5)], axis=1)       # (10*tb, 420)
    y2 = jnp.maximum(dot(lhs2, m2_ref[...]) + b2_ref[...], 0.0)           # (10*tb, 160)

    # 2x2 max-pool.
    h2 = jnp.maximum(dot(y2, c2a_ref[...]), dot(y2, c2b_ref[...]))        # (10*tb, 80)
    h2 = h2.reshape(5, 2 * tb, 80)
    p2 = jnp.maximum(h2[:, :tb, :], h2[:, tb:, :]).reshape(5 * tb, 80)    # (5*tb, 80)

    # fc1 + ReLU as ONE GEMM: gather the 5 pooled row blocks into lanes.
    lf1 = jnp.concatenate(
        [p2[pi * tb:(pi + 1) * tb, :] for pi in range(5)], axis=1)        # (tb, 400)
    f1 = jnp.maximum(dot(lf1, wf1_ref[...]) + fb1_ref[...], 0.0)          # (tb, 120)

    # fc2 + ReLU, fc3 (logits, padded to 128 lanes for an unmasked store).
    f2 = jnp.maximum(dot(f1, wf2_ref[...]) + fb2_ref[...], 0.0)           # (tb, 84)
    out_ref[...] = dot(f2, wf3_ref[...]) + fb3_ref[...]                   # (tb, 128)


def _const_index_map(ndim):
    return lambda s: (0,) * ndim


def lenet_forward(prepared, x, tb=8):
    """x: (B, 1, 28, 28) f32 -> logits (B, 10). `prepared` = prepare_params(p)."""
    B = x.shape[0]
    assert x.shape[1:] == (1, 28, 28), "LeNet expects (B, 1, 28, 28) inputs"
    assert tb % 8 == 0, "tb must be a multiple of 8 for tile-aligned slicing"

    steps = pl.cdiv(B, tb)
    bp = steps * tb
    x2 = x.reshape(B, 28, 28).astype(jnp.float32)
    if bp != B:
        x2 = jnp.pad(x2, ((0, bp - B), (0, 0), (0, 0)))

    # Step-major, (row, image)-ordered layout so every per-step block is a
    # contiguous, lane-dense (28*tb, 28) slab: row = s*28*tb + i*tb + b.
    xs = x2.reshape(steps, tb, 28, 28).transpose(0, 2, 1, 3).reshape(steps * 28 * tb, 28)

    in_specs = [pl.BlockSpec((28 * tb, 28), lambda s: (s, 0))]
    in_specs += [pl.BlockSpec(w.shape, _const_index_map(w.ndim)) for w in prepared]

    out = pl.pallas_call(
        functools.partial(_lenet_kernel, tb=tb),
        out_shape=jax.ShapeDtypeStruct((bp, 128), jnp.float32),
        grid=(steps,),
        in_specs=in_specs,
        out_specs=pl.BlockSpec((tb, 128), lambda s: (s, 0)),
        scratch_shapes=[pltpu.VMEM((32 * tb, 28), jnp.float32)],
        compiler_params=pltpu.CompilerParams(
            dimension_semantics=("parallel",)),  # v7x: 2nd TC splits the steps
    )(xs, *prepared)
    return out[:B, :10]


# ---------------------------------------------------------------------------
# Parameters + pure-JAX reference (for correctness check)
# ---------------------------------------------------------------------------
def init_params(key):
    ks = jax.random.split(key, 10)
    s = 0.05
    return {
        "conv1_w": s * jax.random.normal(ks[0], (6, 1, 5, 5), jnp.float32),
        "conv1_b": s * jax.random.normal(ks[1], (6,), jnp.float32),
        "conv2_w": s * jax.random.normal(ks[2], (16, 6, 5, 5), jnp.float32),
        "conv2_b": s * jax.random.normal(ks[3], (16,), jnp.float32),
        "fc1_w": s * jax.random.normal(ks[4], (120, 400), jnp.float32),
        "fc1_b": s * jax.random.normal(ks[5], (120,), jnp.float32),
        "fc2_w": s * jax.random.normal(ks[6], (84, 120), jnp.float32),
        "fc2_b": s * jax.random.normal(ks[7], (84,), jnp.float32),
        "fc3_w": s * jax.random.normal(ks[8], (10, 84), jnp.float32),
        "fc3_b": s * jax.random.normal(ks[9], (10,), jnp.float32),
    }


def _ref_conv(x, w, b, padding):
    y = jax.lax.conv_general_dilated(
        x, w, window_strides=(1, 1),
        padding=[(padding, padding), (padding, padding)],
        dimension_numbers=("NCHW", "OIHW", "NCHW"))
    return y + b.reshape(1, -1, 1, 1)


def _ref_pool(x):
    B, C, H, W = x.shape
    return x.reshape(B, C, H // 2, 2, W // 2, 2).max(axis=(3, 5))


def reference_forward(params, x):
    x = _ref_pool(jax.nn.relu(_ref_conv(x, params["conv1_w"], params["conv1_b"], 2)))
    x = _ref_pool(jax.nn.relu(_ref_conv(x, params["conv2_w"], params["conv2_b"], 0)))
    x = x.reshape(x.shape[0], -1)
    x = jax.nn.relu(x @ params["fc1_w"].T + params["fc1_b"])
    x = jax.nn.relu(x @ params["fc2_w"].T + params["fc2_b"])
    return x @ params["fc3_w"].T + params["fc3_b"]


if __name__ == "__main__":
    B, TB = 16, 8   # 2 grid steps of 8 images each (keeps both v7x TCs busy)
    x = jax.random.normal(jax.random.PRNGKey(0), (B, 1, 28, 28), dtype=jnp.float32)
    params = init_params(jax.random.PRNGKey(1))
    prepared = prepare_params(params)   # one-time weight re-layout

    fwd = jax.jit(functools.partial(lenet_forward, tb=TB))
    logits = fwd(prepared, x)
    jax.block_until_ready(logits)
    assert logits.shape == (B, 10) and logits.dtype == jnp.float32

    ref = reference_forward(params, x)
    err = jnp.max(jnp.abs(logits - ref))
    assert jnp.allclose(logits, ref, atol=5e-4, rtol=5e-4), f"mismatch vs reference, max|err|={err}"

    print("KERNEL_OK")
</pallas_src>

<mosaic_0001>
module attributes {stable_mosaic.version = 11 : i64} {
  func.func @_lenet_kernel(%arg0: i32, %arg1: memref<224x28xf32, #tpu.memory_space<vmem>>, %arg2: memref<140x168xf32, #tpu.memory_space<vmem>>, %arg3: memref<1x168xf32, #tpu.memory_space<vmem>>, %arg4: memref<168x84xf32, #tpu.memory_space<vmem>>, %arg5: memref<168x84xf32, #tpu.memory_space<vmem>>, %arg6: memref<420x160xf32, #tpu.memory_space<vmem>>, %arg7: memref<1x160xf32, #tpu.memory_space<vmem>>, %arg8: memref<160x80xf32, #tpu.memory_space<vmem>>, %arg9: memref<160x80xf32, #tpu.memory_space<vmem>>, %arg10: memref<400x120xf32, #tpu.memory_space<vmem>>, %arg11: memref<1x120xf32, #tpu.memory_space<vmem>>, %arg12: memref<120x84xf32, #tpu.memory_space<vmem>>, %arg13: memref<1x84xf32, #tpu.memory_space<vmem>>, %arg14: memref<84x128xf32, #tpu.memory_space<vmem>>, %arg15: memref<1x128xf32, #tpu.memory_space<vmem>>, %arg16: memref<8x128xf32, #tpu.memory_space<vmem>>, %arg17: memref<256x28xf32, #tpu.memory_space<vmem>>) attributes {dimension_semantics = [#tpu.dimension_semantics<parallel>], iteration_bounds = array<i64: 2>, scalar_prefetch = 0 : i64, scratch_operands = 1 : i64, tpu.core_type = #tpu.core_type<tc>, window_params = [{transform_indices = @transform_0, window_bounds = array<i64: 224, 28>}, {pipeline_mode = #tpu.pipeline_mode<synchronous>, transform_indices = @transform_1, window_bounds = array<i64: 140, 168>}, {pipeline_mode = #tpu.pipeline_mode<synchronous>, transform_indices = @transform_2, window_bounds = array<i64: 1, 168>}, {pipeline_mode = #tpu.pipeline_mode<synchronous>, transform_indices = @transform_3, window_bounds = array<i64: 168, 84>}, {pipeline_mode = #tpu.pipeline_mode<synchronous>, transform_indices = @transform_4, window_bounds = array<i64: 168, 84>}, {pipeline_mode = #tpu.pipeline_mode<synchronous>, transform_indices = @transform_5, window_bounds = array<i64: 420, 160>}, {pipeline_mode = #tpu.pipeline_mode<synchronous>, transform_indices = @transform_6, window_bounds = array<i64: 1, 160>}, {pipeline_mode = #tpu.pipeline_mode<synchronous>, transform_indices = @transform_7, window_bounds = array<i64: 160, 80>}, {pipeline_mode = #tpu.pipeline_mode<synchronous>, transform_indices = @transform_8, window_bounds = array<i64: 160, 80>}, {pipeline_mode = #tpu.pipeline_mode<synchronous>, transform_indices = @transform_9, window_bounds = array<i64: 400, 120>}, {pipeline_mode = #tpu.pipeline_mode<synchronous>, transform_indices = @transform_10, window_bounds = array<i64: 1, 120>}, {pipeline_mode = #tpu.pipeline_mode<synchronous>, transform_indices = @transform_11, window_bounds = array<i64: 120, 84>}, {pipeline_mode = #tpu.pipeline_mode<synchronous>, transform_indices = @transform_12, window_bounds = array<i64: 1, 84>}, {pipeline_mode = #tpu.pipeline_mode<synchronous>, transform_indices = @transform_13, window_bounds = array<i64: 84, 128>}, {pipeline_mode = #tpu.pipeline_mode<synchronous>, transform_indices = @transform_14, window_bounds = array<i64: 1, 128>}, {transform_indices = @transform_15, window_bounds = array<i64: 8, 128>}]} {
    %cst = arith.constant 0.000000e+00 : f32
    %0 = vector.broadcast %cst : f32 to vector<16x28xf32>
    %c0 = arith.constant 0 : index
    %c0_0 = arith.constant 0 : index
    %1 = vector.load %arg17[%c0, %c0_0] : memref<256x28xf32, #tpu.memory_space<vmem>>, vector<16x28xf32>
    tpu.vector_store %arg17[%c0, %c0_0], %0 {strides = array<i32>} : memref<256x28xf32, #tpu.memory_space<vmem>>, vector<16x28xf32>,
    %cst_1 = arith.constant 0.000000e+00 : f32
    %2 = vector.broadcast %cst_1 : f32 to vector<16x28xf32>
    %c240 = arith.constant 240 : index
    %c0_2 = arith.constant 0 : index
    %3 = vector.load %arg17[%c240, %c0_2] : memref<256x28xf32, #tpu.memory_space<vmem>>, vector<16x28xf32>
    tpu.vector_store %arg17[%c240, %c0_2], %2 {strides = array<i32>} : memref<256x28xf32, #tpu.memory_space<vmem>>, vector<16x28xf32>,
    %c0_3 = arith.constant 0 : index
    %c0_4 = arith.constant 0 : index
    %4 = vector.load %arg1[%c0_3, %c0_4] : memref<224x28xf32, #tpu.memory_space<vmem>>, vector<224x28xf32>
    %c16 = arith.constant 16 : index
    %c0_5 = arith.constant 0 : index
    %5 = vector.load %arg17[%c16, %c0_5] : memref<256x28xf32, #tpu.memory_space<vmem>>, vector<224x28xf32>
    tpu.vector_store %arg17[%c16, %c0_5], %4 {strides = array<i32>} : memref<256x28xf32, #tpu.memory_space<vmem>>, vector<224x28xf32>,
    %c0_6 = arith.constant 0 : index
    %c0_7 = arith.constant 0 : index
    %6 = vector.load %arg17[%c0_6, %c0_7] : memref<256x28xf32, #tpu.memory_space<vmem>>, vector<224x28xf32>
    %c8 = arith.constant 8 : index
    %c0_8 = arith.constant 0 : index
    %7 = vector.load %arg17[%c8, %c0_8] : memref<256x28xf32, #tpu.memory_space<vmem>>, vector<224x28xf32>
    %c16_9 = arith.constant 16 : index
    %c0_10 = arith.constant 0 : index
    %8 = vector.load %arg17[%c16_9, %c0_10] : memref<256x28xf32, #tpu.memory_space<vmem>>, vector<224x28xf32>
    %c24 = arith.constant 24 : index
    %c0_11 = arith.constant 0 : index
    %9 = vector.load %arg17[%c24, %c0_11] : memref<256x28xf32, #tpu.memory_space<vmem>>, vector<224x28xf32>
    %c32 = arith.constant 32 : index
    %c0_12 = arith.constant 0 : index
    %10 = vector.load %arg17[%c32, %c0_12] : memref<256x28xf32, #tpu.memory_space<vmem>>, vector<224x28xf32>
    %11 = tpu.concatenate %6, %7, %8, %9, %10 in 1 : vector<224x28xf32>, vector<224x28xf32>, vector<224x28xf32>, vector<224x28xf32>, vector<224x28xf32> -> vector<224x140xf32>
    %c0_13 = arith.constant 0 : index
    %c0_14 = arith.constant 0 : index
    %12 = vector.load %arg2[%c0_13, %c0_14] : memref<140x168xf32, #tpu.memory_space<vmem>>, vector<140x168xf32>
    %cst_15 = arith.constant dense<0.000000e+00> : vector<224x168xf32>
    %13 = tpu.matmul %11, %12, %cst_15 {dimension_numbers = #tpu.dot_dimension_numbers<[1], [0], [0], [1], [0, 0, 1, 1], [], []>} : vector<224x140xf32>, vector<140x168xf32>, vector<224x168xf32> -> vector<224x168xf32>
    %c0_16 = arith.constant 0 : index
    %c0_17 = arith.constant 0 : index
    %14 = vector.load %arg3[%c0_16, %c0_17] : memref<1x168xf32, #tpu.memory_space<vmem>>, vector<1x168xf32>
    %15 = vector.broadcast %14 : vector<1x168xf32> to vector<224x168xf32>
    %16 = arith.addf %13, %15 : vector<224x168xf32>
    %cst_18 = arith.constant 0.000000e+00 : f32
    %17 = vector.broadcast %cst_18 : f32 to vector<224x168xf32>
    %18 = arith.maximumf %16, %17 : vector<224x168xf32>
    %c0_19 = arith.constant 0 : index
    %c0_20 = arith.constant 0 : index
    %19 = vector.load %arg4[%c0_19, %c0_20] : memref<168x84xf32, #tpu.memory_space<vmem>>, vector<168x84xf32>
    %cst_21 = arith.constant dense<0.000000e+00> : vector<224x84xf32>
    %20 = tpu.matmul %18, %19, %cst_21 {dimension_numbers = #tpu.dot_dimension_numbers<[1], [0], [0], [1], [0, 0, 1, 1], [], []>} : vector<224x168xf32>, vector<168x84xf32>, vector<224x84xf32> -> vector<224x84xf32>
    %c0_22 = arith.constant 0 : index
    %c0_23 = arith.constant 0 : index
    %21 = vector.load %arg5[%c0_22, %c0_23] : memref<168x84xf32, #tpu.memory_space<vmem>>, vector<168x84xf32>
    %cst_24 = arith.constant dense<0.000000e+00> : vector<224x84xf32>
    %22 = tpu.matmul %18, %21, %cst_24 {dimension_numbers = #tpu.dot_dimension_numbers<[1], [0], [0], [1], [0, 0, 1, 1], [], []>} : vector<224x168xf32>, vector<168x84xf32>, vector<224x84xf32> -> vector<224x84xf32>
    %23 = arith.maximumf %20, %22 : vector<224x84xf32>
    %24 = vector.shape_cast %23 : vector<224x84xf32> to vector<14x16x84xf32>
    %25 = vector.extract_strided_slice %24 {offsets = [0, 0, 0], sizes = [14, 8, 84], strides = [1, 1, 1]} : vector<14x16x84xf32> to vector<14x8x84xf32>
    %26 = vector.extract_strided_slice %24 {offsets = [0, 8, 0], sizes = [14, 8, 84], strides = [1, 1, 1]} : vector<14x16x84xf32> to vector<14x8x84xf32>
    %27 = arith.maximumf %25, %26 : vector<14x8x84xf32>
    %28 = vector.shape_cast %27 : vector<14x8x84xf32> to vector<112x84xf32>
    %29 = vector.extract_strided_slice %28 {offsets = [0, 0], sizes = [80, 84], strides = [1, 1]} : vector<112x84xf32> to vector<80x84xf32>
    %30 = vector.extract_strided_slice %28 {offsets = [8, 0], sizes = [80, 84], strides = [1, 1]} : vector<112x84xf32> to vector<80x84xf32>
    %31 = vector.extract_strided_slice %28 {offsets = [16, 0], sizes = [80, 84], strides = [1, 1]} : vector<112x84xf32> to vector<80x84xf32>
    %32 = vector.extract_strided_slice %28 {offsets = [24, 0], sizes = [80, 84], strides = [1, 1]} : vector<112x84xf32> to vector<80x84xf32>
    %33 = vector.extract_strided_slice %28 {offsets = [32, 0], sizes = [80, 84], strides = [1, 1]} : vector<112x84xf32> to vector<80x84xf32>
    %34 = tpu.concatenate %29, %30, %31, %32, %33 in 1 : vector<80x84xf32>, vector<80x84xf32>, vector<80x84xf32>, vector<80x84xf32>, vector<80x84xf32> -> vector<80x420xf32>
    %c0_25 = arith.constant 0 : index
    %c0_26 = arith.constant 0 : index
    %35 = vector.load %arg6[%c0_25, %c0_26] : memref<420x160xf32, #tpu.memory_space<vmem>>, vector<420x160xf32>
    %cst_27 = arith.constant dense<0.000000e+00> : vector<80x160xf32>
    %36 = tpu.matmul %34, %35, %cst_27 {dimension_numbers = #tpu.dot_dimension_numbers<[1], [0], [0], [1], [0, 0, 1, 1], [], []>} : vector<80x420xf32>, vector<420x160xf32>, vector<80x160xf32> -> vector<80x160xf32>
    %c0_28 = arith.constant 0 : index
    %c0_29 = arith.constant 0 : index
    %37 = vector.load %arg7[%c0_28, %c0_29] : memref<1x160xf32, #tpu.memory_space<vmem>>, vector<1x160xf32>
    %38 = vector.broadcast %37 : vector<1x160xf32> to vector<80x160xf32>
    %39 = arith.addf %36, %38 : vector<80x160xf32>
    %cst_30 = arith.constant 0.000000e+00 : f32
    %40 = vector.broadcast %cst_30 : f32 to vector<80x160xf32>
    %41 = arith.maximumf %39, %40 : vector<80x160xf32>
    %c0_31 = arith.constant 0 : index
    %c0_32 = arith.constant 0 : index
    %42 = vector.load %arg8[%c0_31, %c0_32] : memref<160x80xf32, #tpu.memory_space<vmem>>, vector<160x80xf32>
    %cst_33 = arith.constant dense<0.000000e+00> : vector<80x80xf32>
    %43 = tpu.matmul %41, %42, %cst_33 {dimension_numbers = #tpu.dot_dimension_numbers<[1], [0], [0], [1], [0, 0, 1, 1], [], []>} : vector<80x160xf32>, vector<160x80xf32>, vector<80x80xf32> -> vector<80x80xf32>
    %c0_34 = arith.constant 0 : index
    %c0_35 = arith.constant 0 : index
    %44 = vector.load %arg9[%c0_34, %c0_35] : memref<160x80xf32, #tpu.memory_space<vmem>>, vector<160x80xf32>
    %cst_36 = arith.constant dense<0.000000e+00> : vector<80x80xf32>
    %45 = tpu.matmul %41, %44, %cst_36 {dimension_numbers = #tpu.dot_dimension_numbers<[1], [0], [0], [1], [0, 0, 1, 1], [], []>} : vector<80x160xf32>, vector<160x80xf32>, vector<80x80xf32> -> vector<80x80xf32>
    %46 = arith.maximumf %43, %45 : vector<80x80xf32>
    %47 = vector.shape_cast %46 : vector<80x80xf32> to vector<5x16x80xf32>
    %48 = vector.extract_strided_slice %47 {offsets = [0, 0, 0], sizes = [5, 8, 80], strides = [1, 1, 1]} : vector<5x16x80xf32> to vector<5x8x80xf32>
    %49 = vector.extract_strided_slice %47 {offsets = [0, 8, 0], sizes = [5, 8, 80], strides = [1, 1, 1]} : vector<5x16x80xf32> to vector<5x8x80xf32>
    %50 = arith.maximumf %48, %49 : vector<5x8x80xf32>
    %51 = vector.shape_cast %50 : vector<5x8x80xf32> to vector<40x80xf32>
    %52 = vector.extract_strided_slice %51 {offsets = [0, 0], sizes = [8, 80], strides = [1, 1]} : vector<40x80xf32> to vector<8x80xf32>
    %53 = vector.extract_strided_slice %51 {offsets = [8, 0], sizes = [8, 80], strides = [1, 1]} : vector<40x80xf32> to vector<8x80xf32>
    %54 = vector.extract_strided_slice %51 {offsets = [16, 0], sizes = [8, 80], strides = [1, 1]} : vector<40x80xf32> to vector<8x80xf32>
    %55 = vector.extract_strided_slice %51 {offsets = [24, 0], sizes = [8, 80], strides = [1, 1]} : vector<40x80xf32> to vector<8x80xf32>
    %56 = vector.extract_strided_slice %51 {offsets = [32, 0], sizes = [8, 80], strides = [1, 1]} : vector<40x80xf32> to vector<8x80xf32>
    %57 = tpu.concatenate %52, %53, %54, %55, %56 in 1 : vector<8x80xf32>, vector<8x80xf32>, vector<8x80xf32>, vector<8x80xf32>, vector<8x80xf32> -> vector<8x400xf32>
    %c0_37 = arith.constant 0 : index
    %c0_38 = arith.constant 0 : index
    %58 = vector.load %arg10[%c0_37, %c0_38] : memref<400x120xf32, #tpu.memory_space<vmem>>, vector<400x120xf32>
    %cst_39 = arith.constant dense<0.000000e+00> : vector<8x120xf32>
    %59 = tpu.matmul %57, %58, %cst_39 {dimension_numbers = #tpu.dot_dimension_numbers<[1], [0], [0], [1], [0, 0, 1, 1], [], []>} : vector<8x400xf32>, vector<400x120xf32>, vector<8x120xf32> -> vector<8x120xf32>
    %c0_40 = arith.constant 0 : index
    %c0_41 = arith.constant 0 : index
    %60 = vector.load %arg11[%c0_40, %c0_41] : memref<1x120xf32, #tpu.memory_space<vmem>>, vector<1x120xf32>
    %61 = vector.broadcast %60 : vector<1x120xf32> to vector<8x120xf32>
    %62 = arith.addf %59, %61 : vector<8x120xf32>
    %cst_42 = arith.constant 0.000000e+00 : f32
    %63 = vector.broadcast %cst_42 : f32 to vector<8x120xf32>
    %64 = arith.maximumf %62, %63 : vector<8x120xf32>
    %c0_43 = arith.constant 0 : index
    %c0_44 = arith.constant 0 : index
    %65 = vector.load %arg12[%c0_43, %c0_44] : memref<120x84xf32, #tpu.memory_space<vmem>>, vector<120x84xf32>
    %cst_45 = arith.constant dense<0.000000e+00> : vector<8x84xf32>
    %66 = tpu.matmul %64, %65, %cst_45 {dimension_numbers = #tpu.dot_dimension_numbers<[1], [0], [0], [1], [0, 0, 1, 1], [], []>} : vector<8x120xf32>, vector<120x84xf32>, vector<8x84xf32> -> vector<8x84xf32>
    %c0_46 = arith.constant 0 : index
    %c0_47 = arith.constant 0 : index
    %67 = vector.load %arg13[%c0_46, %c0_47] : memref<1x84xf32, #tpu.memory_space<vmem>>, vector<1x84xf32>
    %68 = vector.broadcast %67 : vector<1x84xf32> to vector<8x84xf32>
    %69 = arith.addf %66, %68 : vector<8x84xf32>
    %cst_48 = arith.constant 0.000000e+00 : f32
    %70 = vector.broadcast %cst_48 : f32 to vector<8x84xf32>
    %71 = arith.maximumf %69, %70 : vector<8x84xf32>
    %c0_49 = arith.constant 0 : index
    %c0_50 = arith.constant 0 : index
    %72 = vector.load %arg14[%c0_49, %c0_50] : memref<84x128xf32, #tpu.memory_space<vmem>>, vector<84x128xf32>
    %cst_51 = arith.constant dense<0.000000e+00> : vector<8x128xf32>
    %73 = tpu.matmul %71, %72, %cst_51 {dimension_numbers = #tpu.dot_dimension_numbers<[1], [0], [0], [1], [0, 0, 1, 1], [], []>} : vector<8x84xf32>, vector<84x128xf32>, vector<8x128xf32> -> vector<8x128xf32>
    %c0_52 = arith.constant 0 : index
    %c0_53 = arith.constant 0 : index
    %74 = vector.load %arg15[%c0_52, %c0_53] : memref<1x128xf32, #tpu.memory_space<vmem>>, vector<1x128xf32>
    %75 = vector.broadcast %74 : vector<1x128xf32> to vector<8x128xf32>
    %76 = arith.addf %73, %75 : vector<8x128xf32>
    %c0_54 = arith.constant 0 : index
    %c0_55 = arith.constant 0 : index
    %77 = vector.load %arg16[%c0_54, %c0_55] : memref<8x128xf32, #tpu.memory_space<vmem>>, vector<8x128xf32>
    tpu.vector_store %arg16[%c0_54, %c0_55], %76 {strides = array<i32>} : memref<8x128xf32, #tpu.memory_space<vmem>>, vector<8x128xf32>,
    return
  }
  func.func @transform_0(%arg0: i32) -> (i32, i32) {
    %c0_i32 = arith.constant 0 : i32
    %c0_i32_0 = arith.constant 0 : i32
    return %arg0, %c0_i32 : i32, i32
  }
  func.func @transform_1(%arg0: i32) -> (i32, i32) {
    %c0_i32 = arith.constant 0 : i32
    %c0_i32_0 = arith.constant 0 : i32
    %c0_i32_1 = arith.constant 0 : i32
    return %c0_i32, %c0_i32_0 : i32, i32
  }
  func.func @transform_2(%arg0: i32) -> (i32, i32) {
    %c0_i32 = arith.constant 0 : i32
    %c0_i32_0 = arith.constant 0 : i32
    %c0_i32_1 = arith.constant 0 : i32
    return %c0_i32, %c0_i32_0 : i32, i32
  }
  func.func @transform_3(%arg0: i32) -> (i32, i32) {
    %c0_i32 = arith.constant 0 : i32
    %c0_i32_0 = arith.constant 0 : i32
    %c0_i32_1 = arith.constant 0 : i32
    return %c0_i32, %c0_i32_0 : i32, i32
  }
  func.func @transform_4(%arg0: i32) -> (i32, i32) {
    %c0_i32 = arith.constant 0 : i32
    %c0_i32_0 = arith.constant 0 : i32
    %c0_i32_1 = arith.constant 0 : i32
    return %c0_i32, %c0_i32_0 : i32, i32
  }
  func.func @transform_5(%arg0: i32) -> (i32, i32) {
    %c0_i32 = arith.constant 0 : i32
    %c0_i32_0 = arith.constant 0 : i32
    %c0_i32_1 = arith.constant 0 : i32
    return %c0_i32, %c0_i32_0 : i32, i32
  }
  func.func @transform_6(%arg0: i32) -> (i32, i32) {
    %c0_i32 = arith.constant 0 : i32
    %c0_i32_0 = arith.constant 0 : i32
    %c0_i32_1 = arith.constant 0 : i32
    return %c0_i32, %c0_i32_0 : i32, i32
  }
  func.func @transform_7(%arg0: i32) -> (i32, i32) {
    %c0_i32 = arith.constant 0 : i32
    %c0_i32_0 = arith.constant 0 : i32
    %c0_i32_1 = arith.constant 0 : i32
    return %c0_i32, %c0_i32_0 : i32, i32
  }
  func.func @transform_8(%arg0: i32) -> (i32, i32) {
    %c0_i32 = arith.constant 0 : i32
    %c0_i32_0 = arith.constant 0 : i32
    %c0_i32_1 = arith.constant 0 : i32
    return %c0_i32, %c0_i32_0 : i32, i32
  }
  func.func @transform_9(%arg0: i32) -> (i32, i32) {
    %c0_i32 = arith.constant 0 : i32
    %c0_i32_0 = arith.constant 0 : i32
    %c0_i32_1 = arith.constant 0 : i32
    return %c0_i32, %c0_i32_0 : i32, i32
  }
  func.func @transform_10(%arg0: i32) -> (i32, i32) {
    %c0_i32 = arith.constant 0 : i32
    %c0_i32_0 = arith.constant 0 : i32
    %c0_i32_1 = arith.constant 0 : i32
    return %c0_i32, %c0_i32_0 : i32, i32
  }
  func.func @transform_11(%arg0: i32) -> (i32, i32) {
    %c0_i32 = arith.constant 0 : i32
    %c0_i32_0 = arith.constant 0 : i32
    %c0_i32_1 = arith.constant 0 : i32
    return %c0_i32, %c0_i32_0 : i32, i32
  }
  func.func @transform_12(%arg0: i32) -> (i32, i32) {
    %c0_i32 = arith.constant 0 : i32
    %c0_i32_0 = arith.constant 0 : i32
    %c0_i32_1 = arith.constant 0 : i32
    return %c0_i32, %c0_i32_0 : i32, i32
  }
  func.func @transform_13(%arg0: i32) -> (i32, i32) {
    %c0_i32 = arith.constant 0 : i32
    %c0_i32_0 = arith.constant 0 : i32
    %c0_i32_1 = arith.constant 0 : i32
    return %c0_i32, %c0_i32_0 : i32, i32
  }
  func.func @transform_14(%arg0: i32) -> (i32, i32) {
    %c0_i32 = arith.constant 0 : i32
    %c0_i32_0 = arith.constant 0 : i32
    %c0_i32_1 = arith.constant 0 : i32
    return %c0_i32, %c0_i32_0 : i32, i32
  }
  func.func @transform_15(%arg0: i32) -> (i32, i32) {
    %c0_i32 = arith.constant 0 : i32
    %c0_i32_0 = arith.constant 0 : i32
    return %arg0, %c0_i32 : i32, i32
  }
}

</mosaic_0001>

<llo_original>
// kernel: lenet_forward.1
$region0: #{lenet_forward.1}
  #allocation0 [shape = 'u32[]', space=smem, size = 0x4, offset = 0x4, fixed_abs, tag = 'smem constant byte address 0x4 - core index']
  #allocation1 [shape = 'u32[144,128]{1,0:T(1,128)}', space=vmem, size = 0x12000, scoped, tag = 'internal scratch']
  #allocation2 [shape = 'f32[256,28]{1,0:T(8,128)}', space=vmem, size = 0x20000, scoped, tag = 'scratch operand']
  %s0 = inlined_call_operand.vmem [shape: f32[448,28], index: 0, kind: input, shape index: {}]
  %s1 = inlined_call_operand.vmem [shape: f32[140,168], index: 1, kind: input, shape index: {}]
  %s2 = inlined_call_operand.vmem [shape: f32[1,168], index: 2, kind: input, shape index: {}]
  %s3 = inlined_call_operand.vmem [shape: f32[168,84], index: 3, kind: input, shape index: {}]
  %s4 = inlined_call_operand.vmem [shape: f32[168,84], index: 4, kind: input, shape index: {}]
  %s5 = inlined_call_operand.vmem [shape: f32[420,160], index: 5, kind: input, shape index: {}]
  %s6 = inlined_call_operand.vmem [shape: f32[1,160], index: 6, kind: input, shape index: {}]
  %s7 = inlined_call_operand.vmem [shape: f32[160,80], index: 7, kind: input, shape index: {}]
  %s8 = inlined_call_operand.vmem [shape: f32[160,80], index: 8, kind: input, shape index: {}]
  %s9 = inlined_call_operand.vmem [shape: f32[400,120], index: 9, kind: input, shape index: {}]
  %s10 = inlined_call_operand.vmem [shape: f32[1,120], index: 10, kind: input, shape index: {}]
  %s11 = inlined_call_operand.vmem [shape: f32[120,84], index: 11, kind: input, shape index: {}]
  %s12 = inlined_call_operand.vmem [shape: f32[1,84], index: 12, kind: input, shape index: {}]
  %s13 = inlined_call_operand.vmem [shape: f32[84,128], index: 13, kind: input, shape index: {}]
  %s14 = inlined_call_operand.vmem [shape: f32[1,128], index: 14, kind: input, shape index: {}]
  %s15 = inlined_call_operand.hbm [shape: f32[16,128], index: 15, kind: output, shape index: {}]
  %s16 = sld [smem:[#allocation0]]
  $region93: #{lenet_forward.1} parent=0
    _
  %s18 = ssub.s32 1, %s16
  %s19 = scalar_select 0, %s18, %s16
  $region1: #{lenet_forward.1} parent=0
    #allocation3 [shape = 'u8[8192]{0}', space=vmem, size = 0x2000, scoped, tag = 'output window, operand 0']
    #allocation4 [shape = 's32[2]{0}', space=sflag, size = 0x8, scoped, tag = 'scoped memory for lenet_forward.1']
    %20 = vsyncpa [#allocation4], 0
    %s21 = scalar_lea.sflag [#allocation4], 1
    %22 = vsyncpa %s21, 0
    loop: start=0, step=1, limit=4
    $region2: #{lenet_forward.1} parent=1 // loop_pre_header
      _
    $region3: #{lenet_forward.1} parent=1 // loop_header
      %s24 = sphi 0, %s28
      %p25 = scmp.ge.s32.totalorder %s24, 4
      %s34 = sphi 0, %s36
      %s37 = sphi 0, %s34
      %s38 = sphi 0, %s37
      %s54 = sphi 0, %s38
      %s58 = sphi 0, %s58
      %s60 = sphi 0, %s58
      %s61 = sphi 0, %s60
      %s75 = sphi 0, %s61
      %s79 = sphi 0, %s79
      %s81 = sphi 0, %s79
      %s82 = sphi 0, %s81
      %s96 = sphi 0, %s82
      %s100 = sphi 0, %s100
      %s102 = sphi 0, %s100
      %s103 = sphi 0, %s102
      %s117 = sphi 0, %s103
      %s121 = sphi 0, %s121
      %s123 = sphi 0, %s121
      %s124 = sphi 0, %s123
      %s138 = sphi 0, %s124
      %s142 = sphi 0, %s142
      %s144 = sphi 0, %s142
      %s145 = sphi 0, %s144
      %s159 = sphi 0, %s145
      %s163 = sphi 0, %s163
      %s165 = sphi 0, %s163
      %s166 = sphi 0, %s165
      %s180 = sphi 0, %s166
      %s184 = sphi 0, %s184
      %s186 = sphi 0, %s184
      %s187 = sphi 0, %s186
      %s201 = sphi 0, %s187
      %s205 = sphi 0, %s205
      %s207 = sphi 0, %s205
      %s208 = sphi 0, %s207
      %s222 = sphi 0, %s208
      %s226 = sphi 0, %s226
      %s228 = sphi 0, %s226
      %s229 = sphi 0, %s228
      %s243 = sphi 0, %s229
      %s247 = sphi 0, %s247
      %s249 = sphi 0, %s247
      %s250 = sphi 0, %s249
      %s264 = sphi 0, %s250
      %s268 = sphi 0, %s268
      %s270 = sphi 0, %s268
      %s271 = sphi 0, %s270
      %s285 = sphi 0, %s271
      %s289 = sphi 0, %s289
      %s291 = sphi 0, %s289
      %s292 = sphi 0, %s291
      %s306 = sphi 0, %s292
      %s310 = sphi 0, %s310
      %s312 = sphi 0, %s310
      %s313 = sphi 0, %s312
      %s327 = sphi 0, %s313
      %s331 = sphi 0, %s331
      %s333 = sphi 0, %s331
      %s334 = sphi 0, %s333
      %s348 = sphi 0, %s334
      %s354 = sphi 0, %s356
      %s357 = sphi 0, %s354
      %s358 = sphi 0, %s357
      %s374 = sphi 0, %s358
    $region4: #{lenet_forward.1} parent=1 // loop_header_branch
      %27 = sbr.rel (%p25) target = $region8
    $region5: #{lenet_forward.1} parent=1 // loop_body
      %s29 = ssub.s32 %s24, 1
      %s30 = ssub.s32 %s24, 2
      %s31 = sadd.s32 %s24, 1
      %s32 = ssub.s32 %s24, %s31
      %p33 = scmp.eq.s32.totalorder %s32, 0
      %s35 = sadd.s32 %s34, 1
      %s36 = scalar_select %p33, %s34, %s35
      %p39 = pneg %p33
      %p40 = scmp.eq.s32.totalorder %s24, 1
      %p41 = por %p39, %p40
      %p42 = scmp.ne.s32.totalorder %s34, %s37
      %p43 = scmp.eq.s32.totalorder %s24, 0
      %p44 = por %p42, %p43
      %p45 = scmp.ne.s32.totalorder %s34, %s37
      %p46 = scmp.eq.s32.totalorder %s29, 1
      %p47 = por %p45, %p46
      %p48 = scmp.ne.s32.totalorder %s37, %s38
      %p49 = scmp.eq.s32.totalorder %s29, 0
      %p50 = por %p48, %p49
      %p51 = scmp.ne.s32.totalorder %s37, %s38
      %p52 = scmp.eq.s32.totalorder %s30, 1
      %p53 = por %p51, %p52
      %p55 = scmp.ne.s32.totalorder %s38, %s54
      %p56 = scmp.eq.s32.totalorder %s30, 0
      %p57 = por %p55, %p56
      %s59 = sadd.s32 %s58, 1
      %p62 = scmp.eq.s32.totalorder %s24, 1
      %p63 = scmp.ne.s32.totalorder %s58, %s60
      %p64 = scmp.eq.s32.totalorder %s24, 0
      %p65 = por %p63, %p64
      %p66 = scmp.ne.s32.totalorder %s58, %s60
      %p67 = scmp.eq.s32.totalorder %s29, 1
      %p68 = por %p66, %p67
      %p69 = scmp.ne.s32.totalorder %s60, %s61
      %p70 = scmp.eq.s32.totalorder %s29, 0
      %p71 = por %p69, %p70
      %p72 = scmp.ne.s32.totalorder %s60, %s61
      %p73 = scmp.eq.s32.totalorder %s30, 1
      %p74 = por %p72, %p73
      %p76 = scmp.ne.s32.totalorder %s61, %s75
      %p77 = scmp.eq.s32.totalorder %s30, 0
      %p78 = por %p76, %p77
      %s80 = sadd.s32 %s79, 1
      %p83 = scmp.eq.s32.totalorder %s24, 1
      %p84 = scmp.ne.s32.totalorder %s79, %s81
      %p85 = scmp.eq.s32.totalorder %s24, 0
      %p86 = por %p84, %p85
      %p87 = scmp.ne.s32.totalorder %s79, %s81
      %p88 = scmp.eq.s32.totalorder %s29, 1
      %p89 = por %p87, %p88
      %p90 = scmp.ne.s32.totalorder %s81, %s82
      %p91 = scmp.eq.s32.totalorder %s29, 0
      %p92 = por %p90, %p91
      %p93 = scmp.ne.s32.totalorder %s81, %s82
      %p94 = scmp.eq.s32.totalorder %s30, 1
      %p95 = por %p93, %p94
      %p97 = scmp.ne.s32.totalorder %s82, %s96
      %p98 = scmp.eq.s32.totalorder %s30, 0
      %p99 = por %p97, %p98
      %s101 = sadd.s32 %s100, 1
      %p104 = scmp.eq.s32.totalorder %s24, 1
      %p105 = scmp.ne.s32.totalorder %s100, %s102
      %p106 = scmp.eq.s32.totalorder %s24, 0
      %p107 = por %p105, %p106
      %p108 = scmp.ne.s32.totalorder %s100, %s102
      %p109 = scmp.eq.s32.totalorder %s29, 1
      %p110 = por %p108, %p109
      %p111 = scmp.ne.s32.totalorder %s102, %s103
      %p112 = scmp.eq.s32.totalorder %s29, 0
      %p113 = por %p111, %p112
      %p114 = scmp.ne.s32.totalorder %s102, %s103
      %p115 = scmp.eq.s32.totalorder %s30, 1
      %p116 = por %p114, %p115
      %p118 = scmp.ne.s32.totalorder %s103, %s117
      %p119 = scmp.eq.s32.totalorder %s30, 0
      %p120 = por %p118, %p119
      %s122 = sadd.s32 %s121, 1
      %p125 = scmp.eq.s32.totalorder %s24, 1
      %p126 = scmp.ne.s32.totalorder %s121, %s123
      %p127 = scmp.eq.s32.totalorder %s24, 0
      %p128 = por %p126, %p127
      %p129 = scmp.ne.s32.totalorder %s121, %s123
      %p130 = scmp.eq.s32.totalorder %s29, 1
      %p131 = por %p129, %p130
      %p132 = scmp.ne.s32.totalorder %s123, %s124
      %p133 = scmp.eq.s32.totalorder %s29, 0
      %p134 = por %p132, %p133
      %p135 = scmp.ne.s32.totalorder %s123, %s124
      %p136 = scmp.eq.s32.totalorder %s30, 1
      %p137 = por %p135, %p136
      %p139 = scmp.ne.s32.totalorder %s124, %s138
      %p140 = scmp.eq.s32.totalorder %s30, 0
      %p141 = por %p139, %p140
      %s143 = sadd.s32 %s142, 1
      %p146 = scmp.eq.s32.totalorder %s24, 1
      %p147 = scmp.ne.s32.totalorder %s142, %s144
      %p148 = scmp.eq.s32.totalorder %s24, 0
      %p149 = por %p147, %p148
      %p150 = scmp.ne.s32.totalorder %s142, %s144
      %p151 = scmp.eq.s32.totalorder %s29, 1
      %p152 = por %p150, %p151
      %p153 = scmp.ne.s32.totalorder %s144, %s145
      %p154 = scmp.eq.s32.totalorder %s29, 0
      %p155 = por %p153, %p154
      %p156 = scmp.ne.s32.totalorder %s144, %s145
      %p157 = scmp.eq.s32.totalorder %s30, 1
      %p158 = por %p156, %p157
      %p160 = scmp.ne.s32.totalorder %s145, %s159
      %p161 = scmp.eq.s32.totalorder %s30, 0
      %p162 = por %p160, %p161
      %s164 = sadd.s32 %s163, 1
      %p167 = scmp.eq.s32.totalorder %s24, 1
      %p168 = scmp.ne.s32.totalorder %s163, %s165
      %p169 = scmp.eq.s32.totalorder %s24, 0
      %p170 = por %p168, %p169
      %p171 = scmp.ne.s32.totalorder %s163, %s165
      %p172 = scmp.eq.s32.totalorder %s29, 1
      %p173 = por %p171, %p172
      %p174 = scmp.ne.s32.totalorder %s165, %s166
      %p175 = scmp.eq.s32.totalorder %s29, 0
      %p176 = por %p174, %p175
      %p177 = scmp.ne.s32.totalorder %s165, %s166
      %p178 = scmp.eq.s32.totalorder %s30, 1
      %p179 = por %p177, %p178
      %p181 = scmp.ne.s32.totalorder %s166, %s180
      %p182 = scmp.eq.s32.totalorder %s30, 0
      %p183 = por %p181, %p182
      %s185 = sadd.s32 %s184, 1
      %p188 = scmp.eq.s32.totalorder %s24, 1
      %p189 = scmp.ne.s32.totalorder %s184, %s186
      %p190 = scmp.eq.s32.totalorder %s24, 0
      %p191 = por %p189, %p190
      %p192 = scmp.ne.s32.totalorder %s184, %s186
      %p193 = scmp.eq.s32.totalorder %s29, 1
      %p194 = por %p192, %p193
      %p195 = scmp.ne.s32.totalorder %s186, %s187
      %p196 = scmp.eq.s32.totalorder %s29, 0
      %p197 = por %p195, %p196
      %p198 = scmp.ne.s32.totalorder %s186, %s187
      %p199 = scmp.eq.s32.totalorder %s30, 1
      %p200 = por %p198, %p199
      %p202 = scmp.ne.s32.totalorder %s187, %s201
      %p203 = scmp.eq.s32.totalorder %s30, 0
      %p204 = por %p202, %p203
      %s206 = sadd.s32 %s205, 1
      %p209 = scmp.eq.s32.totalorder %s24, 1
      %p210 = scmp.ne.s32.totalorder %s205, %s207
      %p211 = scmp.eq.s32.totalorder %s24, 0
      %p212 = por %p210, %p211
      %p213 = scmp.ne.s32.totalorder %s205, %s207
      %p214 = scmp.eq.s32.totalorder %s29, 1
      %p215 = por %p213, %p214
      %p216 = scmp.ne.s32.totalorder %s207, %s208
      %p217 = scmp.eq.s32.totalorder %s29, 0
      %p218 = por %p216, %p217
      %p219 = scmp.ne.s32.totalorder %s207, %s208
      %p220 = scmp.eq.s32.totalorder %s30, 1
      %p221 = por %p219, %p220
      %p223 = scmp.ne.s32.totalorder %s208, %s222
      %p224 = scmp.eq.s32.totalorder %s30, 0
      %p225 = por %p223, %p224
      %s227 = sadd.s32 %s226, 1
      %p230 = scmp.eq.s32.totalorder %s24, 1
      %p231 = scmp.ne.s32.totalorder %s226, %s228
      %p232 = scmp.eq.s32.totalorder %s24, 0
      %p233 = por %p231, %p232
      %p234 = scmp.ne.s32.totalorder %s226, %s228
      %p235 = scmp.eq.s32.totalorder %s29, 1
      %p236 = por %p234, %p235
      %p237 = scmp.ne.s32.totalorder %s228, %s229
      %p238 = scmp.eq.s32.totalorder %s29, 0
      %p239 = por %p237, %p238
      %p240 = scmp.ne.s32.totalorder %s228, %s229
      %p241 = scmp.eq.s32.totalorder %s30, 1
      %p242 = por %p240, %p241
      %p244 = scmp.ne.s32.totalorder %s229, %s243
      %p245 = scmp.eq.s32.totalorder %s30, 0
      %p246 = por %p244, %p245
      %s248 = sadd.s32 %s247, 1
      %p251 = scmp.eq.s32.totalorder %s24, 1
      %p252 = scmp.ne.s32.totalorder %s247, %s249
      %p253 = scmp.eq.s32.totalorder %s24, 0
      %p254 = por %p252, %p253
      %p255 = scmp.ne.s32.totalorder %s247, %s249
      %p256 = scmp.eq.s32.totalorder %s29, 1
      %p257 = por %p255, %p256
      %p258 = scmp.ne.s32.totalorder %s249, %s250
      %p259 = scmp.eq.s32.totalorder %s29, 0
      %p260 = por %p258, %p259
      %p261 = scmp.ne.s32.totalorder %s249, %s250
      %p262 = scmp.eq.s32.totalorder %s30, 1
      %p263 = por %p261, %p262
      %p265 = scmp.ne.s32.totalorder %s250, %s264
      %p266 = scmp.eq.s32.totalorder %s30, 0
      %p267 = por %p265, %p266
      %s269 = sadd.s32 %s268, 1
      %p272 = scmp.eq.s32.totalorder %s24, 1
      %p273 = scmp.ne.s32.totalorder %s268, %s270
      %p274 = scmp.eq.s32.totalorder %s24, 0
      %p275 = por %p273, %p274
      %p276 = scmp.ne.s32.totalorder %s268, %s270
      %p277 = scmp.eq.s32.totalorder %s29, 1
      %p278 = por %p276, %p277
      %p279 = scmp.ne.s32.totalorder %s270, %s271
      %p280 = scmp.eq.s32.totalorder %s29, 0
      %p281 = por %p279, %p280
      %p282 = scmp.ne.s32.totalorder %s270, %s271
      %p283 = scmp.eq.s32.totalorder %s30, 1
      %p284 = por %p282, %p283
      %p286 = scmp.ne.s32.totalorder %s271, %s285
      %p287 = scmp.eq.s32.totalorder %s30, 0
      %p288 = por %p286, %p287
      %s290 = sadd.s32 %s289, 1
      %p293 = scmp.eq.s32.totalorder %s24, 1
      %p294 = scmp.ne.s32.totalorder %s289, %s291
      %p295 = scmp.eq.s32.totalorder %s24, 0
      %p296 = por %p294, %p295
      %p297 = scmp.ne.s32.totalorder %s289, %s291
      %p298 = scmp.eq.s32.totalorder %s29, 1
      %p299 = por %p297, %p298
      %p300 = scmp.ne.s32.totalorder %s291, %s292
      %p301 = scmp.eq.s32.totalorder %s29, 0
      %p302 = por %p300, %p301
      %p303 = scmp.ne.s32.totalorder %s291, %s292
      %p304 = scmp.eq.s32.totalorder %s30, 1
      %p305 = por %p303, %p304
      %p307 = scmp.ne.s32.totalorder %s292, %s306
      %p308 = scmp.eq.s32.totalorder %s30, 0
      %p309 = por %p307, %p308
      %s311 = sadd.s32 %s310, 1
      %p314 = scmp.eq.s32.totalorder %s24, 1
      %p315 = scmp.ne.s32.totalorder %s310, %s312
      %p316 = scmp.eq.s32.totalorder %s24, 0
      %p317 = por %p315, %p316
      %p318 = scmp.ne.s32.totalorder %s310, %s312
      %p319 = scmp.eq.s32.totalorder %s29, 1
      %p320 = por %p318, %p319
      %p321 = scmp.ne.s32.totalorder %s312, %s313
      %p322 = scmp.eq.s32.totalorder %s29, 0
      %p323 = por %p321, %p322
      %p324 = scmp.ne.s32.totalorder %s312, %s313
      %p325 = scmp.eq.s32.totalorder %s30, 1
      %p326 = por %p324, %p325
      %p328 = scmp.ne.s32.totalorder %s313, %s327
      %p329 = scmp.eq.s32.totalorder %s30, 0
      %p330 = por %p328, %p329
      %s332 = sadd.s32 %s331, 1
      %p335 = scmp.eq.s32.totalorder %s24, 1
      %p336 = scmp.ne.s32.totalorder %s331, %s333
      %p337 = scmp.eq.s32.totalorder %s24, 0
      %p338 = por %p336, %p337
      %p339 = scmp.ne.s32.totalorder %s331, %s333
      %p340 = scmp.eq.s32.totalorder %s29, 1
      %p341 = por %p339, %p340
      %p342 = scmp.ne.s32.totalorder %s333, %s334
      %p343 = scmp.eq.s32.totalorder %s29, 0
      %p344 = por %p342, %p343
      %p345 = scmp.ne.s32.totalorder %s333, %s334
      %p346 = scmp.eq.s32.totalorder %s30, 1
      %p347 = por %p345, %p346
      %p349 = scmp.ne.s32.totalorder %s334, %s348
      %p350 = scmp.eq.s32.totalorder %s30, 0
      %p351 = por %p349, %p350
      %s352 = ssub.s32 %s24, %s31
      %p353 = scmp.eq.s32.totalorder %s352, 0
      %s355 = sadd.s32 %s354, 1
      %s356 = scalar_select %p353, %s354, %s355
      %p359 = pneg %p353
      %p360 = scmp.eq.s32.totalorder %s24, 1
      %p361 = por %p359, %p360
      %p362 = scmp.ne.s32.totalorder %s354, %s357
      %p363 = scmp.eq.s32.totalorder %s24, 0
      %p364 = por %p362, %p363
      %p365 = scmp.ne.s32.totalorder %s354, %s357
      %p366 = scmp.eq.s32.totalorder %s29, 1
      %p367 = por %p365, %p366
      %p368 = scmp.ne.s32.totalorder %s357, %s358
      %p369 = scmp.eq.s32.totalorder %s29, 0
      %p370 = por %p368, %p369
      %p371 = scmp.ne.s32.totalorder %s357, %s358
      %p372 = scmp.eq.s32.totalorder %s30, 1
      %p373 = por %p371, %p372
      %p375 = scmp.ne.s32.totalorder %s358, %s374
      %p376 = scmp.eq.s32.totalorder %s30, 0
      %p377 = por %p375, %p376
      %p378 = scmp.le.s32.totalorder 1, %s24
      %p379 = scmp.lt.s32.totalorder %s24, 3
      %p380 = pnand %p378, %p379
      %p381 = pneg %p380
      // Predicated region
      $region9: #{lenet_forward.1} parent=5 // pred_check
        _
      $region10: #{lenet_forward.1} parent=5 // pred_check_branch
        %383 = sbr.rel (%p380) target = $region12
      $region11: #{lenet_forward.1} parent=5 // pred_region
        %s384 = ssub.s32 %s24, 1
        // Predicated region
        $region13: #{lenet_forward.1} parent=11 // pred_check
          %p385 = pneg %p71
        $region14: #{lenet_forward.1} parent=11 // pred_check_branch
          %387 = sbr.rel (%p385) target = $region16
        $region15: #{lenet_forward.1} parent=11 // pred_region
          _
        $region16: #{lenet_forward.1} parent=11 // pred_fallthru
          _
        // Predicated region
        $region17: #{lenet_forward.1} parent=11 // pred_check
          %p388 = pneg %p92
        $region18: #{lenet_forward.1} parent=11 // pred_check_branch
          %390 = sbr.rel (%p388) target = $region20
        $region19: #{lenet_forward.1} parent=11 // pred_region
          _
        $region20: #{lenet_forward.1} parent=11 // pred_fallthru
          _
        // Predicated region
        $region21: #{lenet_forward.1} parent=11 // pred_check
          %p391 = pneg %p113
        $region22: #{lenet_forward.1} parent=11 // pred_check_branch
          %393 = sbr.rel (%p391) target = $region24
        $region23: #{lenet_forward.1} parent=11 // pred_region
          _
        $region24: #{lenet_forward.1} parent=11 // pred_fallthru
          _
        // Predicated region
        $region25: #{lenet_forward.1} parent=11 // pred_check
          %p394 = pneg %p134
        $region26: #{lenet_forward.1} parent=11 // pred_check_branch
          %396 = sbr.rel (%p394) target = $region28
        $region27: #{lenet_forward.1} parent=11 // pred_region
          _
        $region28: #{lenet_forward.1} parent=11 // pred_fallthru
          _
        // Predicated region
        $region29: #{lenet_forward.1} parent=11 // pred_check
          %p397 = pneg %p155
        $region30: #{lenet_forward.1} parent=11 // pred_check_branch
          %399 = sbr.rel (%p397) target = $region32
        $region31: #{lenet_forward.1} parent=11 // pred_region
          _
        $region32: #{lenet_forward.1} parent=11 // pred_fallthru
          _
        // Predicated region
        $region33: #{lenet_forward.1} parent=11 // pred_check
          %p400 = pneg %p176
        $region34: #{lenet_forward.1} parent=11 // pred_check_branch
          %402 = sbr.rel (%p400) target = $region36
        $region35: #{lenet_forward.1} parent=11 // pred_region
          _
        $region36: #{lenet_forward.1} parent=11 // pred_fallthru
          _
        // Predicated region
        $region37: #{lenet_forward.1} parent=11 // pred_check
          %p403 = pneg %p197
        $region38: #{lenet_forward.1} parent=11 // pred_check_branch
          %405 = sbr.rel (%p403) target = $region40
        $region39: #{lenet_forward.1} parent=11 // pred_region
          _
        $region40: #{lenet_forward.1} parent=11 // pred_fallthru
          _
        // Predicated region
        $region41: #{lenet_forward.1} parent=11 // pred_check
          %p406 = pneg %p218
        $region42: #{lenet_forward.1} parent=11 // pred_check_branch
          %408 = sbr.rel (%p406) target = $region44
        $region43: #{lenet_forward.1} parent=11 // pred_region
          _
        $region44: #{lenet_forward.1} parent=11 // pred_fallthru
          _
        // Predicated region
        $region45: #{lenet_forward.1} parent=11 // pred_check
          %p409 = pneg %p239
        $region46: #{lenet_forward.1} parent=11 // pred_check_branch
          %411 = sbr.rel (%p409) target = $region48
        $region47: #{lenet_forward.1} parent=11 // pred_region
          _
        $region48: #{lenet_forward.1} parent=11 // pred_fallthru
          _
        // Predicated region
        $region49: #{lenet_forward.1} parent=11 // pred_check
          %p412 = pneg %p260
        $region50: #{lenet_forward.1} parent=11 // pred_check_branch
          %414 = sbr.rel (%p412) target = $region52
        $region51: #{lenet_forward.1} parent=11 // pred_region
          _
        $region52: #{lenet_forward.1} parent=11 // pred_fallthru
          _
        // Predicated region
        $region53: #{lenet_forward.1} parent=11 // pred_check
          %p415 = pneg %p281
        $region54: #{lenet_forward.1} parent=11 // pred_check_branch
          %417 = sbr.rel (%p415) target = $region56
        $region55: #{lenet_forward.1} parent=11 // pred_region
          _
        $region56: #{lenet_forward.1} parent=11 // pred_fallthru
          _
        // Predicated region
        $region57: #{lenet_forward.1} parent=11 // pred_check
          %p418 = pneg %p302
        $region58: #{lenet_forward.1} parent=11 // pred_check_branch
          %420 = sbr.rel (%p418) target = $region60
        $region59: #{lenet_forward.1} parent=11 // pred_region
          _
        $region60: #{lenet_forward.1} parent=11 // pred_fallthru
          _
        // Predicated region
        $region61: #{lenet_forward.1} parent=11 // pred_check
          %p421 = pneg %p323
        $region62: #{lenet_forward.1} parent=11 // pred_check_branch
          %423 = sbr.rel (%p421) target = $region64
        $region63: #{lenet_forward.1} parent=11 // pred_region
          _
        $region64: #{lenet_forward.1} parent=11 // pred_fallthru
          _
        // Predicated region
        $region65: #{lenet_forward.1} parent=11 // pred_check
          %p424 = pneg %p344
        $region66: #{lenet_forward.1} parent=11 // pred_check_branch
          %426 = sbr.rel (%p424) target = $region68
        $region67: #{lenet_forward.1} parent=11 // pred_region
          _
        $region68: #{lenet_forward.1} parent=11 // pred_fallthru
          _
      $region12: #{lenet_forward.1} parent=5 // pred_fallthru
        _
      %p427 = scmp.lt.s32.totalorder %s24, 2
      // Predicated region
      $region69: #{lenet_forward.1} parent=5 // pred_check
        %p428 = pneg %p427
      $region70: #{lenet_forward.1} parent=5 // pred_check_branch
        %430 = sbr.rel (%p428) target = $region72
      $region71: #{lenet_forward.1} parent=5 // pred_region
        // Predicated region
        $region73: #{lenet_forward.1} parent=71 // pred_check
          %p431 = pneg %p44
        $region74: #{lenet_forward.1} parent=71 // pred_check_branch
          %433 = sbr.rel (%p431) target = $region76
        $region75: #{lenet_forward.1} parent=71 // pred_region
          %s434 = smul.u32 28, %s24
          %p435 = scmp.lt.s32.totalorder %s434, 55
          %s436 = scalar_select %p435, %s434, 55
          %s437 = smul.addr %s436, 8
          %s438 = scalar_lea.vmem %s0, %s437
          %s439 = smul.u32 28, %s24
        $region76: #{lenet_forward.1} parent=71 // pred_fallthru
          _
      $region72: #{lenet_forward.1} parent=5 // pred_fallthru
        _
      %p440 = scmp.le.s32.totalorder 1, %s24
      %p441 = scmp.lt.s32.totalorder %s24, 3
      %p442 = pnand %p440, %p441
      %p443 = pneg %p442
      // Predicated region
      $region77: #{lenet_forward.1} parent=5 // pred_check
        _
      $region78: #{lenet_forward.1} parent=5 // pred_check_branch
        %445 = sbr.rel (%p442) target = $region80
      $region79: #{lenet_forward.1} parent=5 // pred_region
        %s446 = ssub.s32 %s24, 1
        %s447 = smul.u32 28, %s29
        %p448 = scmp.lt.s32.totalorder %s447, 55
        %s449 = scalar_select %p448, %s447, 55
        %s450 = smul.addr %s449, 8
        %s451 = scalar_lea.vmem %s0, %s450
        %p452 = pneg %p50
        %p453 = pneg %p47
        %p454 = pneg %p71
        %p455 = pneg %p68
        %p456 = pneg %p92
        %p457 = pneg %p89
        %p458 = pneg %p113
        %p459 = pneg %p110
        %p460 = pneg %p134
        %p461 = pneg %p131
        %p462 = pneg %p155
        %p463 = pneg %p152
        %p464 = pneg %p176
        %p465 = pneg %p173
        %p466 = pneg %p197
        %p467 = pneg %p194
        %p468 = pneg %p218
        %p469 = pneg %p215
        %p470 = pneg %p239
        %p471 = pneg %p236
        %p472 = pneg %p260
        %p473 = pneg %p257
        %p474 = pneg %p281
        %p475 = pneg %p278
        %p476 = pneg %p302
        %p477 = pneg %p299
        %p478 = pneg %p323
        %p479 = pneg %p320
        %p480 = pneg %p344
        %p481 = pneg %p341
        %p482 = pneg %p370
        %p483 = pneg %p367
        %s484 = sand.u32 %s357, 1
        %s485 = scalar_lea.sflag [#allocation4], %s484
        %s486 = sand.u32 %s357, 1
        %s487 = smul.addr %s486, 8
        %s488 = scalar_lea.vmem [#allocation3], %s487
        %s489 = smul.u32 28, %s29
        %p490 = scmp.lt.s32.totalorder %s489, 55
        %s491 = scalar_select %p490, %s489, 55
        %s492 = smul.addr %s491, 8
        %s493 = scalar_lea.vmem %s0, %s492
        %s494 = smul.u32 28, %s29
        %vm495 = vcmask 228352
        %496 = vst.msk [vmem:[#allocation2] sm:$0xff] %vm495, 0.0
        %497 = vst.msk [vmem:[#allocation2 + $0x8] sm:$0xff] %vm495, 0.0
        %498 = vst.msk [vmem:[#allocation2 + $0xf0] sm:$0xff] %vm495, 0.0
        %499 = vst.msk [vmem:[#allocation2 + $0xf8] sm:$0xff] %vm495, 0.0
        %v500 = vld [vmem:[%s493] sm:$0xff]
        %v501 = vld [vmem:[%s493 + $0x8] sm:$0xff]
        %v502 = vld [vmem:[%s493 + $0x10] sm:$0xff]
        %v503 = vld [vmem:[%s493 + $0x18] sm:$0xff]
        %v504 = vld [vmem:[%s493 + $0x20] sm:$0xff]
        %v505 = vld [vmem:[%s493 + $0x28] sm:$0xff]
        %v506 = vld [vmem:[%s493 + $0x30] sm:$0xff]
        %v507 = vld [vmem:[%s493 + $0x38] sm:$0xff]
        %v508 = vld [vmem:[%s493 + $0x40] sm:$0xff]
        %v509 = vld [vmem:[%s493 + $0x48] sm:$0xff]
        %v510 = vld [vmem:[%s493 + $0x50] sm:$0xff]
        %v511 = vld [vmem:[%s493 + $0x58] sm:$0xff]
        %v512 = vld [vmem:[%s493 + $0x60] sm:$0xff]
        %v513 = vld [vmem:[%s493 + $0x68] sm:$0xff]
        %v514 = vld [vmem:[%s493 + $0x70] sm:$0xff]
        %v515 = vld [vmem:[%s493 + $0x78] sm:$0xff]
        %v516 = vld [vmem:[%s493 + $0x80] sm:$0xff]
        %v517 = vld [vmem:[%s493 + $0x88] sm:$0xff]
        %v518 = vld [vmem:[%s493 + $0x90] sm:$0xff]
        %v519 = vld [vmem:[%s493 + $0x98] sm:$0xff]
        %v520 = vld [vmem:[%s493 + $0xa0] sm:$0xff]
        %v521 = vld [vmem:[%s493 + $0xa8] sm:$0xff]
        %v522 = vld [vmem:[%s493 + $0xb0] sm:$0xff]
        %v523 = vld [vmem:[%s493 + $0xb8] sm:$0xff]
        %v524 = vld [vmem:[%s493 + $0xc0] sm:$0xff]
        %v525 = vld [vmem:[%s493 + $0xc8] sm:$0xff]
        %v526 = vld [vmem:[%s493 + $0xd0] sm:$0xff]
        %v527 = vld [vmem:[%s493 + $0xd8] sm:$0xff]
        %528 = vst.msk [vmem:[#allocation2 + $0x10] sm:$0xff] %vm495, %v500
        %529 = vst.msk [vmem:[#allocation2 + $0x18] sm:$0xff] %vm495, %v501
        %530 = vst.msk [vmem:[#allocation2 + $0x20] sm:$0xff] %vm495, %v502
        %531 = vst.msk [vmem:[#allocation2 + $0x28] sm:$0xff] %vm495, %v503
        %532 = vst.msk [vmem:[#allocation2 + $0x30] sm:$0xff] %vm495, %v504
        %533 = vst.msk [vmem:[#allocation2 + $0x38] sm:$0xff] %vm495, %v505
        %534 = vst.msk [vmem:[#allocation2 + $0x40] sm:$0xff] %vm495, %v506
        %535 = vst.msk [vmem:[#allocation2 + $0x48] sm:$0xff] %vm495, %v507
        %536 = vst.msk [vmem:[#allocation2 + $0x50] sm:$0xff] %vm495, %v508
        %537 = vst.msk [vmem:[#allocation2 + $0x58] sm:$0xff] %vm495, %v509
        %538 = vst.msk [vmem:[#allocation2 + $0x60] sm:$0xff] %vm495, %v510
        %539 = vst.msk [vmem:[#allocation2 + $0x68] sm:$0xff] %vm495, %v511
        %540 = vst.msk [vmem:[#allocation2 + $0x70] sm:$0xff] %vm495, %v512
        %541 = vst.msk [vmem:[#allocation2 + $0x78] sm:$0xff] %vm495, %v513
        %542 = vst.msk [vmem:[#allocation2 + $0x80] sm:$0xff] %vm495, %v514
        %543 = vst.msk [vmem:[#allocation2 + $0x88] sm:$0xff] %vm495, %v515
        %544 = vst.msk [vmem:[#allocation2 + $0x90] sm:$0xff] %vm495, %v516
        %545 = vst.msk [vmem:[#allocation2 + $0x98] sm:$0xff] %vm495, %v517
        %546 = vst.msk [vmem:[#allocation2 + $0xa0] sm:$0xff] %vm495, %v518
        %547 = vst.msk [vmem:[#allocation2 + $0xa8] sm:$0xff] %vm495, %v519
        %548 = vst.msk [vmem:[#allocation2 + $0xb0] sm:$0xff] %vm495, %v520
        %549 = vst.msk [vmem:[#allocation2 + $0xb8] sm:$0xff] %vm495, %v521
        %550 = vst.msk [vmem:[#allocation2 + $0xc0] sm:$0xff] %vm495, %v522
        %551 = vst.msk [vmem:[#allocation2 + $0xc8] sm:$0xff] %vm495, %v523
        %552 = vst.msk [vmem:[#allocation2 + $0xd0] sm:$0xff] %vm495, %v524
        %553 = vst.msk [vmem:[#allocation2 + $0xd8] sm:$0xff] %vm495, %v525
        %554 = vst.msk [vmem:[#allocation2 + $0xe0] sm:$0xff] %vm495, %v526
        %555 = vst.msk [vmem:[#allocation2 + $0xe8] sm:$0xff] %vm495, %v527
        %v556 = vld [vmem:[#allocation2] sm:$0xff]
        %v557 = vld [vmem:[#allocation2 + $0x8] sm:$0xff]
        %v558 = vld [vmem:[#allocation2 + $0x10] sm:$0xff]
        %v559 = vld [vmem:[#allocation2 + $0x18] sm:$0xff]
        %v560 = vld [vmem:[#allocation2 + $0x20] sm:$0xff]
        %v561 = vld [vmem:[#allocation2 + $0x28] sm:$0xff]
        %v562 = vld [vmem:[#allocation2 + $0x30] sm:$0xff]
        %v563 = vld [vmem:[#allocation2 + $0x38] sm:$0xff]
        %v564 = vld [vmem:[#allocation2 + $0x40] sm:$0xff]
        %v565 = vld [vmem:[#allocation2 + $0x48] sm:$0xff]
        %v566 = vld [vmem:[#allocation2 + $0x50] sm:$0xff]
        %v567 = vld [vmem:[#allocation2 + $0x58] sm:$0xff]
        %v568 = vld [vmem:[#allocation2 + $0x60] sm:$0xff]
        %v569 = vld [vmem:[#allocation2 + $0x68] sm:$0xff]
        %v570 = vld [vmem:[#allocation2 + $0x70] sm:$0xff]
        %v571 = vld [vmem:[#allocation2 + $0x78] sm:$0xff]
        %v572 = vld [vmem:[#allocation2 + $0x80] sm:$0xff]
        %v573 = vld [vmem:[#allocation2 + $0x88] sm:$0xff]
        %v574 = vld [vmem:[#allocation2 + $0x90] sm:$0xff]
        %v575 = vld [vmem:[#allocation2 + $0x98] sm:$0xff]
        %v576 = vld [vmem:[#allocation2 + $0xa0] sm:$0xff]
        %v577 = vld [vmem:[#allocation2 + $0xa8] sm:$0xff]
        %v578 = vld [vmem:[#allocation2 + $0xb0] sm:$0xff]
        %v579 = vld [vmem:[#allocation2 + $0xb8] sm:$0xff]
        %v580 = vld [vmem:[#allocation2 + $0xc0] sm:$0xff]
        %v581 = vld [vmem:[#allocation2 + $0xc8] sm:$0xff]
        %v582 = vld [vmem:[#allocation2 + $0xd0] sm:$0xff]
        %v583 = vld [vmem:[#allocation2 + $0xd8] sm:$0xff]
        %v584 = vld [vmem:[#allocation2 + $0xe0] sm:$0xff]
        %v585 = vld [vmem:[#allocation2 + $0xe8] sm:$0xff]
        %v586 = vld [vmem:[#allocation2 + $0xf0] sm:$0xff]
        %v587 = vld [vmem:[#allocation2 + $0xf8] sm:$0xff]
        %616 = vrot.lane.b32.xlu0 %v557, 28
        %v617 = vpop.permute.xlu0 %616
        %618 = vrot.lane.b32.xlu0 %v558, 28
        %v619 = vpop.permute.xlu0 %618
        %620 = vrot.lane.b32.xlu0 %v559, 28
        %v621 = vpop.permute.xlu0 %620
        %622 = vrot.lane.b32.xlu0 %v560, 28
        %v623 = vpop.permute.xlu0 %622
        %624 = vrot.lane.b32.xlu0 %v561, 28
        %v625 = vpop.permute.xlu0 %624
        %626 = vrot.lane.b32.xlu0 %v562, 28
        %v627 = vpop.permute.xlu0 %626
        %628 = vrot.lane.b32.xlu0 %v563, 28
        %v629 = vpop.permute.xlu0 %628
        %630 = vrot.lane.b32.xlu0 %v564, 28
        %v631 = vpop.permute.xlu0 %630
        %632 = vrot.lane.b32.xlu0 %v565, 28
        %v633 = vpop.permute.xlu0 %632
        %634 = vrot.lane.b32.xlu0 %v566, 28
        %v635 = vpop.permute.xlu0 %634
        %636 = vrot.lane.b32.xlu0 %v567, 28
        %v637 = vpop.permute.xlu0 %636
        %638 = vrot.lane.b32.xlu0 %v568, 28
        %v639 = vpop.permute.xlu0 %638
        %640 = vrot.lane.b32.xlu0 %v569, 28
        %v641 = vpop.permute.xlu0 %640
        %642 = vrot.lane.b32.xlu0 %v570, 28
        %v643 = vpop.permute.xlu0 %642
        %644 = vrot.lane.b32.xlu0 %v571, 28
        %v645 = vpop.permute.xlu0 %644
        %646 = vrot.lane.b32.xlu0 %v572, 28
        %v647 = vpop.permute.xlu0 %646
        %648 = vrot.lane.b32.xlu0 %v573, 28
        %v649 = vpop.permute.xlu0 %648
        %650 = vrot.lane.b32.xlu0 %v574, 28
        %v651 = vpop.permute.xlu0 %650
        %652 = vrot.lane.b32.xlu0 %v575, 28
        %v653 = vpop.permute.xlu0 %652
        %654 = vrot.lane.b32.xlu0 %v576, 28
        %v655 = vpop.permute.xlu0 %654
        %656 = vrot.lane.b32.xlu0 %v577, 28
        %v657 = vpop.permute.xlu0 %656
        %658 = vrot.lane.b32.xlu0 %v578, 28
        %v659 = vpop.permute.xlu0 %658
        %660 = vrot.lane.b32.xlu0 %v579, 28
        %v661 = vpop.permute.xlu0 %660
        %662 = vrot.lane.b32.xlu0 %v580, 28
        %v663 = vpop.permute.xlu0 %662
        %664 = vrot.lane.b32.xlu0 %v581, 28
        %v665 = vpop.permute.xlu0 %664
        %666 = vrot.lane.b32.xlu0 %v582, 28
        %v667 = vpop.permute.xlu0 %666
        %668 = vrot.lane.b32.xlu0 %v583, 28
        %v669 = vpop.permute.xlu0 %668
        %670 = vrot.lane.b32.xlu0 %v584, 28
        %v671 = vpop.permute.xlu0 %670
        %701 = vrot.lane.b32.xlu0 %v558, 56
        %v702 = vpop.permute.xlu0 %701
        %703 = vrot.lane.b32.xlu0 %v559, 56
        %v704 = vpop.permute.xlu0 %703
        %705 = vrot.lane.b32.xlu0 %v560, 56
        %v706 = vpop.permute.xlu0 %705
        %707 = vrot.lane.b32.xlu0 %v561, 56
        %v708 = vpop.permute.xlu0 %707
        %709 = vrot.lane.b32.xlu0 %v562, 56
        %v710 = vpop.permute.xlu0 %709
        %711 = vrot.lane.b32.xlu0 %v563, 56
        %v712 = vpop.permute.xlu0 %711
        %713 = vrot.lane.b32.xlu0 %v564, 56
        %v714 = vpop.permute.xlu0 %713
        %715 = vrot.lane.b32.xlu0 %v565, 56
        %v716 = vpop.permute.xlu0 %715
        %717 = vrot.lane.b32.xlu0 %v566, 56
        %v718 = vpop.permute.xlu0 %717
        %719 = vrot.lane.b32.xlu0 %v567, 56
        %v720 = vpop.permute.xlu0 %719
        %721 = vrot.lane.b32.xlu0 %v568, 56
        %v722 = vpop.permute.xlu0 %721
        %723 = vrot.lane.b32.xlu0 %v569, 56
        %v724 = vpop.permute.xlu0 %723
        %725 = vrot.lane.b32.xlu0 %v570, 56
        %v726 = vpop.permute.xlu0 %725
        %727 = vrot.lane.b32.xlu0 %v571, 56
        %v728 = vpop.permute.xlu0 %727
        %729 = vrot.lane.b32.xlu0 %v572, 56
        %v730 = vpop.permute.xlu0 %729
        %731 = vrot.lane.b32.xlu0 %v573, 56
        %v732 = vpop.permute.xlu0 %731
        %733 = vrot.lane.b32.xlu0 %v574, 56
        %v734 = vpop.permute.xlu0 %733
        %735 = vrot.lane.b32.xlu0 %v575, 56
        %v736 = vpop.permute.xlu0 %735
        %737 = vrot.lane.b32.xlu0 %v576, 56
        %v738 = vpop.permute.xlu0 %737
        %739 = vrot.lane.b32.xlu0 %v577, 56
        %v740 = vpop.permute.xlu0 %739
        %741 = vrot.lane.b32.xlu0 %v578, 56
        %v742 = vpop.permute.xlu0 %741
        %743 = vrot.lane.b32.xlu0 %v579, 56
        %v744 = vpop.permute.xlu0 %743
        %745 = vrot.lane.b32.xlu0 %v580, 56
        %v746 = vpop.permute.xlu0 %745
        %747 = vrot.lane.b32.xlu0 %v581, 56
        %v748 = vpop.permute.xlu0 %747
        %749 = vrot.lane.b32.xlu0 %v582, 56
        %v750 = vpop.permute.xlu0 %749
        %751 = vrot.lane.b32.xlu0 %v583, 56
        %v752 = vpop.permute.xlu0 %751
        %753 = vrot.lane.b32.xlu0 %v584, 56
        %v754 = vpop.permute.xlu0 %753
        %755 = vrot.lane.b32.xlu0 %v585, 56
        %v756 = vpop.permute.xlu0 %755
        %786 = vrot.lane.b32.xlu0 %v559, 84
        %v787 = vpop.permute.xlu0 %786
        %788 = vrot.lane.b32.xlu0 %v560, 84
        %v789 = vpop.permute.xlu0 %788
        %790 = vrot.lane.b32.xlu0 %v561, 84
        %v791 = vpop.permute.xlu0 %790
        %792 = vrot.lane.b32.xlu0 %v562, 84
        %v793 = vpop.permute.xlu0 %792
        %794 = vrot.lane.b32.xlu0 %v563, 84
        %v795 = vpop.permute.xlu0 %794
        %796 = vrot.lane.b32.xlu0 %v564, 84
        %v797 = vpop.permute.xlu0 %796
        %798 = vrot.lane.b32.xlu0 %v565, 84
        %v799 = vpop.permute.xlu0 %798
        %800 = vrot.lane.b32.xlu0 %v566, 84
        %v801 = vpop.permute.xlu0 %800
        %802 = vrot.lane.b32.xlu0 %v567, 84
        %v803 = vpop.permute.xlu0 %802
        %804 = vrot.lane.b32.xlu0 %v568, 84
        %v805 = vpop.permute.xlu0 %804
        %806 = vrot.lane.b32.xlu0 %v569, 84
        %v807 = vpop.permute.xlu0 %806
        %808 = vrot.lane.b32.xlu0 %v570, 84
        %v809 = vpop.permute.xlu0 %808
        %810 = vrot.lane.b32.xlu0 %v571, 84
        %v811 = vpop.permute.xlu0 %810
        %812 = vrot.lane.b32.xlu0 %v572, 84
        %v813 = vpop.permute.xlu0 %812
        %814 = vrot.lane.b32.xlu0 %v573, 84
        %v815 = vpop.permute.xlu0 %814
        %816 = vrot.lane.b32.xlu0 %v574, 84
        %v817 = vpop.permute.xlu0 %816
        %818 = vrot.lane.b32.xlu0 %v575, 84
        %v819 = vpop.permute.xlu0 %818
        %820 = vrot.lane.b32.xlu0 %v576, 84
        %v821 = vpop.permute.xlu0 %820
        %822 = vrot.lane.b32.xlu0 %v577, 84
        %v823 = vpop.permute.xlu0 %822
        %824 = vrot.lane.b32.xlu0 %v578, 84
        %v825 = vpop.permute.xlu0 %824
        %826 = vrot.lane.b32.xlu0 %v579, 84
        %v827 = vpop.permute.xlu0 %826
        %828 = vrot.lane.b32.xlu0 %v580, 84
        %v829 = vpop.permute.xlu0 %828
        %830 = vrot.lane.b32.xlu0 %v581, 84
        %v831 = vpop.permute.xlu0 %830
        %832 = vrot.lane.b32.xlu0 %v582, 84
        %v833 = vpop.permute.xlu0 %832
        %834 = vrot.lane.b32.xlu0 %v583, 84
        %v835 = vpop.permute.xlu0 %834
        %836 = vrot.lane.b32.xlu0 %v584, 84
        %v837 = vpop.permute.xlu0 %836
        %838 = vrot.lane.b32.xlu0 %v585, 84
        %v839 = vpop.permute.xlu0 %838
        %840 = vrot.lane.b32.xlu0 %v586, 84
        %v841 = vpop.permute.xlu0 %840
        %871 = vrot.lane.b32.xlu0 %v560, 112
        %v872 = vpop.permute.xlu0 %871
        %873 = vrot.lane.b32.xlu0 %v561, 112
        %v874 = vpop.permute.xlu0 %873
        %875 = vrot.lane.b32.xlu0 %v562, 112
        %v876 = vpop.permute.xlu0 %875
        %877 = vrot.lane.b32.xlu0 %v563, 112
        %v878 = vpop.permute.xlu0 %877
        %879 = vrot.lane.b32.xlu0 %v564, 112
        %v880 = vpop.permute.xlu0 %879
        %881 = vrot.lane.b32.xlu0 %v565, 112
        %v882 = vpop.permute.xlu0 %881
        %883 = vrot.lane.b32.xlu0 %v566, 112
        %v884 = vpop.permute.xlu0 %883
        %885 = vrot.lane.b32.xlu0 %v567, 112
        %v886 = vpop.permute.xlu0 %885
        %887 = vrot.lane.b32.xlu0 %v568, 112
        %v888 = vpop.permute.xlu0 %887
        %889 = vrot.lane.b32.xlu0 %v569, 112
        %v890 = vpop.permute.xlu0 %889
        %891 = vrot.lane.b32.xlu0 %v570, 112
        %v892 = vpop.permute.xlu0 %891
        %893 = vrot.lane.b32.xlu0 %v571, 112
        %v894 = vpop.permute.xlu0 %893
        %895 = vrot.lane.b32.xlu0 %v572, 112
        %v896 = vpop.permute.xlu0 %895
        %897 = vrot.lane.b32.xlu0 %v573, 112
        %v898 = vpop.permute.xlu0 %897
        %899 = vrot.lane.b32.xlu0 %v574, 112
        %v900 = vpop.permute.xlu0 %899
        %901 = vrot.lane.b32.xlu0 %v575, 112
        %v902 = vpop.permute.xlu0 %901
        %903 = vrot.lane.b32.xlu0 %v576, 112
        %v904 = vpop.permute.xlu0 %903
        %905 = vrot.lane.b32.xlu0 %v577, 112
        %v906 = vpop.permute.xlu0 %905
        %907 = vrot.lane.b32.xlu0 %v578, 112
        %v908 = vpop.permute.xlu0 %907
        %909 = vrot.lane.b32.xlu0 %v579, 112
        %v910 = vpop.permute.xlu0 %909
        %911 = vrot.lane.b32.xlu0 %v580, 112
        %v912 = vpop.permute.xlu0 %911
        %913 = vrot.lane.b32.xlu0 %v581, 112
        %v914 = vpop.permute.xlu0 %913
        %915 = vrot.lane.b32.xlu0 %v582, 112
        %v916 = vpop.permute.xlu0 %915
        %917 = vrot.lane.b32.xlu0 %v583, 112
        %v918 = vpop.permute.xlu0 %917
        %919 = vrot.lane.b32.xlu0 %v584, 112
        %v920 = vpop.permute.xlu0 %919
        %921 = vrot.lane.b32.xlu0 %v585, 112
        %v922 = vpop.permute.xlu0 %921
        %923 = vrot.lane.b32.xlu0 %v586, 112
        %v924 = vpop.permute.xlu0 %923
        %925 = vrot.lane.b32.xlu0 %v587, 112
        %v926 = vpop.permute.xlu0 %925
        %v955 = vsel %vm495, %v556, %v617
        %v956 = vsel %vm495, %v557, %v619
        %v957 = vsel %vm495, %v558, %v621
        %v958 = vsel %vm495, %v559, %v623
        %v959 = vsel %vm495, %v560, %v625
        %v960 = vsel %vm495, %v561, %v627
        %v961 = vsel %vm495, %v562, %v629
        %v962 = vsel %vm495, %v563, %v631
        %v963 = vsel %vm495, %v564, %v633
        %v964 = vsel %vm495, %v565, %v635
        %v965 = vsel %vm495, %v566, %v637
        %v966 = vsel %vm495, %v567, %v639
        %v967 = vsel %vm495, %v568, %v641
        %v968 = vsel %vm495, %v569, %v643
        %v969 = vsel %vm495, %v570, %v645
        %v970 = vsel %vm495, %v571, %v647
        %v971 = vsel %vm495, %v572, %v649
        %v972 = vsel %vm495, %v573, %v651
        %v973 = vsel %vm495, %v574, %v653
        %v974 = vsel %vm495, %v575, %v655
        %v975 = vsel %vm495, %v576, %v657
        %v976 = vsel %vm495, %v577, %v659
        %v977 = vsel %vm495, %v578, %v661
        %v978 = vsel %vm495, %v579, %v663
        %v979 = vsel %vm495, %v580, %v665
        %v980 = vsel %vm495, %v581, %v667
        %v981 = vsel %vm495, %v582, %v669
        %v982 = vsel %vm495, %v583, %v671
        %vm983 = vcmask 457728
        %v984 = vsel %vm983, %v955, %v702
        %v985 = vsel %vm983, %v956, %v704
        %v986 = vsel %vm983, %v957, %v706
        %v987 = vsel %vm983, %v958, %v708
        %v988 = vsel %vm983, %v959, %v710
        %v989 = vsel %vm983, %v960, %v712
        %v990 = vsel %vm983, %v961, %v714
        %v991 = vsel %vm983, %v962, %v716
        %v992 = vsel %vm983, %v963, %v718
        %v993 = vsel %vm983, %v964, %v720
        %v994 = vsel %vm983, %v965, %v722
        %v995 = vsel %vm983, %v966, %v724
        %v996 = vsel %vm983, %v967, %v726
        %v997 = vsel %vm983, %v968, %v728
        %v998 = vsel %vm983, %v969, %v730
        %v999 = vsel %vm983, %v970, %v732
        %v1000 = vsel %vm983, %v971, %v734
        %v1001 = vsel %vm983, %v972, %v736
        %v1002 = vsel %vm983, %v973, %v738
        %v1003 = vsel %vm983, %v974, %v740
        %v1004 = vsel %vm983, %v975, %v742
        %v1005 = vsel %vm983, %v976, %v744
        %v1006 = vsel %vm983, %v977, %v746
        %v1007 = vsel %vm983, %v978, %v748
        %v1008 = vsel %vm983, %v979, %v750
        %v1009 = vsel %vm983, %v980, %v752
        %v1010 = vsel %vm983, %v981, %v754
        %v1011 = vsel %vm983, %v982, %v756
        %vm1012 = vcmask 687104
        %v1013 = vsel %vm1012, %v984, %v787
        %v1014 = vsel %vm1012, %v985, %v789
        %v1015 = vsel %vm1012, %v986, %v791
        %v1016 = vsel %vm1012, %v987, %v793
        %v1017 = vsel %vm1012, %v988, %v795
        %v1018 = vsel %vm1012, %v989, %v797
        %v1019 = vsel %vm1012, %v990, %v799
        %v1020 = vsel %vm1012, %v991, %v801
        %v1021 = vsel %vm1012, %v992, %v803
        %v1022 = vsel %vm1012, %v993, %v805
        %v1023 = vsel %vm1012, %v994, %v807
        %v1024 = vsel %vm1012, %v995, %v809
        %v1025 = vsel %vm1012, %v996, %v811
        %v1026 = vsel %vm1012, %v997, %v813
        %v1027 = vsel %vm1012, %v998, %v815
        %v1028 = vsel %vm1012, %v999, %v817
        %v1029 = vsel %vm1012, %v1000, %v819
        %v1030 = vsel %vm1012, %v1001, %v821
        %v1031 = vsel %vm1012, %v1002, %v823
        %v1032 = vsel %vm1012, %v1003, %v825
        %v1033 = vsel %vm1012, %v1004, %v827
        %v1034 = vsel %vm1012, %v1005, %v829
        %v1035 = vsel %vm1012, %v1006, %v831
        %v1036 = vsel %vm1012, %v1007, %v833
        %v1037 = vsel %vm1012, %v1008, %v835
        %v1038 = vsel %vm1012, %v1009, %v837
        %v1039 = vsel %vm1012, %v1010, %v839
        %v1040 = vsel %vm1012, %v1011, %v841
        %vm1041 = vcmask 916480
        %v1042 = vsel %vm1041, %v1013, %v872
        %v1043 = vsel %vm1041, %v1014, %v874
        %v1044 = vsel %vm1041, %v1015, %v876
        %v1045 = vsel %vm1041, %v1016, %v878
        %v1046 = vsel %vm1041, %v1017, %v880
        %v1047 = vsel %vm1041, %v1018, %v882
        %v1048 = vsel %vm1041, %v1019, %v884
        %v1049 = vsel %vm1041, %v1020, %v886
        %v1050 = vsel %vm1041, %v1021, %v888
        %v1051 = vsel %vm1041, %v1022, %v890
        %v1052 = vsel %vm1041, %v1023, %v892
        %v1053 = vsel %vm1041, %v1024, %v894
        %v1054 = vsel %vm1041, %v1025, %v896
        %v1055 = vsel %vm1041, %v1026, %v898
        %v1056 = vsel %vm1041, %v1027, %v900
        %v1057 = vsel %vm1041, %v1028, %v902
        %v1058 = vsel %vm1041, %v1029, %v904
        %v1059 = vsel %vm1041, %v1030, %v906
        %v1060 = vsel %vm1041, %v1031, %v908
        %v1061 = vsel %vm1041, %v1032, %v910
        %v1062 = vsel %vm1041, %v1033, %v912
        %v1063 = vsel %vm1041, %v1034, %v914
        %v1064 = vsel %vm1041, %v1035, %v916
        %v1065 = vsel %vm1041, %v1036, %v918
        %v1066 = vsel %vm1041, %v1037, %v920
        %v1067 = vsel %vm1041, %v1038, %v922
        %v1068 = vsel %vm1041, %v1039, %v924
        %v1069 = vsel %vm1041, %v1040, %v926
        %v1070 = vld [vmem:[%s1] sm:$0xff]
        %v1071 = vld [vmem:[%s1 + $0x8] sm:$0xff]
        %v1072 = vld [vmem:[%s1 + $0x10] sm:$0xff]
        %v1073 = vld [vmem:[%s1 + $0x18] sm:$0xff]
        %v1074 = vld [vmem:[%s1 + $0x20] sm:$0xff]
        %v1075 = vld [vmem:[%s1 + $0x28] sm:$0xff]
        %v1076 = vld [vmem:[%s1 + $0x30] sm:$0xff]
        %v1077 = vld [vmem:[%s1 + $0x38] sm:$0xff]
        %v1078 = vld [vmem:[%s1 + $0x40] sm:$0xff]
        %v1079 = vld [vmem:[%s1 + $0x48] sm:$0xff]
        %v1080 = vld [vmem:[%s1 + $0x50] sm:$0xff]
        %v1081 = vld [vmem:[%s1 + $0x58] sm:$0xff]
        %v1082 = vld [vmem:[%s1 + $0x60] sm:$0xff]
        %v1083 = vld [vmem:[%s1 + $0x68] sm:$0xff]
        %v1084 = vld [vmem:[%s1 + $0x70] sm:$0xff]
        %v1085 = vld [vmem:[%s1 + $0x78] sm:$0xff]
        %v1086 = vld [vmem:[%s1 + $0x80] sm:$0xff]
        %v1087 = vld [vmem:[%s1 + $0x88] sm:$0xff]
        %v1088 = vld [vmem:[%s1 + $0x90] sm:$0xff]
        %v1089 = vld [vmem:[%s1 + $0x98] sm:$0xff]
        %v1090 = vld [vmem:[%s1 + $0xa0] sm:$0xff]
        %v1091 = vld [vmem:[%s1 + $0xa8] sm:$0xff]
        %v1092 = vld [vmem:[%s1 + $0xb0] sm:$0xff]
        %v1093 = vld [vmem:[%s1 + $0xb8] sm:$0xff]
        %v1094 = vld [vmem:[%s1 + $0xc0] sm:$0xff]
        %v1095 = vld [vmem:[%s1 + $0xc8] sm:$0xff]
        %v1096 = vld [vmem:[%s1 + $0xd0] sm:$0xff]
        %v1097 = vld [vmem:[%s1 + $0xd8] sm:$0xff]
        %v1098 = vld [vmem:[%s1 + $0xe0] sm:$0xff]
        %v1099 = vld [vmem:[%s1 + $0xe8] sm:$0xff]
        %v1100 = vld [vmem:[%s1 + $0xf0] sm:$0xff]
        %v1101 = vld [vmem:[%s1 + $0xf8] sm:$0xff]
        %v1102 = vld [vmem:[%s1 + $0x100] sm:$0xff]
        %v1103 = vld [vmem:[%s1 + $0x108] sm:$0xff]
        %v1104 = vld [vmem:[%s1 + $0x110] sm:$0xf]
        %v1105 = vld [vmem:[%s1 + $0x118] sm:$0xf]
        %v1106 = vld [vmem:[%s2] sm:$0x3]
        %v1108 = vlaneseq
        %v1109 = vshrl.u32 %v1108, 7
        %v1110 = vsub.s32 0, %v1109
        %v1111 = vrot.slane %v1106, %v1110
        %v1112 = vlaneseq
        %v1113 = vshrl.u32 %v1112, 7
        %v1114 = vsub.s32 1, %v1113
        %v1115 = vrot.slane %v1106, %v1114
        %vm1118 = vcmask 97280
        %v1119 = vsel %vm1118, %v872, 0
        %v1121 = vsel %vm1118, %v874, 0
        %v1123 = vsel %vm1118, %v876, 0
        %v1125 = vsel %vm1118, %v878, 0
        %v1127 = vsel %vm1118, %v880, 0
        %v1129 = vsel %vm1118, %v882, 0
        %v1131 = vsel %vm1118, %v884, 0
        %v1133 = vsel %vm1118, %v886, 0
        %v1135 = vsel %vm1118, %v888, 0
        %v1137 = vsel %vm1118, %v890, 0
        %v1139 = vsel %vm1118, %v892, 0
        %v1141 = vsel %vm1118, %v894, 0
        %v1143 = vsel %vm1118, %v896, 0
        %v1145 = vsel %vm1118, %v898, 0
        %v1147 = vsel %vm1118, %v900, 0
        %v1149 = vsel %vm1118, %v902, 0
        %v1151 = vsel %vm1118, %v904, 0
        %v1153 = vsel %vm1118, %v906, 0
        %v1155 = vsel %vm1118, %v908, 0
        %v1157 = vsel %vm1118, %v910, 0
        %v1159 = vsel %vm1118, %v912, 0
        %v1161 = vsel %vm1118, %v914, 0
        %v1163 = vsel %vm1118, %v916, 0
        %v1165 = vsel %vm1118, %v918, 0
        %v1167 = vsel %vm1118, %v920, 0
        %v1169 = vsel %vm1118, %v922, 0
        %v1171 = vsel %vm1118, %v924, 0
        %v1173 = vsel %vm1118, %v926, 0
        %vm1175 = vcmask 1043456
        %v1177 = vsel %vm1175, %v1104, 0
        %v1180 = vsel %vm1175, %v1105, 0
        %1182 = vmatprep.subr.mxu0 %v1071
        %1183 = vmatpush1.msra.mxu0 %v1070
        %1184 = vmatprep.subr.mxu0 %v1073
        %1185 = vmatpush1.msra.mxu0 %v1072
        %1186 = vmatprep.subr.mxu0 %v1075
        %1187 = vmatpush1.msra.mxu0 %v1074
        %1188 = vmatprep.subr.mxu0 %v1077
        %1189 = vmatpush1.msra.mxu0 %v1076
        %1190 = vmatprep.subr.mxu0 %v1079
        %1191 = vmatpush1.msra.mxu0 %v1078
        %1192 = vmatprep.subr.mxu0 %v1081
        %1193 = vmatpush1.msra.mxu0 %v1080
        %1194 = vmatprep.subr.mxu0 %v1083
        %1195 = vmatpush1.msra.mxu0 %v1082
        %1196 = vmatprep.subr.mxu0 %v1085
        %1197 = vmatpush1.msra.mxu0 %v1084
        %1198 = vmatprep.subr.mxu0 %v1087
        %1199 = vmatpush1.msra.mxu0 %v1086
        %1200 = vmatprep.subr.mxu0 %v1089
        %1201 = vmatpush1.msra.mxu0 %v1088
        %1202 = vmatprep.subr.mxu0 %v1091
        %1203 = vmatpush1.msra.mxu0 %v1090
        %1204 = vmatprep.subr.mxu0 %v1093
        %1205 = vmatpush1.msra.mxu0 %v1092
        %1206 = vmatprep.subr.mxu0 %v1095
        %1207 = vmatpush1.msra.mxu0 %v1094
        %1208 = vmatprep.subr.mxu0 %v1097
        %1209 = vmatpush1.msra.mxu0 %v1096
        %1210 = vmatprep.subr.mxu0 %v1099
        %1211 = vmatpush1.msra.mxu0 %v1098
        %1212 = vmatprep.subr.mxu0 %v1101
        %1213 = vmatpush1.msra.mxu0 %v1100
        %1214 = vmatprep.subr.mxu0 %v1103
        %1215 = vmatpush1.msra.mxu0 %v1102
        %1216 = vmatprep.subr.mxu0 %v1180
        %1217 = vmatpush1.msra.mxu0 %v1177
        %1218 = vmatprep.subr.mxu0 0.0
        %1219 = vmatpush1.msra.mxu0 0.0
        %1220 = vmatprep.subr.mxu0 0.0
        %1221 = vmatpush1.msra.mxu0 0.0
        %1222 = vmatprep.subr.mxu0 0.0
        %1223 = vmatpush1.msra.mxu0 0.0
        %1224 = vmatprep.subr.mxu0 0.0
        %1225 = vmatpush1.msra.mxu0 0.0
        %1226 = vmatprep.subr.mxu0 0.0
        %1227 = vmatpush1.msra.mxu0 0.0
        %1228 = vmatprep.subr.mxu0 0.0
        %1229 = vmatpush1.msra.mxu0 0.0
        %1230 = vmatprep.subr.mxu0 0.0
        %1231 = vmatpush1.msra.mxu0 0.0
        %1232 = vmatprep.subr.mxu0 0.0
        %1233 = vmatpush1.msra.mxu0 0.0
        %1234 = vmatprep.subr.mxu0 0.0
        %1235 = vmatpush1.msra.mxu0 0.0
        %1236 = vmatprep.subr.mxu0 0.0
        %1237 = vmatpush1.msra.mxu0 0.0
        %1238 = vmatprep.subr.mxu0 0.0
        %1239 = vmatpush1.msra.mxu0 0.0
        %1240 = vmatprep.subr.mxu0 0.0
        %1241 = vmatpush1.msra.mxu0 0.0
        %1242 = vmatprep.subr.mxu0 0.0
        %1243 = vmatpush1.msra.mxu0 0.0
        %1244 = vmatprep.subr.mxu0 0.0
        %1245 = vmatpush1.msra.mxu0 0.0
        %1246 = vmatprep.mubr.f32.mxu0 %v1119
        %1247 = vmatmul.mubr.f32.gmra.mrb[0].mxu0 %v1042
        %v1248 = vpop.f32.mrb[0].mxu0
        %v1249 = vadd.f32 %v1111, %v1248
        %v1250 = vpop.f32.mrb[0].mxu0
        %v1251 = vadd.f32 %v1115, %v1250
        %1252 = vmatprep.mubr.f32.mxu0 %v1121
        %1253 = vmatmul.mubr.f32.gmra.mrb[0].mxu0 %v1043
        %v1254 = vpop.f32.mrb[0].mxu0
        %v1255 = vadd.f32 %v1111, %v1254
        %v1256 = vpop.f32.mrb[0].mxu0
        %v1257 = vadd.f32 %v1115, %v1256
        %1258 = vmatprep.mubr.f32.mxu0 %v1123
        %1259 = vmatmul.mubr.f32.gmra.mrb[0].mxu0 %v1044
        %v1260 = vpop.f32.mrb[0].mxu0
        %v1261 = vadd.f32 %v1111, %v1260
        %v1262 = vpop.f32.mrb[0].mxu0
        %v1263 = vadd.f32 %v1115, %v1262
        %1264 = vmatprep.mubr.f32.mxu0 %v1125
        %1265 = vmatmul.mubr.f32.gmra.mrb[0].mxu0 %v1045
        %v1266 = vpop.f32.mrb[0].mxu0
        %v1267 = vadd.f32 %v1111, %v1266
        %v1268 = vpop.f32.mrb[0].mxu0
        %v1269 = vadd.f32 %v1115, %v1268
        %1270 = vmatprep.mubr.f32.mxu0 %v1127
        %1271 = vmatmul.mubr.f32.gmra.mrb[0].mxu0 %v1046
        %v1272 = vpop.f32.mrb[0].mxu0
        %v1273 = vadd.f32 %v1111, %v1272
        %v1274 = vpop.f32.mrb[0].mxu0
        %v1275 = vadd.f32 %v1115, %v1274
        %1276 = vmatprep.mubr.f32.mxu0 %v1129
        %1277 = vmatmul.mubr.f32.gmra.mrb[0].mxu0 %v1047
        %v1278 = vpop.f32.mrb[0].mxu0
        %v1279 = vadd.f32 %v1111, %v1278
        %v1280 = vpop.f32.mrb[0].mxu0
        %v1281 = vadd.f32 %v1115, %v1280
        %1282 = vmatprep.mubr.f32.mxu0 %v1131
        %1283 = vmatmul.mubr.f32.gmra.mrb[0].mxu0 %v1048
        %v1284 = vpop.f32.mrb[0].mxu0
        %v1285 = vadd.f32 %v1111, %v1284
        %v1286 = vpop.f32.mrb[0].mxu0
        %v1287 = vadd.f32 %v1115, %v1286
        %1288 = vmatprep.mubr.f32.mxu0 %v1133
        %1289 = vmatmul.mubr.f32.gmra.mrb[0].mxu0 %v1049
        %v1290 = vpop.f32.mrb[0].mxu0
        %v1291 = vadd.f32 %v1111, %v1290
        %v1292 = vpop.f32.mrb[0].mxu0
        %v1293 = vadd.f32 %v1115, %v1292
        %1294 = vmatprep.mubr.f32.mxu0 %v1135
        %1295 = vmatmul.mubr.f32.gmra.mrb[0].mxu0 %v1050
        %v1296 = vpop.f32.mrb[0].mxu0
        %v1297 = vadd.f32 %v1111, %v1296
        %v1298 = vpop.f32.mrb[0].mxu0
        %v1299 = vadd.f32 %v1115, %v1298
        %1300 = vmatprep.mubr.f32.mxu0 %v1137
        %1301 = vmatmul.mubr.f32.gmra.mrb[0].mxu0 %v1051
        %v1302 = vpop.f32.mrb[0].mxu0
        %v1303 = vadd.f32 %v1111, %v1302
        %v1304 = vpop.f32.mrb[0].mxu0
        %v1305 = vadd.f32 %v1115, %v1304
        %1306 = vmatprep.mubr.f32.mxu0 %v1139
        %1307 = vmatmul.mubr.f32.gmra.mrb[0].mxu0 %v1052
        %v1308 = vpop.f32.mrb[0].mxu0
        %v1309 = vadd.f32 %v1111, %v1308
        %v1310 = vpop.f32.mrb[0].mxu0
        %v1311 = vadd.f32 %v1115, %v1310
        %1312 = vmatprep.mubr.f32.mxu0 %v1141
        %1313 = vmatmul.mubr.f32.gmra.mrb[0].mxu0 %v1053
        %v1314 = vpop.f32.mrb[0].mxu0
        %v1315 = vadd.f32 %v1111, %v1314
        %v1316 = vpop.f32.mrb[0].mxu0
        %v1317 = vadd.f32 %v1115, %v1316
        %1318 = vmatprep.mubr.f32.mxu0 %v1143
        %1319 = vmatmul.mubr.f32.gmra.mrb[0].mxu0 %v1054
        %v1320 = vpop.f32.mrb[0].mxu0
        %v1321 = vadd.f32 %v1111, %v1320
        %v1322 = vpop.f32.mrb[0].mxu0
        %v1323 = vadd.f32 %v1115, %v1322
        %1324 = vmatprep.mubr.f32.mxu0 %v1145
        %1325 = vmatmul.mubr.f32.gmra.mrb[0].mxu0 %v1055
        %v1326 = vpop.f32.mrb[0].mxu0
        %v1327 = vadd.f32 %v1111, %v1326
        %v1328 = vpop.f32.mrb[0].mxu0
        %v1329 = vadd.f32 %v1115, %v1328
        %1330 = vmatprep.mubr.f32.mxu0 %v1147
        %1331 = vmatmul.mubr.f32.gmra.mrb[0].mxu0 %v1056
        %v1332 = vpop.f32.mrb[0].mxu0
        %v1333 = vadd.f32 %v1111, %v1332
        %v1334 = vpop.f32.mrb[0].mxu0
        %v1335 = vadd.f32 %v1115, %v1334
        %1336 = vmatprep.mubr.f32.mxu0 %v1149
        %1337 = vmatmul.mubr.f32.gmra.mrb[0].mxu0 %v1057
        %v1338 = vpop.f32.mrb[0].mxu0
        %v1339 = vadd.f32 %v1111, %v1338
        %v1340 = vpop.f32.mrb[0].mxu0
        %v1341 = vadd.f32 %v1115, %v1340
        %1342 = vmatprep.mubr.f32.mxu0 %v1151
        %1343 = vmatmul.mubr.f32.gmra.mrb[0].mxu0 %v1058
        %v1344 = vpop.f32.mrb[0].mxu0
        %v1345 = vadd.f32 %v1111, %v1344
        %v1346 = vpop.f32.mrb[0].mxu0
        %v1347 = vadd.f32 %v1115, %v1346
        %1348 = vmatprep.mubr.f32.mxu0 %v1153
        %1349 = vmatmul.mubr.f32.gmra.mrb[0].mxu0 %v1059
        %v1350 = vpop.f32.mrb[0].mxu0
        %v1351 = vadd.f32 %v1111, %v1350
        %v1352 = vpop.f32.mrb[0].mxu0
        %v1353 = vadd.f32 %v1115, %v1352
        %1354 = vmatprep.mubr.f32.mxu0 %v1155
        %1355 = vmatmul.mubr.f32.gmra.mrb[0].mxu0 %v1060
        %v1356 = vpop.f32.mrb[0].mxu0
        %v1357 = vadd.f32 %v1111, %v1356
        %v1358 = vpop.f32.mrb[0].mxu0
        %v1359 = vadd.f32 %v1115, %v1358
        %1360 = vmatprep.mubr.f32.mxu0 %v1157
        %1361 = vmatmul.mubr.f32.gmra.mrb[0].mxu0 %v1061
        %v1362 = vpop.f32.mrb[0].mxu0
        %v1363 = vadd.f32 %v1111, %v1362
        %v1364 = vpop.f32.mrb[0].mxu0
        %v1365 = vadd.f32 %v1115, %v1364
        %1366 = vmatprep.mubr.f32.mxu0 %v1159
        %1367 = vmatmul.mubr.f32.gmra.mrb[0].mxu0 %v1062
        %v1368 = vpop.f32.mrb[0].mxu0
        %v1369 = vadd.f32 %v1111, %v1368
        %v1370 = vpop.f32.mrb[0].mxu0
        %v1371 = vadd.f32 %v1115, %v1370
        %1372 = vmatprep.mubr.f32.mxu0 %v1161
        %1373 = vmatmul.mubr.f32.gmra.mrb[0].mxu0 %v1063
        %v1374 = vpop.f32.mrb[0].mxu0
        %v1375 = vadd.f32 %v1111, %v1374
        %v1376 = vpop.f32.mrb[0].mxu0
        %v1377 = vadd.f32 %v1115, %v1376
        %1378 = vmatprep.mubr.f32.mxu0 %v1163
        %1379 = vmatmul.mubr.f32.gmra.mrb[0].mxu0 %v1064
        %v1380 = vpop.f32.mrb[0].mxu0
        %v1381 = vadd.f32 %v1111, %v1380
        %v1382 = vpop.f32.mrb[0].mxu0
        %v1383 = vadd.f32 %v1115, %v1382
        %1384 = vmatprep.mubr.f32.mxu0 %v1165
        %1385 = vmatmul.mubr.f32.gmra.mrb[0].mxu0 %v1065
        %v1386 = vpop.f32.mrb[0].mxu0
        %v1387 = vadd.f32 %v1111, %v1386
        %v1388 = vpop.f32.mrb[0].mxu0
        %v1389 = vadd.f32 %v1115, %v1388
        %1390 = vmatprep.mubr.f32.mxu0 %v1167
        %1391 = vmatmul.mubr.f32.gmra.mrb[0].mxu0 %v1066
        %v1392 = vpop.f32.mrb[0].mxu0
        %v1393 = vadd.f32 %v1111, %v1392
        %v1394 = vpop.f32.mrb[0].mxu0
        %v1395 = vadd.f32 %v1115, %v1394
        %1396 = vmatprep.mubr.f32.mxu0 %v1169
        %1397 = vmatmul.mubr.f32.gmra.mrb[0].mxu0 %v1067
        %v1398 = vpop.f32.mrb[0].mxu0
        %v1399 = vadd.f32 %v1111, %v1398
        %v1400 = vpop.f32.mrb[0].mxu0
        %v1401 = vadd.f32 %v1115, %v1400
        %1402 = vmatprep.mubr.f32.mxu0 %v1171
        %1403 = vmatmul.mubr.f32.gmra.mrb[0].mxu0 %v1068
        %v1404 = vpop.f32.mrb[0].mxu0
        %v1405 = vadd.f32 %v1111, %v1404
        %v1406 = vpop.f32.mrb[0].mxu0
        %v1407 = vadd.f32 %v1115, %v1406
        %1408 = vmatprep.mubr.f32.mxu0 %v1173
        %1409 = vmatmul.mubr.f32.gmra.mrb[0].mxu0 %v1069
        %v1410 = vpop.f32.mrb[0].mxu0
        %v1411 = vadd.f32 %v1111, %v1410
        %v1412 = vpop.f32.mrb[0].mxu0
        %v1413 = vadd.f32 %v1115, %v1412
        %1414 = vdwg.mxu0
        %v1415 = vmax.f32 %v1249, 0.0
        %v1416 = vmax.f32 %v1251, 0.0
        %v1417 = vmax.f32 %v1255, 0.0
        %v1418 = vmax.f32 %v1257, 0.0
        %v1419 = vmax.f32 %v1261, 0.0
        %v1420 = vmax.f32 %v1263, 0.0
        %v1421 = vmax.f32 %v1267, 0.0
        %v1422 = vmax.f32 %v1269, 0.0
        %v1423 = vmax.f32 %v1273, 0.0
        %v1424 = vmax.f32 %v1275, 0.0
        %v1425 = vmax.f32 %v1279, 0.0
        %v1426 = vmax.f32 %v1281, 0.0
        %v1427 = vmax.f32 %v1285, 0.0
        %v1428 = vmax.f32 %v1287, 0.0
        %v1429 = vmax.f32 %v1291, 0.0
        %v1430 = vmax.f32 %v1293, 0.0
        %v1431 = vmax.f32 %v1297, 0.0
        %v1432 = vmax.f32 %v1299, 0.0
        %v1433 = vmax.f32 %v1303, 0.0
        %v1434 = vmax.f32 %v1305, 0.0
        %v1435 = vmax.f32 %v1309, 0.0
        %v1436 = vmax.f32 %v1311, 0.0
        %v1437 = vmax.f32 %v1315, 0.0
        %v1438 = vmax.f32 %v1317, 0.0
        %v1439 = vmax.f32 %v1321, 0.0
        %v1440 = vmax.f32 %v1323, 0.0
        %v1441 = vmax.f32 %v1327, 0.0
        %v1442 = vmax.f32 %v1329, 0.0
        %v1443 = vmax.f32 %v1333, 0.0
        %v1444 = vmax.f32 %v1335, 0.0
        %v1445 = vmax.f32 %v1339, 0.0
        %v1446 = vmax.f32 %v1341, 0.0
        %v1447 = vmax.f32 %v1345, 0.0
        %v1448 = vmax.f32 %v1347, 0.0
        %v1449 = vmax.f32 %v1351, 0.0
        %v1450 = vmax.f32 %v1353, 0.0
        %v1451 = vmax.f32 %v1357, 0.0
        %v1452 = vmax.f32 %v1359, 0.0
        %v1453 = vmax.f32 %v1363, 0.0
        %v1454 = vmax.f32 %v1365, 0.0
        %v1455 = vmax.f32 %v1369, 0.0
        %v1456 = vmax.f32 %v1371, 0.0
        %v1457 = vmax.f32 %v1375, 0.0
        %v1458 = vmax.f32 %v1377, 0.0
        %v1459 = vmax.f32 %v1381, 0.0
        %v1460 = vmax.f32 %v1383, 0.0
        %v1461 = vmax.f32 %v1387, 0.0
        %v1462 = vmax.f32 %v1389, 0.0
        %v1463 = vmax.f32 %v1393, 0.0
        %v1464 = vmax.f32 %v1395, 0.0
        %v1465 = vmax.f32 %v1399, 0.0
        %v1466 = vmax.f32 %v1401, 0.0
        %v1467 = vmax.f32 %v1405, 0.0
        %v1468 = vmax.f32 %v1407, 0.0
        %v1469 = vmax.f32 %v1411, 0.0
        %v1470 = vmax.f32 %v1413, 0.0
        %v1471 = vld [vmem:[%s3] sm:$0xff]
        %v1472 = vld [vmem:[%s3 + $0x8] sm:$0xff]
        %v1473 = vld [vmem:[%s3 + $0x10] sm:$0xff]
        %v1474 = vld [vmem:[%s3 + $0x18] sm:$0xff]
        %v1475 = vld [vmem:[%s3 + $0x20] sm:$0xff]
        %v1476 = vld [vmem:[%s3 + $0x28] sm:$0xff]
        %v1477 = vld [vmem:[%s3 + $0x30] sm:$0xff]
        %v1478 = vld [vmem:[%s3 + $0x38] sm:$0xff]
        %v1479 = vld [vmem:[%s3 + $0x40] sm:$0xff]
        %v1480 = vld [vmem:[%s3 + $0x48] sm:$0xff]
        %v1481 = vld [vmem:[%s3 + $0x50] sm:$0xff]
        %v1482 = vld [vmem:[%s3 + $0x58] sm:$0xff]
        %v1483 = vld [vmem:[%s3 + $0x60] sm:$0xff]
        %v1484 = vld [vmem:[%s3 + $0x68] sm:$0xff]
        %v1485 = vld [vmem:[%s3 + $0x70] sm:$0xff]
        %v1486 = vld [vmem:[%s3 + $0x78] sm:$0xff]
        %v1487 = vld [vmem:[%s3 + $0x80] sm:$0xff]
        %v1488 = vld [vmem:[%s3 + $0x88] sm:$0xff]
        %v1489 = vld [vmem:[%s3 + $0x90] sm:$0xff]
        %v1490 = vld [vmem:[%s3 + $0x98] sm:$0xff]
        %v1491 = vld [vmem:[%s3 + $0xa0] sm:$0xff]
        %vm1492 = vcmask 326656
        %v1494 = vsel %vm1492, %v1416, 0
        %v1497 = vsel %vm1492, %v1418, 0
        %v1500 = vsel %vm1492, %v1420, 0
        %v1503 = vsel %vm1492, %v1422, 0
        %v1506 = vsel %vm1492, %v1424, 0
        %v1509 = vsel %vm1492, %v1426, 0
        %v1512 = vsel %vm1492, %v1428, 0
        %v1515 = vsel %vm1492, %v1430, 0
        %v1518 = vsel %vm1492, %v1432, 0
        %v1521 = vsel %vm1492, %v1434, 0
        %v1524 = vsel %vm1492, %v1436, 0
        %v1527 = vsel %vm1492, %v1438, 0
        %v1530 = vsel %vm1492, %v1440, 0
        %v1533 = vsel %vm1492, %v1442, 0
        %v1536 = vsel %vm1492, %v1444, 0
        %v1539 = vsel %vm1492, %v1446, 0
        %v1542 = vsel %vm1492, %v1448, 0
        %v1545 = vsel %vm1492, %v1450, 0
        %v1548 = vsel %vm1492, %v1452, 0
        %v1551 = vsel %vm1492, %v1454, 0
        %v1554 = vsel %vm1492, %v1456, 0
        %v1557 = vsel %vm1492, %v1458, 0
        %v1560 = vsel %vm1492, %v1460, 0
        %v1563 = vsel %vm1492, %v1462, 0
        %v1566 = vsel %vm1492, %v1464, 0
        %v1569 = vsel %vm1492, %v1466, 0
        %v1572 = vsel %vm1492, %v1468, 0
        %v1575 = vsel %vm1492, %v1470, 0
        %1577 = vmatprep.subr.mxu0 0.0
        %1578 = vmatpush1.msra.mxu0 %v1471
        %1579 = vmatprep.subr.mxu0 0.0
        %1580 = vmatpush1.msra.mxu0 %v1472
        %1581 = vmatprep.subr.mxu0 0.0
        %1582 = vmatpush1.msra.mxu0 %v1473
        %1583 = vmatprep.subr.mxu0 0.0
        %1584 = vmatpush1.msra.mxu0 %v1474
        %1585 = vmatprep.subr.mxu0 0.0
        %1586 = vmatpush1.msra.mxu0 %v1475
        %1587 = vmatprep.subr.mxu0 0.0
        %1588 = vmatpush1.msra.mxu0 %v1476
        %1589 = vmatprep.subr.mxu0 0.0
        %1590 = vmatpush1.msra.mxu0 %v1477
        %1591 = vmatprep.subr.mxu0 0.0
        %1592 = vmatpush1.msra.mxu0 %v1478
        %1593 = vmatprep.subr.mxu0 0.0
        %1594 = vmatpush1.msra.mxu0 %v1479
        %1595 = vmatprep.subr.mxu0 0.0
        %1596 = vmatpush1.msra.mxu0 %v1480
        %1597 = vmatprep.subr.mxu0 0.0
        %1598 = vmatpush1.msra.mxu0 %v1481
        %1599 = vmatprep.subr.mxu0 0.0
        %1600 = vmatpush1.msra.mxu0 %v1482
        %1601 = vmatprep.subr.mxu0 0.0
        %1602 = vmatpush1.msra.mxu0 %v1483
        %1603 = vmatprep.subr.mxu0 0.0
        %1604 = vmatpush1.msra.mxu0 %v1484
        %1605 = vmatprep.subr.mxu0 0.0
        %1606 = vmatpush1.msra.mxu0 %v1485
        %1607 = vmatprep.subr.mxu0 0.0
        %1608 = vmatpush1.msra.mxu0 %v1486
        %1609 = vmatprep.subr.mxu0 0.0
        %1610 = vmatpush1.msra.mxu0 %v1487
        %1611 = vmatprep.subr.mxu0 0.0
        %1612 = vmatpush1.msra.mxu0 %v1488
        %1613 = vmatprep.subr.mxu0 0.0
        %1614 = vmatpush1.msra.mxu0 %v1489
        %1615 = vmatprep.subr.mxu0 0.0
        %1616 = vmatpush1.msra.mxu0 %v1490
        %1617 = vmatprep.subr.mxu0 0.0
        %1618 = vmatpush1.msra.mxu0 %v1491
        %1619 = vmatprep.subr.mxu0 0.0
        %1620 = vmatpush1.msra.mxu0 0.0
        %1621 = vmatprep.subr.mxu0 0.0
        %1622 = vmatpush1.msra.mxu0 0.0
        %1623 = vmatprep.subr.mxu0 0.0
        %1624 = vmatpush1.msra.mxu0 0.0
        %1625 = vmatprep.subr.mxu0 0.0
        %1626 = vmatpush1.msra.mxu0 0.0
        %1627 = vmatprep.subr.mxu0 0.0
        %1628 = vmatpush1.msra.mxu0 0.0
        %1629 = vmatprep.subr.mxu0 0.0
        %1630 = vmatpush1.msra.mxu0 0.0
        %1631 = vmatprep.subr.mxu0 0.0
        %1632 = vmatpush1.msra.mxu0 0.0
        %1633 = vmatprep.subr.mxu0 0.0
        %1634 = vmatpush1.msra.mxu0 0.0
        %1635 = vmatprep.subr.mxu0 0.0
        %1636 = vmatpush1.msra.mxu0 0.0
        %1637 = vmatprep.subr.mxu0 0.0
        %1638 = vmatpush1.msra.mxu0 0.0
        %1639 = vmatprep.subr.mxu0 0.0
        %1640 = vmatpush1.msra.mxu0 0.0
        %1641 = vmatprep.mubr.f32.mxu0 %v1494
        %1642 = vmatmul.mubr.f32.gmra.mrb[0].mxu0 %v1415
        %v1643 = vpop.f32.mrb[0].mxu0
        %v1644 = vadd.f32 0.0, %v1643
        %v1645 = vpop.f32.mrb[0].mxu0
        %1646 = vmatprep.mubr.f32.mxu0 %v1497
        %1647 = vmatmul.mubr.f32.gmra.mrb[0].mxu0 %v1417
        %v1648 = vpop.f32.mrb[0].mxu0
        %v1649 = vadd.f32 0.0, %v1648
        %v1650 = vpop.f32.mrb[0].mxu0
        %1651 = vmatprep.mubr.f32.mxu0 %v1500
        %1652 = vmatmul.mubr.f32.gmra.mrb[0].mxu0 %v1419
        %v1653 = vpop.f32.mrb[0].mxu0
        %v1654 = vadd.f32 0.0, %v1653
        %v1655 = vpop.f32.mrb[0].mxu0
        %1656 = vmatprep.mubr.f32.mxu0 %v1503
        %1657 = vmatmul.mubr.f32.gmra.mrb[0].mxu0 %v1421
        %v1658 = vpop.f32.mrb[0].mxu0
        %v1659 = vadd.f32 0.0, %v1658
        %v1660 = vpop.f32.mrb[0].mxu0
        %1661 = vmatprep.mubr.f32.mxu0 %v1506
        %1662 = vmatmul.mubr.f32.gmra.mrb[0].mxu0 %v1423
        %v1663 = vpop.f32.mrb[0].mxu0
        %v1664 = vadd.f32 0.0, %v1663
        %v1665 = vpop.f32.mrb[0].mxu0
        %1666 = vmatprep.mubr.f32.mxu0 %v1509
        %1667 = vmatmul.mubr.f32.gmra.mrb[0].mxu0 %v1425
        %v1668 = vpop.f32.mrb[0].mxu0
        %v1669 = vadd.f32 0.0, %v1668
        %v1670 = vpop.f32.mrb[0].mxu0
        %1671 = vmatprep.mubr.f32.mxu0 %v1512
        %1672 = vmatmul.mubr.f32.gmra.mrb[0].mxu0 %v1427
        %v1673 = vpop.f32.mrb[0].mxu0
        %v1674 = vadd.f32 0.0, %v1673
        %v1675 = vpop.f32.mrb[0].mxu0
        %1676 = vmatprep.mubr.f32.mxu0 %v1515
        %1677 = vmatmul.mubr.f32.gmra.mrb[0].mxu0 %v1429
        %v1678 = vpop.f32.mrb[0].mxu0
        %v1679 = vadd.f32 0.0, %v1678
        %v1680 = vpop.f32.mrb[0].mxu0
        %1681 = vmatprep.mubr.f32.mxu0 %v1518
        %1682 = vmatmul.mubr.f32.gmra.mrb[0].mxu0 %v1431
        %v1683 = vpop.f32.mrb[0].mxu0
        %v1684 = vadd.f32 0.0, %v1683
        %v1685 = vpop.f32.mrb[0].mxu0
        %1686 = vmatprep.mubr.f32.mxu0 %v1521
        %1687 = vmatmul.mubr.f32.gmra.mrb[0].mxu0 %v1433
        %v1688 = vpop.f32.mrb[0].mxu0
        %v1689 = vadd.f32 0.0, %v1688
        %v1690 = vpop.f32.mrb[0].mxu0
        %1691 = vmatprep.mubr.f32.mxu0 %v1524
        %1692 = vmatmul.mubr.f32.gmra.mrb[0].mxu0 %v1435
        %v1693 = vpop.f32.mrb[0].mxu0
        %v1694 = vadd.f32 0.0, %v1693
        %v1695 = vpop.f32.mrb[0].mxu0
        %1696 = vmatprep.mubr.f32.mxu0 %v1527
        %1697 = vmatmul.mubr.f32.gmra.mrb[0].mxu0 %v1437
        %v1698 = vpop.f32.mrb[0].mxu0
        %v1699 = vadd.f32 0.0, %v1698
        %v1700 = vpop.f32.mrb[0].mxu0
        %1701 = vmatprep.mubr.f32.mxu0 %v1530
        %1702 = vmatmul.mubr.f32.gmra.mrb[0].mxu0 %v1439
        %v1703 = vpop.f32.mrb[0].mxu0
        %v1704 = vadd.f32 0.0, %v1703
        %v1705 = vpop.f32.mrb[0].mxu0
        %1706 = vmatprep.mubr.f32.mxu0 %v1533
        %1707 = vmatmul.mubr.f32.gmra.mrb[0].mxu0 %v1441
        %v1708 = vpop.f32.mrb[0].mxu0
        %v1709 = vadd.f32 0.0, %v1708
        %v1710 = vpop.f32.mrb[0].mxu0
        %1711 = vmatprep.mubr.f32.mxu0 %v1536
        %1712 = vmatmul.mubr.f32.gmra.mrb[0].mxu0 %v1443
        %v1713 = vpop.f32.mrb[0].mxu0
        %v1714 = vadd.f32 0.0, %v1713
        %v1715 = vpop.f32.mrb[0].mxu0
        %1716 = vmatprep.mubr.f32.mxu0 %v1539
        %1717 = vmatmul.mubr.f32.gmra.mrb[0].mxu0 %v1445
        %v1718 = vpop.f32.mrb[0].mxu0
        %v1719 = vadd.f32 0.0, %v1718
        %v1720 = vpop.f32.mrb[0].mxu0
        %1721 = vmatprep.mubr.f32.mxu0 %v1542
        %1722 = vmatmul.mubr.f32.gmra.mrb[0].mxu0 %v1447
        %v1723 = vpop.f32.mrb[0].mxu0
        %v1724 = vadd.f32 0.0, %v1723
        %v1725 = vpop.f32.mrb[0].mxu0
        %1726 = vmatprep.mubr.f32.mxu0 %v1545
        %1727 = vmatmul.mubr.f32.gmra.mrb[0].mxu0 %v1449
        %v1728 = vpop.f32.mrb[0].mxu0
        %v1729 = vadd.f32 0.0, %v1728
        %v1730 = vpop.f32.mrb[0].mxu0
        %1731 = vmatprep.mubr.f32.mxu0 %v1548
        %1732 = vmatmul.mubr.f32.gmra.mrb[0].mxu0 %v1451
        %v1733 = vpop.f32.mrb[0].mxu0
        %v1734 = vadd.f32 0.0, %v1733
        %v1735 = vpop.f32.mrb[0].mxu0
        %1736 = vmatprep.mubr.f32.mxu0 %v1551
        %1737 = vmatmul.mubr.f32.gmra.mrb[0].mxu0 %v1453
        %v1738 = vpop.f32.mrb[0].mxu0
        %v1739 = vadd.f32 0.0, %v1738
        %v1740 = vpop.f32.mrb[0].mxu0
        %1741 = vmatprep.mubr.f32.mxu0 %v1554
        %1742 = vmatmul.mubr.f32.gmra.mrb[0].mxu0 %v1455
        %v1743 = vpop.f32.mrb[0].mxu0
        %v1744 = vadd.f32 0.0, %v1743
        %v1745 = vpop.f32.mrb[0].mxu0
        %1746 = vmatprep.mubr.f32.mxu0 %v1557
        %1747 = vmatmul.mubr.f32.gmra.mrb[0].mxu0 %v1457
        %v1748 = vpop.f32.mrb[0].mxu0
        %v1749 = vadd.f32 0.0, %v1748
        %v1750 = vpop.f32.mrb[0].mxu0
        %1751 = vmatprep.mubr.f32.mxu0 %v1560
        %1752 = vmatmul.mubr.f32.gmra.mrb[0].mxu0 %v1459
        %v1753 = vpop.f32.mrb[0].mxu0
        %v1754 = vadd.f32 0.0, %v1753
        %v1755 = vpop.f32.mrb[0].mxu0
        %1756 = vmatprep.mubr.f32.mxu0 %v1563
        %1757 = vmatmul.mubr.f32.gmra.mrb[0].mxu0 %v1461
        %v1758 = vpop.f32.mrb[0].mxu0
        %v1759 = vadd.f32 0.0, %v1758
        %v1760 = vpop.f32.mrb[0].mxu0
        %1761 = vmatprep.mubr.f32.mxu0 %v1566
        %1762 = vmatmul.mubr.f32.gmra.mrb[0].mxu0 %v1463
        %v1763 = vpop.f32.mrb[0].mxu0
        %v1764 = vadd.f32 0.0, %v1763
        %v1765 = vpop.f32.mrb[0].mxu0
        %1766 = vmatprep.mubr.f32.mxu0 %v1569
        %1767 = vmatmul.mubr.f32.gmra.mrb[0].mxu0 %v1465
        %v1768 = vpop.f32.mrb[0].mxu0
        %v1769 = vadd.f32 0.0, %v1768
        %v1770 = vpop.f32.mrb[0].mxu0
        %1771 = vmatprep.mubr.f32.mxu0 %v1572
        %1772 = vmatmul.mubr.f32.gmra.mrb[0].mxu0 %v1467
        %v1773 = vpop.f32.mrb[0].mxu0
        %v1774 = vadd.f32 0.0, %v1773
        %v1775 = vpop.f32.mrb[0].mxu0
        %1776 = vmatprep.mubr.f32.mxu0 %v1575
        %1777 = vmatmul.mubr.f32.gmra.mrb[0].mxu0 %v1469
        %v1778 = vpop.f32.mrb[0].mxu0
        %v1779 = vadd.f32 0.0, %v1778
        %v1780 = vpop.f32.mrb[0].mxu0
        %1781 = vdwg.mxu0
        %v1782 = vld [vmem:[%s4] sm:$0xff]
        %v1783 = vld [vmem:[%s4 + $0x8] sm:$0xff]
        %v1784 = vld [vmem:[%s4 + $0x10] sm:$0xff]
        %v1785 = vld [vmem:[%s4 + $0x18] sm:$0xff]
        %v1786 = vld [vmem:[%s4 + $0x20] sm:$0xff]
        %v1787 = vld [vmem:[%s4 + $0x28] sm:$0xff]
        %v1788 = vld [vmem:[%s4 + $0x30] sm:$0xff]
        %v1789 = vld [vmem:[%s4 + $0x38] sm:$0xff]
        %v1790 = vld [vmem:[%s4 + $0x40] sm:$0xff]
        %v1791 = vld [vmem:[%s4 + $0x48] sm:$0xff]
        %v1792 = vld [vmem:[%s4 + $0x50] sm:$0xff]
        %v1793 = vld [vmem:[%s4 + $0x58] sm:$0xff]
        %v1794 = vld [vmem:[%s4 + $0x60] sm:$0xff]
        %v1795 = vld [vmem:[%s4 + $0x68] sm:$0xff]
        %v1796 = vld [vmem:[%s4 + $0x70] sm:$0xff]
        %v1797 = vld [vmem:[%s4 + $0x78] sm:$0xff]
        %v1798 = vld [vmem:[%s4 + $0x80] sm:$0xff]
        %v1799 = vld [vmem:[%s4 + $0x88] sm:$0xff]
        %v1800 = vld [vmem:[%s4 + $0x90] sm:$0xff]
        %v1801 = vld [vmem:[%s4 + $0x98] sm:$0xff]
        %v1802 = vld [vmem:[%s4 + $0xa0] sm:$0xff]
        %1803 = vmatprep.subr.mxu0 0.0
        %1804 = vmatpush1.msra.mxu0 %v1782
        %1805 = vmatprep.subr.mxu0 0.0
        %1806 = vmatpush1.msra.mxu0 %v1783
        %1807 = vmatprep.subr.mxu0 0.0
        %1808 = vmatpush1.msra.mxu0 %v1784
        %1809 = vmatprep.subr.mxu0 0.0
        %1810 = vmatpush1.msra.mxu0 %v1785
        %1811 = vmatprep.subr.mxu0 0.0
        %1812 = vmatpush1.msra.mxu0 %v1786
        %1813 = vmatprep.subr.mxu0 0.0
        %1814 = vmatpush1.msra.mxu0 %v1787
        %1815 = vmatprep.subr.mxu0 0.0
        %1816 = vmatpush1.msra.mxu0 %v1788
        %1817 = vmatprep.subr.mxu0 0.0
        %1818 = vmatpush1.msra.mxu0 %v1789
        %1819 = vmatprep.subr.mxu0 0.0
        %1820 = vmatpush1.msra.mxu0 %v1790
        %1821 = vmatprep.subr.mxu0 0.0
        %1822 = vmatpush1.msra.mxu0 %v1791
        %1823 = vmatprep.subr.mxu0 0.0
        %1824 = vmatpush1.msra.mxu0 %v1792
        %1825 = vmatprep.subr.mxu0 0.0
        %1826 = vmatpush1.msra.mxu0 %v1793
        %1827 = vmatprep.subr.mxu0 0.0
        %1828 = vmatpush1.msra.mxu0 %v1794
        %1829 = vmatprep.subr.mxu0 0.0
        %1830 = vmatpush1.msra.mxu0 %v1795
        %1831 = vmatprep.subr.mxu0 0.0
        %1832 = vmatpush1.msra.mxu0 %v1796
        %1833 = vmatprep.subr.mxu0 0.0
        %1834 = vmatpush1.msra.mxu0 %v1797
        %1835 = vmatprep.subr.mxu0 0.0
        %1836 = vmatpush1.msra.mxu0 %v1798
        %1837 = vmatprep.subr.mxu0 0.0
        %1838 = vmatpush1.msra.mxu0 %v1799
        %1839 = vmatprep.subr.mxu0 0.0
        %1840 = vmatpush1.msra.mxu0 %v1800
        %1841 = vmatprep.subr.mxu0 0.0
        %1842 = vmatpush1.msra.mxu0 %v1801
        %1843 = vmatprep.subr.mxu0 0.0
        %1844 = vmatpush1.msra.mxu0 %v1802
        %1845 = vmatprep.subr.mxu0 0.0
        %1846 = vmatpush1.msra.mxu0 0.0
        %1847 = vmatprep.subr.mxu0 0.0
        %1848 = vmatpush1.msra.mxu0 0.0
        %1849 = vmatprep.subr.mxu0 0.0
        %1850 = vmatpush1.msra.mxu0 0.0
        %1851 = vmatprep.subr.mxu0 0.0
        %1852 = vmatpush1.msra.mxu0 0.0
        %1853 = vmatprep.subr.mxu0 0.0
        %1854 = vmatpush1.msra.mxu0 0.0
        %1855 = vmatprep.subr.mxu0 0.0
        %1856 = vmatpush1.msra.mxu0 0.0
        %1857 = vmatprep.subr.mxu0 0.0
        %1858 = vmatpush1.msra.mxu0 0.0
        %1859 = vmatprep.subr.mxu0 0.0
        %1860 = vmatpush1.msra.mxu0 0.0
        %1861 = vmatprep.subr.mxu0 0.0
        %1862 = vmatpush1.msra.mxu0 0.0
        %1863 = vmatprep.subr.mxu0 0.0
        %1864 = vmatpush1.msra.mxu0 0.0
        %1865 = vmatprep.subr.mxu0 0.0
        %1866 = vmatpush1.msra.mxu0 0.0
        %1867 = vmatprep.mubr.f32.mxu0 %v1494
        %1868 = vmatmul.mubr.f32.gmra.mrb[0].mxu0 %v1415
        %v1869 = vpop.f32.mrb[0].mxu0
        %v1870 = vadd.f32 0.0, %v1869
        %v1871 = vpop.f32.mrb[0].mxu0
        %1872 = vmatprep.mubr.f32.mxu0 %v1497
        %1873 = vmatmul.mubr.f32.gmra.mrb[0].mxu0 %v1417
        %v1874 = vpop.f32.mrb[0].mxu0
        %v1875 = vadd.f32 0.0, %v1874
        %v1876 = vpop.f32.mrb[0].mxu0
        %1877 = vmatprep.mubr.f32.mxu0 %v1500
        %1878 = vmatmul.mubr.f32.gmra.mrb[0].mxu0 %v1419
        %v1879 = vpop.f32.mrb[0].mxu0
        %v1880 = vadd.f32 0.0, %v1879
        %v1881 = vpop.f32.mrb[0].mxu0
        %1882 = vmatprep.mubr.f32.mxu0 %v1503
        %1883 = vmatmul.mubr.f32.gmra.mrb[0].mxu0 %v1421
        %v1884 = vpop.f32.mrb[0].mxu0
        %v1885 = vadd.f32 0.0, %v1884
        %v1886 = vpop.f32.mrb[0].mxu0
        %1887 = vmatprep.mubr.f32.mxu0 %v1506
        %1888 = vmatmul.mubr.f32.gmra.mrb[0].mxu0 %v1423
        %v1889 = vpop.f32.mrb[0].mxu0
        %v1890 = vadd.f32 0.0, %v1889
        %v1891 = vpop.f32.mrb[0].mxu0
        %1892 = vmatprep.mubr.f32.mxu0 %v1509
        %1893 = vmatmul.mubr.f32.gmra.mrb[0].mxu0 %v1425
        %v1894 = vpop.f32.mrb[0].mxu0
        %v1895 = vadd.f32 0.0, %v1894
        %v1896 = vpop.f32.mrb[0].mxu0
        %1897 = vmatprep.mubr.f32.mxu0 %v1512
        %1898 = vmatmul.mubr.f32.gmra.mrb[0].mxu0 %v1427
        %v1899 = vpop.f32.mrb[0].mxu0
        %v1900 = vadd.f32 0.0, %v1899
        %v1901 = vpop.f32.mrb[0].mxu0
        %1902 = vmatprep.mubr.f32.mxu0 %v1515
        %1903 = vmatmul.mubr.f32.gmra.mrb[0].mxu0 %v1429
        %v1904 = vpop.f32.mrb[0].mxu0
        %v1905 = vadd.f32 0.0, %v1904
        %v1906 = vpop.f32.mrb[0].mxu0
        %1907 = vmatprep.mubr.f32.mxu0 %v1518
        %1908 = vmatmul.mubr.f32.gmra.mrb[0].mxu0 %v1431
        %v1909 = vpop.f32.mrb[0].mxu0
        %v1910 = vadd.f32 0.0, %v1909
        %v1911 = vpop.f32.mrb[0].mxu0
        %1912 = vmatprep.mubr.f32.mxu0 %v1521
        %1913 = vmatmul.mubr.f32.gmra.mrb[0].mxu0 %v1433
        %v1914 = vpop.f32.mrb[0].mxu0
        %v1915 = vadd.f32 0.0, %v1914
        %v1916 = vpop.f32.mrb[0].mxu0
        %1917 = vmatprep.mubr.f32.mxu0 %v1524
        %1918 = vmatmul.mubr.f32.gmra.mrb[0].mxu0 %v1435
        %v1919 = vpop.f32.mrb[0].mxu0
        %v1920 = vadd.f32 0.0, %v1919
        %v1921 = vpop.f32.mrb[0].mxu0
        %1922 = vmatprep.mubr.f32.mxu0 %v1527
        %1923 = vmatmul.mubr.f32.gmra.mrb[0].mxu0 %v1437
        %v1924 = vpop.f32.mrb[0].mxu0
        %v1925 = vadd.f32 0.0, %v1924
        %v1926 = vpop.f32.mrb[0].mxu0
        %1927 = vmatprep.mubr.f32.mxu0 %v1530
        %1928 = vmatmul.mubr.f32.gmra.mrb[0].mxu0 %v1439
        %v1929 = vpop.f32.mrb[0].mxu0
        %v1930 = vadd.f32 0.0, %v1929
        %v1931 = vpop.f32.mrb[0].mxu0
        %1932 = vmatprep.mubr.f32.mxu0 %v1533
        %1933 = vmatmul.mubr.f32.gmra.mrb[0].mxu0 %v1441
        %v1934 = vpop.f32.mrb[0].mxu0
        %v1935 = vadd.f32 0.0, %v1934
        %v1936 = vpop.f32.mrb[0].mxu0
        %1937 = vmatprep.mubr.f32.mxu0 %v1536
        %1938 = vmatmul.mubr.f32.gmra.mrb[0].mxu0 %v1443
        %v1939 = vpop.f32.mrb[0].mxu0
        %v1940 = vadd.f32 0.0, %v1939
        %v1941 = vpop.f32.mrb[0].mxu0
        %1942 = vmatprep.mubr.f32.mxu0 %v1539
        %1943 = vmatmul.mubr.f32.gmra.mrb[0].mxu0 %v1445
        %v1944 = vpop.f32.mrb[0].mxu0
        %v1945 = vadd.f32 0.0, %v1944
        %v1946 = vpop.f32.mrb[0].mxu0
        %1947 = vmatprep.mubr.f32.mxu0 %v1542
        %1948 = vmatmul.mubr.f32.gmra.mrb[0].mxu0 %v1447
        %v1949 = vpop.f32.mrb[0].mxu0
        %v1950 = vadd.f32 0.0, %v1949
        %v1951 = vpop.f32.mrb[0].mxu0
        %1952 = vmatprep.mubr.f32.mxu0 %v1545
        %1953 = vmatmul.mubr.f32.gmra.mrb[0].mxu0 %v1449
        %v1954 = vpop.f32.mrb[0].mxu0
        %v1955 = vadd.f32 0.0, %v1954
        %v1956 = vpop.f32.mrb[0].mxu0
        %1957 = vmatprep.mubr.f32.mxu0 %v1548
        %1958 = vmatmul.mubr.f32.gmra.mrb[0].mxu0 %v1451
        %v1959 = vpop.f32.mrb[0].mxu0
        %v1960 = vadd.f32 0.0, %v1959
        %v1961 = vpop.f32.mrb[0].mxu0
        %1962 = vmatprep.mubr.f32.mxu0 %v1551
        %1963 = vmatmul.mubr.f32.gmra.mrb[0].mxu0 %v1453
        %v1964 = vpop.f32.mrb[0].mxu0
        %v1965 = vadd.f32 0.0, %v1964
        %v1966 = vpop.f32.mrb[0].mxu0
        %1967 = vmatprep.mubr.f32.mxu0 %v1554
        %1968 = vmatmul.mubr.f32.gmra.mrb[0].mxu0 %v1455
        %v1969 = vpop.f32.mrb[0].mxu0
        %v1970 = vadd.f32 0.0, %v1969
        %v1971 = vpop.f32.mrb[0].mxu0
        %1972 = vmatprep.mubr.f32.mxu0 %v1557
        %1973 = vmatmul.mubr.f32.gmra.mrb[0].mxu0 %v1457
        %v1974 = vpop.f32.mrb[0].mxu0
        %v1975 = vadd.f32 0.0, %v1974
        %v1976 = vpop.f32.mrb[0].mxu0
        %1977 = vmatprep.mubr.f32.mxu0 %v1560
        %1978 = vmatmul.mubr.f32.gmra.mrb[0].mxu0 %v1459
        %v1979 = vpop.f32.mrb[0].mxu0
        %v1980 = vadd.f32 0.0, %v1979
        %v1981 = vpop.f32.mrb[0].mxu0
        %1982 = vmatprep.mubr.f32.mxu0 %v1563
        %1983 = vmatmul.mubr.f32.gmra.mrb[0].mxu0 %v1461
        %v1984 = vpop.f32.mrb[0].mxu0
        %v1985 = vadd.f32 0.0, %v1984
        %v1986 = vpop.f32.mrb[0].mxu0
        %1987 = vmatprep.mubr.f32.mxu0 %v1566
        %1988 = vmatmul.mubr.f32.gmra.mrb[0].mxu0 %v1463
        %v1989 = vpop.f32.mrb[0].mxu0
        %v1990 = vadd.f32 0.0, %v1989
        %v1991 = vpop.f32.mrb[0].mxu0
        %1992 = vmatprep.mubr.f32.mxu0 %v1569
        %1993 = vmatmul.mubr.f32.gmra.mrb[0].mxu0 %v1465
        %v1994 = vpop.f32.mrb[0].mxu0
        %v1995 = vadd.f32 0.0, %v1994
        %v1996 = vpop.f32.mrb[0].mxu0
        %1997 = vmatprep.mubr.f32.mxu0 %v1572
        %1998 = vmatmul.mubr.f32.gmra.mrb[0].mxu0 %v1467
        %v1999 = vpop.f32.mrb[0].mxu0
        %v2000 = vadd.f32 0.0, %v1999
        %v2001 = vpop.f32.mrb[0].mxu0
        %2002 = vmatprep.mubr.f32.mxu0 %v1575
        %2003 = vmatmul.mubr.f32.gmra.mrb[0].mxu0 %v1469
        %v2004 = vpop.f32.mrb[0].mxu0
        %v2005 = vadd.f32 0.0, %v2004
        %v2006 = vpop.f32.mrb[0].mxu0
        %2007 = vdwg.mxu0
        %v2008 = vmax.f32 %v1644, %v1870
        %v2009 = vmax.f32 %v1649, %v1875
        %v2010 = vmax.f32 %v1654, %v1880
        %v2011 = vmax.f32 %v1659, %v1885
        %v2012 = vmax.f32 %v1664, %v1890
        %v2013 = vmax.f32 %v1669, %v1895
        %v2014 = vmax.f32 %v1674, %v1900
        %v2015 = vmax.f32 %v1679, %v1905
        %v2016 = vmax.f32 %v1684, %v1910
        %v2017 = vmax.f32 %v1689, %v1915
        %v2018 = vmax.f32 %v1694, %v1920
        %v2019 = vmax.f32 %v1699, %v1925
        %v2020 = vmax.f32 %v1704, %v1930
        %v2021 = vmax.f32 %v1709, %v1935
        %v2022 = vmax.f32 %v1714, %v1940
        %v2023 = vmax.f32 %v1719, %v1945
        %v2024 = vmax.f32 %v1724, %v1950
        %v2025 = vmax.f32 %v1729, %v1955
        %v2026 = vmax.f32 %v1734, %v1960
        %v2027 = vmax.f32 %v1739, %v1965
        %v2028 = vmax.f32 %v1744, %v1970
        %v2029 = vmax.f32 %v1749, %v1975
        %v2030 = vmax.f32 %v1754, %v1980
        %v2031 = vmax.f32 %v1759, %v1985
        %v2032 = vmax.f32 %v1764, %v1990
        %v2033 = vmax.f32 %v1769, %v1995
        %v2034 = vmax.f32 %v1774, %v2000
        %v2035 = vmax.f32 %v1779, %v2005
        %v2036 = vmax.f32 %v2008, %v2009
        %v2037 = vmax.f32 %v2010, %v2011
        %v2038 = vmax.f32 %v2012, %v2013
        %v2039 = vmax.f32 %v2014, %v2015
        %v2040 = vmax.f32 %v2016, %v2017
        %v2041 = vmax.f32 %v2018, %v2019
        %v2042 = vmax.f32 %v2020, %v2021
        %v2043 = vmax.f32 %v2022, %v2023
        %v2044 = vmax.f32 %v2024, %v2025
        %v2045 = vmax.f32 %v2026, %v2027
        %v2046 = vmax.f32 %v2028, %v2029
        %v2047 = vmax.f32 %v2030, %v2031
        %v2048 = vmax.f32 %v2032, %v2033
        %v2049 = vmax.f32 %v2034, %v2035
        %2060 = vrot.lane.b32.xlu0 %v2037, 84
        %v2061 = vpop.permute.xlu0 %2060
        %2062 = vrot.lane.b32.xlu0 %v2038, 84
        %v2063 = vpop.permute.xlu0 %2062
        %2064 = vrot.lane.b32.xlu0 %v2039, 84
        %v2065 = vpop.permute.xlu0 %2064
        %2066 = vrot.lane.b32.xlu0 %v2040, 84
        %v2067 = vpop.permute.xlu0 %2066
        %2068 = vrot.lane.b32.xlu0 %v2041, 84
        %v2069 = vpop.permute.xlu0 %2068
        %2070 = vrot.lane.b32.xlu0 %v2042, 84
        %v2071 = vpop.permute.xlu0 %2070
        %2072 = vrot.lane.b32.xlu0 %v2043, 84
        %v2073 = vpop.permute.xlu0 %2072
        %2074 = vrot.lane.b32.xlu0 %v2044, 84
        %v2075 = vpop.permute.xlu0 %2074
        %2076 = vrot.lane.b32.xlu0 %v2045, 84
        %v2077 = vpop.permute.xlu0 %2076
        %2078 = vrot.lane.b32.xlu0 %v2046, 84
        %v2079 = vpop.permute.xlu0 %2078
        %2091 = vrot.lane.b32.xlu0 %v2038, 40
        %v2092 = vpop.permute.xlu0 %2091
        %2093 = vrot.lane.b32.xlu0 %v2039, 40
        %v2094 = vpop.permute.xlu0 %2093
        %2095 = vrot.lane.b32.xlu0 %v2040, 40
        %v2096 = vpop.permute.xlu0 %2095
        %2097 = vrot.lane.b32.xlu0 %v2041, 40
        %v2098 = vpop.permute.xlu0 %2097
        %2099 = vrot.lane.b32.xlu0 %v2042, 40
        %v2100 = vpop.permute.xlu0 %2099
        %2101 = vrot.lane.b32.xlu0 %v2043, 40
        %v2102 = vpop.permute.xlu0 %2101
        %2103 = vrot.lane.b32.xlu0 %v2044, 40
        %v2104 = vpop.permute.xlu0 %2103
        %2105 = vrot.lane.b32.xlu0 %v2045, 40
        %v2106 = vpop.permute.xlu0 %2105
        %2107 = vrot.lane.b32.xlu0 %v2046, 40
        %v2108 = vpop.permute.xlu0 %2107
        %2109 = vrot.lane.b32.xlu0 %v2047, 40
        %v2110 = vpop.permute.xlu0 %2109
        %2122 = vrot.lane.b32.xlu0 %v2039, 124
        %v2123 = vpop.permute.xlu0 %2122
        %2124 = vrot.lane.b32.xlu0 %v2040, 124
        %v2125 = vpop.permute.xlu0 %2124
        %2126 = vrot.lane.b32.xlu0 %v2041, 124
        %v2127 = vpop.permute.xlu0 %2126
        %2128 = vrot.lane.b32.xlu0 %v2042, 124
        %v2129 = vpop.permute.xlu0 %2128
        %2130 = vrot.lane.b32.xlu0 %v2043, 124
        %v2131 = vpop.permute.xlu0 %2130
        %2132 = vrot.lane.b32.xlu0 %v2044, 124
        %v2133 = vpop.permute.xlu0 %2132
        %2134 = vrot.lane.b32.xlu0 %v2045, 124
        %v2135 = vpop.permute.xlu0 %2134
        %2136 = vrot.lane.b32.xlu0 %v2046, 124
        %v2137 = vpop.permute.xlu0 %2136
        %2138 = vrot.lane.b32.xlu0 %v2047, 124
        %v2139 = vpop.permute.xlu0 %2138
        %2140 = vrot.lane.b32.xlu0 %v2048, 124
        %v2141 = vpop.permute.xlu0 %2140
        %2153 = vrot.lane.b32.xlu0 %v2040, 80
        %v2154 = vpop.permute.xlu0 %2153
        %2155 = vrot.lane.b32.xlu0 %v2041, 80
        %v2156 = vpop.permute.xlu0 %2155
        %2157 = vrot.lane.b32.xlu0 %v2042, 80
        %v2158 = vpop.permute.xlu0 %2157
        %2159 = vrot.lane.b32.xlu0 %v2043, 80
        %v2160 = vpop.permute.xlu0 %2159
        %2161 = vrot.lane.b32.xlu0 %v2044, 80
        %v2162 = vpop.permute.xlu0 %2161
        %2163 = vrot.lane.b32.xlu0 %v2045, 80
        %v2164 = vpop.permute.xlu0 %2163
        %2165 = vrot.lane.b32.xlu0 %v2046, 80
        %v2166 = vpop.permute.xlu0 %2165
        %2167 = vrot.lane.b32.xlu0 %v2047, 80
        %v2168 = vpop.permute.xlu0 %2167
        %2169 = vrot.lane.b32.xlu0 %v2048, 80
        %v2170 = vpop.permute.xlu0 %2169
        %2171 = vrot.lane.b32.xlu0 %v2049, 80
        %v2172 = vpop.permute.xlu0 %2171
        %v2183 = vsel %vm1012, %v2036, %v2061
        %v2184 = vsel %vm1012, %v2037, %v2063
        %v2185 = vsel %vm1012, %v2038, %v2065
        %v2186 = vsel %vm1012, %v2039, %v2067
        %v2187 = vsel %vm1012, %v2040, %v2069
        %v2188 = vsel %vm1012, %v2041, %v2071
        %v2189 = vsel %vm1012, %v2042, %v2073
        %v2190 = vsel %vm1012, %v2043, %v2075
        %v2191 = vsel %vm1012, %v2044, %v2077
        %v2192 = vsel %vm1012, %v2045, %v2079
        %v2193 = vsel %vm1492, %v2061, %v2092
        %v2194 = vsel %vm1492, %v2063, %v2094
        %v2195 = vsel %vm1492, %v2065, %v2096
        %v2196 = vsel %vm1492, %v2067, %v2098
        %v2197 = vsel %vm1492, %v2069, %v2100
        %v2198 = vsel %vm1492, %v2071, %v2102
        %v2199 = vsel %vm1492, %v2073, %v2104
        %v2200 = vsel %vm1492, %v2075, %v2106
        %v2201 = vsel %vm1492, %v2077, %v2108
        %v2202 = vsel %vm1492, %v2079, %v2110
        %vm2203 = vcmask 1014784
        %v2204 = vsel %vm2203, %v2193, %v2123
        %v2205 = vsel %vm2203, %v2194, %v2125
        %v2206 = vsel %vm2203, %v2195, %v2127
        %v2207 = vsel %vm2203, %v2196, %v2129
        %v2208 = vsel %vm2203, %v2197, %v2131
        %v2209 = vsel %vm2203, %v2198, %v2133
        %v2210 = vsel %vm2203, %v2199, %v2135
        %v2211 = vsel %vm2203, %v2200, %v2137
        %v2212 = vsel %vm2203, %v2201, %v2139
        %v2213 = vsel %vm2203, %v2202, %v2141
        %vm2214 = vcmask 654336
        %v2215 = vsel %vm2214, %v2123, %v2154
        %v2216 = vsel %vm2214, %v2125, %v2156
        %v2217 = vsel %vm2214, %v2127, %v2158
        %v2218 = vsel %vm2214, %v2129, %v2160
        %v2219 = vsel %vm2214, %v2131, %v2162
        %v2220 = vsel %vm2214, %v2133, %v2164
        %v2221 = vsel %vm2214, %v2135, %v2166
        %v2222 = vsel %vm2214, %v2137, %v2168
        %v2223 = vsel %vm2214, %v2139, %v2170
        %v2224 = vsel %vm2214, %v2141, %v2172
        %v2225 = vld [vmem:[%s5] sm:$0xff]
        %v2226 = vld [vmem:[%s5 + $0x8] sm:$0xff]
        %v2227 = vld [vmem:[%s5 + $0x10] sm:$0xff]
        %v2228 = vld [vmem:[%s5 + $0x18] sm:$0xff]
        %v2229 = vld [vmem:[%s5 + $0x20] sm:$0xff]
        %v2230 = vld [vmem:[%s5 + $0x28] sm:$0xff]
        %v2231 = vld [vmem:[%s5 + $0x30] sm:$0xff]
        %v2232 = vld [vmem:[%s5 + $0x38] sm:$0xff]
        %v2233 = vld [vmem:[%s5 + $0x40] sm:$0xff]
        %v2234 = vld [vmem:[%s5 + $0x48] sm:$0xff]
        %v2235 = vld [vmem:[%s5 + $0x50] sm:$0xff]
        %v2236 = vld [vmem:[%s5 + $0x58] sm:$0xff]
        %v2237 = vld [vmem:[%s5 + $0x60] sm:$0xff]
        %v2238 = vld [vmem:[%s5 + $0x68] sm:$0xff]
        %v2239 = vld [vmem:[%s5 + $0x70] sm:$0xff]
        %v2240 = vld [vmem:[%s5 + $0x78] sm:$0xff]
        %v2241 = vld [vmem:[%s5 + $0x80] sm:$0xff]
        %v2242 = vld [vmem:[%s5 + $0x88] sm:$0xff]
        %v2243 = vld [vmem:[%s5 + $0x90] sm:$0xff]
        %v2244 = vld [vmem:[%s5 + $0x98] sm:$0xff]
        %v2245 = vld [vmem:[%s5 + $0xa0] sm:$0xff]
        %v2246 = vld [vmem:[%s5 + $0xa8] sm:$0xff]
        %v2247 = vld [vmem:[%s5 + $0xb0] sm:$0xff]
        %v2248 = vld [vmem:[%s5 + $0xb8] sm:$0xff]
        %v2249 = vld [vmem:[%s5 + $0xc0] sm:$0xff]
        %v2250 = vld [vmem:[%s5 + $0xc8] sm:$0xff]
        %v2251 = vld [vmem:[%s5 + $0xd0] sm:$0xff]
        %v2252 = vld [vmem:[%s5 + $0xd8] sm:$0xff]
        %v2253 = vld [vmem:[%s5 + $0xe0] sm:$0xff]
        %v2254 = vld [vmem:[%s5 + $0xe8] sm:$0xff]
        %v2255 = vld [vmem:[%s5 + $0xf0] sm:$0xff]
        %v2256 = vld [vmem:[%s5 + $0xf8] sm:$0xff]
        %v2257 = vld [vmem:[%s5 + $0x100] sm:$0xff]
        %v2258 = vld [vmem:[%s5 + $0x108] sm:$0xff]
        %v2259 = vld [vmem:[%s5 + $0x110] sm:$0xff]
        %v2260 = vld [vmem:[%s5 + $0x118] sm:$0xff]
        %v2261 = vld [vmem:[%s5 + $0x120] sm:$0xff]
        %v2262 = vld [vmem:[%s5 + $0x128] sm:$0xff]
        %v2263 = vld [vmem:[%s5 + $0x130] sm:$0xff]
        %v2264 = vld [vmem:[%s5 + $0x138] sm:$0xff]
        %v2265 = vld [vmem:[%s5 + $0x140] sm:$0xff]
        %v2266 = vld [vmem:[%s5 + $0x148] sm:$0xff]
        %v2267 = vld [vmem:[%s5 + $0x150] sm:$0xff]
        %v2268 = vld [vmem:[%s5 + $0x158] sm:$0xff]
        %v2269 = vld [vmem:[%s5 + $0x160] sm:$0xff]
        %v2270 = vld [vmem:[%s5 + $0x168] sm:$0xff]
        %v2271 = vld [vmem:[%s5 + $0x170] sm:$0xff]
        %v2272 = vld [vmem:[%s5 + $0x178] sm:$0xff]
        %v2273 = vld [vmem:[%s5 + $0x180] sm:$0xff]
        %v2274 = vld [vmem:[%s5 + $0x188] sm:$0xff]
        %v2275 = vld [vmem:[%s5 + $0x190] sm:$0xff]
        %v2276 = vld [vmem:[%s5 + $0x198] sm:$0xff]
        %v2277 = vld [vmem:[%s5 + $0x1a0] sm:$0xff]
        %v2278 = vld [vmem:[%s5 + $0x1a8] sm:$0xff]
        %v2279 = vld [vmem:[%s5 + $0x1b0] sm:$0xff]
        %v2280 = vld [vmem:[%s5 + $0x1b8] sm:$0xff]
        %v2281 = vld [vmem:[%s5 + $0x1c0] sm:$0xff]
        %v2282 = vld [vmem:[%s5 + $0x1c8] sm:$0xff]
        %v2283 = vld [vmem:[%s5 + $0x1d0] sm:$0xff]
        %v2284 = vld [vmem:[%s5 + $0x1d8] sm:$0xff]
        %v2285 = vld [vmem:[%s5 + $0x1e0] sm:$0xff]
        %v2286 = vld [vmem:[%s5 + $0x1e8] sm:$0xff]
        %v2287 = vld [vmem:[%s5 + $0x1f0] sm:$0xff]
        %v2288 = vld [vmem:[%s5 + $0x1f8] sm:$0xff]
        %v2289 = vld [vmem:[%s5 + $0x200] sm:$0xff]
        %v2290 = vld [vmem:[%s5 + $0x208] sm:$0xff]
        %v2291 = vld [vmem:[%s5 + $0x210] sm:$0xff]
        %v2292 = vld [vmem:[%s5 + $0x218] sm:$0xff]
        %v2293 = vld [vmem:[%s5 + $0x220] sm:$0xff]
        %v2294 = vld [vmem:[%s5 + $0x228] sm:$0xff]
        %v2295 = vld [vmem:[%s5 + $0x230] sm:$0xff]
        %v2296 = vld [vmem:[%s5 + $0x238] sm:$0xff]
        %v2297 = vld [vmem:[%s5 + $0x240] sm:$0xff]
        %v2298 = vld [vmem:[%s5 + $0x248] sm:$0xff]
        %v2299 = vld [vmem:[%s5 + $0x250] sm:$0xff]
        %v2300 = vld [vmem:[%s5 + $0x258] sm:$0xff]
        %v2301 = vld [vmem:[%s5 + $0x260] sm:$0xff]
        %v2302 = vld [vmem:[%s5 + $0x268] sm:$0xff]
        %v2303 = vld [vmem:[%s5 + $0x270] sm:$0xff]
        %v2304 = vld [vmem:[%s5 + $0x278] sm:$0xff]
        %v2305 = vld [vmem:[%s5 + $0x280] sm:$0xff]
        %v2306 = vld [vmem:[%s5 + $0x288] sm:$0xff]
        %v2307 = vld [vmem:[%s5 + $0x290] sm:$0xff]
        %v2308 = vld [vmem:[%s5 + $0x298] sm:$0xff]
        %v2309 = vld [vmem:[%s5 + $0x2a0] sm:$0xff]
        %v2310 = vld [vmem:[%s5 + $0x2a8] sm:$0xff]
        %v2311 = vld [vmem:[%s5 + $0x2b0] sm:$0xff]
        %v2312 = vld [vmem:[%s5 + $0x2b8] sm:$0xff]
        %v2313 = vld [vmem:[%s5 + $0x2c0] sm:$0xff]
        %v2314 = vld [vmem:[%s5 + $0x2c8] sm:$0xff]
        %v2315 = vld [vmem:[%s5 + $0x2d0] sm:$0xff]
        %v2316 = vld [vmem:[%s5 + $0x2d8] sm:$0xff]
        %v2317 = vld [vmem:[%s5 + $0x2e0] sm:$0xff]
        %v2318 = vld [vmem:[%s5 + $0x2e8] sm:$0xff]
        %v2319 = vld [vmem:[%s5 + $0x2f0] sm:$0xff]
        %v2320 = vld [vmem:[%s5 + $0x2f8] sm:$0xff]
        %v2321 = vld [vmem:[%s5 + $0x300] sm:$0xff]
        %v2322 = vld [vmem:[%s5 + $0x308] sm:$0xff]
        %v2323 = vld [vmem:[%s5 + $0x310] sm:$0xff]
        %v2324 = vld [vmem:[%s5 + $0x318] sm:$0xff]
        %v2325 = vld [vmem:[%s5 + $0x320] sm:$0xff]
        %v2326 = vld [vmem:[%s5 + $0x328] sm:$0xff]
        %v2327 = vld [vmem:[%s5 + $0x330] sm:$0xff]
        %v2328 = vld [vmem:[%s5 + $0x338] sm:$0xff]
        %v2329 = vld [vmem:[%s5 + $0x340] sm:$0xf]
        %v2330 = vld [vmem:[%s5 + $0x348] sm:$0xf]
        %v2331 = vld [vmem:[%s6] sm:$0x3]
        %v2333 = vlaneseq
        %v2334 = vshrl.u32 %v2333, 7
        %v2335 = vsub.s32 0, %v2334
        %v2336 = vrot.slane %v2331, %v2335
        %v2337 = vlaneseq
        %v2338 = vshrl.u32 %v2337, 7
        %v2339 = vsub.s32 1, %v2338
        %v2340 = vrot.slane %v2331, %v2339
        %vm2343 = vcmask 293888
        %v2344 = vsel %vm2343, %v2154, 0
        %v2346 = vsel %vm2343, %v2156, 0
        %v2348 = vsel %vm2343, %v2158, 0
        %v2350 = vsel %vm2343, %v2160, 0
        %v2352 = vsel %vm2343, %v2162, 0
        %v2354 = vsel %vm2343, %v2164, 0
        %v2356 = vsel %vm2343, %v2166, 0
        %v2358 = vsel %vm2343, %v2168, 0
        %v2360 = vsel %vm2343, %v2170, 0
        %v2362 = vsel %vm2343, %v2172, 0
        %v2365 = vsel %vm1175, %v2329, 0
        %v2368 = vsel %vm1175, %v2330, 0
        %2370 = vmatprep.subr.mxu0 %v2226
        %2371 = vmatpush1.msra.mxu0 %v2225
        %2372 = vmatprep.subr.mxu0 %v2228
        %2373 = vmatpush1.msra.mxu0 %v2227
        %2374 = vmatprep.subr.mxu0 %v2230
        %2375 = vmatpush1.msra.mxu0 %v2229
        %2376 = vmatprep.subr.mxu0 %v2232
        %2377 = vmatpush1.msra.mxu0 %v2231
        %2378 = vmatprep.subr.mxu0 %v2234
        %2379 = vmatpush1.msra.mxu0 %v2233
        %2380 = vmatprep.subr.mxu0 %v2236
        %2381 = vmatpush1.msra.mxu0 %v2235
        %2382 = vmatprep.subr.mxu0 %v2238
        %2383 = vmatpush1.msra.mxu0 %v2237
        %2384 = vmatprep.subr.mxu0 %v2240
        %2385 = vmatpush1.msra.mxu0 %v2239
        %2386 = vmatprep.subr.mxu0 %v2242
        %2387 = vmatpush1.msra.mxu0 %v2241
        %2388 = vmatprep.subr.mxu0 %v2244
        %2389 = vmatpush1.msra.mxu0 %v2243
        %2390 = vmatprep.subr.mxu0 %v2246
        %2391 = vmatpush1.msra.mxu0 %v2245
        %2392 = vmatprep.subr.mxu0 %v2248
        %2393 = vmatpush1.msra.mxu0 %v2247
        %2394 = vmatprep.subr.mxu0 %v2250
        %2395 = vmatpush1.msra.mxu0 %v2249
        %2396 = vmatprep.subr.mxu0 %v2252
        %2397 = vmatpush1.msra.mxu0 %v2251
        %2398 = vmatprep.subr.mxu0 %v2254
        %2399 = vmatpush1.msra.mxu0 %v2253
        %2400 = vmatprep.subr.mxu0 %v2256
        %2401 = vmatpush1.msra.mxu0 %v2255
        %2402 = vmatprep.subr.mxu0 %v2258
        %2403 = vmatpush1.msra.mxu0 %v2257
        %2404 = vmatprep.subr.mxu0 %v2260
        %2405 = vmatpush1.msra.mxu0 %v2259
        %2406 = vmatprep.subr.mxu0 %v2262
        %2407 = vmatpush1.msra.mxu0 %v2261
        %2408 = vmatprep.subr.mxu0 %v2264
        %2409 = vmatpush1.msra.mxu0 %v2263
        %2410 = vmatprep.subr.mxu0 %v2266
        %2411 = vmatpush1.msra.mxu0 %v2265
        %2412 = vmatprep.subr.mxu0 %v2268
        %2413 = vmatpush1.msra.mxu0 %v2267
        %2414 = vmatprep.subr.mxu0 %v2270
        %2415 = vmatpush1.msra.mxu0 %v2269
        %2416 = vmatprep.subr.mxu0 %v2272
        %2417 = vmatpush1.msra.mxu0 %v2271
        %2418 = vmatprep.subr.mxu0 %v2274
        %2419 = vmatpush1.msra.mxu0 %v2273
        %2420 = vmatprep.subr.mxu0 %v2276
        %2421 = vmatpush1.msra.mxu0 %v2275
        %2422 = vmatprep.subr.mxu0 %v2278
        %2423 = vmatpush1.msra.mxu0 %v2277
        %2424 = vmatprep.subr.mxu0 %v2280
        %2425 = vmatpush1.msra.mxu0 %v2279
        %2426 = vmatprep.subr.mxu0 %v2282
        %2427 = vmatpush1.msra.mxu0 %v2281
        %2428 = vmatprep.subr.mxu0 %v2284
        %2429 = vmatpush1.msra.mxu0 %v2283
        %2430 = vmatprep.subr.mxu0 %v2286
        %2431 = vmatpush1.msra.mxu0 %v2285
        %2432 = vmatprep.subr.mxu0 %v2288
        %2433 = vmatpush1.msra.mxu0 %v2287
        %2434 = vmatprep.mubr.f32.mxu0 %v2204
        %2435 = vmatmul.mubr.f32.gmra.mrb[0].mxu0 %v2183
        %v2436 = vpop.f32.mrb[0].mxu0
        %v2437 = vadd.f32 %v2336, %v2436
        %v2438 = vpop.f32.mrb[0].mxu0
        %v2439 = vadd.f32 %v2340, %v2438
        %2440 = vmatprep.mubr.f32.mxu0 %v2205
        %2441 = vmatmul.mubr.f32.gmra.mrb[0].mxu0 %v2184
        %v2442 = vpop.f32.mrb[0].mxu0
        %v2443 = vadd.f32 %v2336, %v2442
        %v2444 = vpop.f32.mrb[0].mxu0
        %v2445 = vadd.f32 %v2340, %v2444
        %2446 = vmatprep.mubr.f32.mxu0 %v2206
        %2447 = vmatmul.mubr.f32.gmra.mrb[0].mxu0 %v2185
        %v2448 = vpop.f32.mrb[0].mxu0
        %v2449 = vadd.f32 %v2336, %v2448
        %v2450 = vpop.f32.mrb[0].mxu0
        %v2451 = vadd.f32 %v2340, %v2450
        %2452 = vmatprep.mubr.f32.mxu0 %v2207
        %2453 = vmatmul.mubr.f32.gmra.mrb[0].mxu0 %v2186
        %v2454 = vpop.f32.mrb[0].mxu0
        %v2455 = vadd.f32 %v2336, %v2454
        %v2456 = vpop.f32.mrb[0].mxu0
        %v2457 = vadd.f32 %v2340, %v2456
        %2458 = vmatprep.mubr.f32.mxu0 %v2208
        %2459 = vmatmul.mubr.f32.gmra.mrb[0].mxu0 %v2187
        %v2460 = vpop.f32.mrb[0].mxu0
        %v2461 = vadd.f32 %v2336, %v2460
        %v2462 = vpop.f32.mrb[0].mxu0
        %v2463 = vadd.f32 %v2340, %v2462
        %2464 = vmatprep.mubr.f32.mxu0 %v2209
        %2465 = vmatmul.mubr.f32.gmra.mrb[0].mxu0 %v2188
        %v2466 = vpop.f32.mrb[0].mxu0
        %v2467 = vadd.f32 %v2336, %v2466
        %v2468 = vpop.f32.mrb[0].mxu0
        %v2469 = vadd.f32 %v2340, %v2468
        %2470 = vmatprep.mubr.f32.mxu0 %v2210
        %2471 = vmatmul.mubr.f32.gmra.mrb[0].mxu0 %v2189
        %v2472 = vpop.f32.mrb[0].mxu0
        %v2473 = vadd.f32 %v2336, %v2472
        %v2474 = vpop.f32.mrb[0].mxu0
        %v2475 = vadd.f32 %v2340, %v2474
        %2476 = vmatprep.mubr.f32.mxu0 %v2211
        %2477 = vmatmul.mubr.f32.gmra.mrb[0].mxu0 %v2190
        %v2478 = vpop.f32.mrb[0].mxu0
        %v2479 = vadd.f32 %v2336, %v2478
        %v2480 = vpop.f32.mrb[0].mxu0
        %v2481 = vadd.f32 %v2340, %v2480
        %2482 = vmatprep.mubr.f32.mxu0 %v2212
        %2483 = vmatmul.mubr.f32.gmra.mrb[0].mxu0 %v2191
        %v2484 = vpop.f32.mrb[0].mxu0
        %v2485 = vadd.f32 %v2336, %v2484
        %v2486 = vpop.f32.mrb[0].mxu0
        %v2487 = vadd.f32 %v2340, %v2486
        %2488 = vmatprep.mubr.f32.mxu0 %v2213
        %2489 = vmatmul.mubr.f32.gmra.mrb[0].mxu0 %v2192
        %v2490 = vpop.f32.mrb[0].mxu0
        %v2491 = vadd.f32 %v2336, %v2490
        %v2492 = vpop.f32.mrb[0].mxu0
        %v2493 = vadd.f32 %v2340, %v2492
        %2494 = vdwg.mxu0
        %2495 = vmatprep.subr.mxu0 %v2290
        %2496 = vmatpush1.msra.mxu0 %v2289
        %2497 = vmatprep.subr.mxu0 %v2292
        %2498 = vmatpush1.msra.mxu0 %v2291
        %2499 = vmatprep.subr.mxu0 %v2294
        %2500 = vmatpush1.msra.mxu0 %v2293
        %2501 = vmatprep.subr.mxu0 %v2296
        %2502 = vmatpush1.msra.mxu0 %v2295
        %2503 = vmatprep.subr.mxu0 %v2298
        %2504 = vmatpush1.msra.mxu0 %v2297
        %2505 = vmatprep.subr.mxu0 %v2300
        %2506 = vmatpush1.msra.mxu0 %v2299
        %2507 = vmatprep.subr.mxu0 %v2302
        %2508 = vmatpush1.msra.mxu0 %v2301
        %2509 = vmatprep.subr.mxu0 %v2304
        %2510 = vmatpush1.msra.mxu0 %v2303
        %2511 = vmatprep.subr.mxu0 %v2306
        %2512 = vmatpush1.msra.mxu0 %v2305
        %2513 = vmatprep.subr.mxu0 %v2308
        %2514 = vmatpush1.msra.mxu0 %v2307
        %2515 = vmatprep.subr.mxu0 %v2310
        %2516 = vmatpush1.msra.mxu0 %v2309
        %2517 = vmatprep.subr.mxu0 %v2312
        %2518 = vmatpush1.msra.mxu0 %v2311
        %2519 = vmatprep.subr.mxu0 %v2314
        %2520 = vmatpush1.msra.mxu0 %v2313
        %2521 = vmatprep.subr.mxu0 %v2316
        %2522 = vmatpush1.msra.mxu0 %v2315
        %2523 = vmatprep.subr.mxu0 %v2318
        %2524 = vmatpush1.msra.mxu0 %v2317
        %2525 = vmatprep.subr.mxu0 %v2320
        %2526 = vmatpush1.msra.mxu0 %v2319
        %2527 = vmatprep.subr.mxu0 %v2322
        %2528 = vmatpush1.msra.mxu0 %v2321
        %2529 = vmatprep.subr.mxu0 %v2324
        %2530 = vmatpush1.msra.mxu0 %v2323
        %2531 = vmatprep.subr.mxu0 %v2326
        %2532 = vmatpush1.msra.mxu0 %v2325
        %2533 = vmatprep.subr.mxu0 %v2328
        %2534 = vmatpush1.msra.mxu0 %v2327
        %2535 = vmatprep.subr.mxu0 %v2368
        %2536 = vmatpush1.msra.mxu0 %v2365
        %2537 = vmatprep.subr.mxu0 0.0
        %2538 = vmatpush1.msra.mxu0 0.0
        %2539 = vmatprep.subr.mxu0 0.0
        %2540 = vmatpush1.msra.mxu0 0.0
        %2541 = vmatprep.subr.mxu0 0.0
        %2542 = vmatpush1.msra.mxu0 0.0
        %2543 = vmatprep.subr.mxu0 0.0
        %2544 = vmatpush1.msra.mxu0 0.0
        %2545 = vmatprep.subr.mxu0 0.0
        %2546 = vmatpush1.msra.mxu0 0.0
        %2547 = vmatprep.subr.mxu0 0.0
        %2548 = vmatpush1.msra.mxu0 0.0
        %2549 = vmatprep.subr.mxu0 0.0
        %2550 = vmatpush1.msra.mxu0 0.0
        %2551 = vmatprep.subr.mxu0 0.0
        %2552 = vmatpush1.msra.mxu0 0.0
        %2553 = vmatprep.subr.mxu0 0.0
        %2554 = vmatpush1.msra.mxu0 0.0
        %2555 = vmatprep.subr.mxu0 0.0
        %2556 = vmatpush1.msra.mxu0 0.0
        %2557 = vmatprep.subr.mxu0 0.0
        %2558 = vmatpush1.msra.mxu0 0.0
        %2559 = vmatprep.mubr.f32.mxu0 %v2344
        %2560 = vmatmul.mubr.f32.gmra.mrb[0].mxu0 %v2215
        %v2561 = vpop.f32.mrb[0].mxu0
        %v2562 = vadd.f32 %v2437, %v2561
        %v2563 = vpop.f32.mrb[0].mxu0
        %v2564 = vadd.f32 %v2439, %v2563
        %2565 = vmatprep.mubr.f32.mxu0 %v2346
        %2566 = vmatmul.mubr.f32.gmra.mrb[0].mxu0 %v2216
        %v2567 = vpop.f32.mrb[0].mxu0
        %v2568 = vadd.f32 %v2443, %v2567
        %v2569 = vpop.f32.mrb[0].mxu0
        %v2570 = vadd.f32 %v2445, %v2569
        %2571 = vmatprep.mubr.f32.mxu0 %v2348
        %2572 = vmatmul.mubr.f32.gmra.mrb[0].mxu0 %v2217
        %v2573 = vpop.f32.mrb[0].mxu0
        %v2574 = vadd.f32 %v2449, %v2573
        %v2575 = vpop.f32.mrb[0].mxu0
        %v2576 = vadd.f32 %v2451, %v2575
        %2577 = vmatprep.mubr.f32.mxu0 %v2350
        %2578 = vmatmul.mubr.f32.gmra.mrb[0].mxu0 %v2218
        %v2579 = vpop.f32.mrb[0].mxu0
        %v2580 = vadd.f32 %v2455, %v2579
        %v2581 = vpop.f32.mrb[0].mxu0
        %v2582 = vadd.f32 %v2457, %v2581
        %2583 = vmatprep.mubr.f32.mxu0 %v2352
        %2584 = vmatmul.mubr.f32.gmra.mrb[0].mxu0 %v2219
        %v2585 = vpop.f32.mrb[0].mxu0
        %v2586 = vadd.f32 %v2461, %v2585
        %v2587 = vpop.f32.mrb[0].mxu0
        %v2588 = vadd.f32 %v2463, %v2587
        %2589 = vmatprep.mubr.f32.mxu0 %v2354
        %2590 = vmatmul.mubr.f32.gmra.mrb[0].mxu0 %v2220
        %v2591 = vpop.f32.mrb[0].mxu0
        %v2592 = vadd.f32 %v2467, %v2591
        %v2593 = vpop.f32.mrb[0].mxu0
        %v2594 = vadd.f32 %v2469, %v2593
        %2595 = vmatprep.mubr.f32.mxu0 %v2356
        %2596 = vmatmul.mubr.f32.gmra.mrb[0].mxu0 %v2221
        %v2597 = vpop.f32.mrb[0].mxu0
        %v2598 = vadd.f32 %v2473, %v2597
        %v2599 = vpop.f32.mrb[0].mxu0
        %v2600 = vadd.f32 %v2475, %v2599
        %2601 = vmatprep.mubr.f32.mxu0 %v2358
        %2602 = vmatmul.mubr.f32.gmra.mrb[0].mxu0 %v2222
        %v2603 = vpop.f32.mrb[0].mxu0
        %v2604 = vadd.f32 %v2479, %v2603
        %v2605 = vpop.f32.mrb[0].mxu0
        %v2606 = vadd.f32 %v2481, %v2605
        %2607 = vmatprep.mubr.f32.mxu0 %v2360
        %2608 = vmatmul.mubr.f32.gmra.mrb[0].mxu0 %v2223
        %v2609 = vpop.f32.mrb[0].mxu0
        %v2610 = vadd.f32 %v2485, %v2609
        %v2611 = vpop.f32.mrb[0].mxu0
        %v2612 = vadd.f32 %v2487, %v2611
        %2613 = vmatprep.mubr.f32.mxu0 %v2362
        %2614 = vmatmul.mubr.f32.gmra.mrb[0].mxu0 %v2224
        %v2615 = vpop.f32.mrb[0].mxu0
        %v2616 = vadd.f32 %v2491, %v2615
        %v2617 = vpop.f32.mrb[0].mxu0
        %v2618 = vadd.f32 %v2493, %v2617
        %2619 = vdwg.mxu0
        %v2620 = vmax.f32 %v2562, 0.0
        %v2621 = vmax.f32 %v2564, 0.0
        %v2622 = vmax.f32 %v2568, 0.0
        %v2623 = vmax.f32 %v2570, 0.0
        %v2624 = vmax.f32 %v2574, 0.0
        %v2625 = vmax.f32 %v2576, 0.0
        %v2626 = vmax.f32 %v2580, 0.0
        %v2627 = vmax.f32 %v2582, 0.0
        %v2628 = vmax.f32 %v2586, 0.0
        %v2629 = vmax.f32 %v2588, 0.0
        %v2630 = vmax.f32 %v2592, 0.0
        %v2631 = vmax.f32 %v2594, 0.0
        %v2632 = vmax.f32 %v2598, 0.0
        %v2633 = vmax.f32 %v2600, 0.0
        %v2634 = vmax.f32 %v2604, 0.0
        %v2635 = vmax.f32 %v2606, 0.0
        %v2636 = vmax.f32 %v2610, 0.0
        %v2637 = vmax.f32 %v2612, 0.0
        %v2638 = vmax.f32 %v2616, 0.0
        %v2639 = vmax.f32 %v2618, 0.0
        %v2640 = vld [vmem:[%s7] sm:$0xff]
        %v2641 = vld [vmem:[%s7 + $0x8] sm:$0xff]
        %v2642 = vld [vmem:[%s7 + $0x10] sm:$0xff]
        %v2643 = vld [vmem:[%s7 + $0x18] sm:$0xff]
        %v2644 = vld [vmem:[%s7 + $0x20] sm:$0xff]
        %v2645 = vld [vmem:[%s7 + $0x28] sm:$0xff]
        %v2646 = vld [vmem:[%s7 + $0x30] sm:$0xff]
        %v2647 = vld [vmem:[%s7 + $0x38] sm:$0xff]
        %v2648 = vld [vmem:[%s7 + $0x40] sm:$0xff]
        %v2649 = vld [vmem:[%s7 + $0x48] sm:$0xff]
        %v2650 = vld [vmem:[%s7 + $0x50] sm:$0xff]
        %v2651 = vld [vmem:[%s7 + $0x58] sm:$0xff]
        %v2652 = vld [vmem:[%s7 + $0x60] sm:$0xff]
        %v2653 = vld [vmem:[%s7 + $0x68] sm:$0xff]
        %v2654 = vld [vmem:[%s7 + $0x70] sm:$0xff]
        %v2655 = vld [vmem:[%s7 + $0x78] sm:$0xff]
        %v2656 = vld [vmem:[%s7 + $0x80] sm:$0xff]
        %v2657 = vld [vmem:[%s7 + $0x88] sm:$0xff]
        %v2658 = vld [vmem:[%s7 + $0x90] sm:$0xff]
        %v2659 = vld [vmem:[%s7 + $0x98] sm:$0xff]
        %vm2660 = vcmask 261120
        %v2662 = vsel %vm2660, %v2621, 0
        %v2665 = vsel %vm2660, %v2623, 0
        %v2668 = vsel %vm2660, %v2625, 0
        %v2671 = vsel %vm2660, %v2627, 0
        %v2674 = vsel %vm2660, %v2629, 0
        %v2677 = vsel %vm2660, %v2631, 0
        %v2680 = vsel %vm2660, %v2633, 0
        %v2683 = vsel %vm2660, %v2635, 0
        %v2686 = vsel %vm2660, %v2637, 0
        %v2689 = vsel %vm2660, %v2639, 0
        %2691 = vmatprep.subr.mxu0 0.0
        %2692 = vmatpush1.msra.mxu0 %v2640
        %2693 = vmatprep.subr.mxu0 0.0
        %2694 = vmatpush1.msra.mxu0 %v2641
        %2695 = vmatprep.subr.mxu0 0.0
        %2696 = vmatpush1.msra.mxu0 %v2642
        %2697 = vmatprep.subr.mxu0 0.0
        %2698 = vmatpush1.msra.mxu0 %v2643
        %2699 = vmatprep.subr.mxu0 0.0
        %2700 = vmatpush1.msra.mxu0 %v2644
        %2701 = vmatprep.subr.mxu0 0.0
        %2702 = vmatpush1.msra.mxu0 %v2645
        %2703 = vmatprep.subr.mxu0 0.0
        %2704 = vmatpush1.msra.mxu0 %v2646
        %2705 = vmatprep.subr.mxu0 0.0
        %2706 = vmatpush1.msra.mxu0 %v2647
        %2707 = vmatprep.subr.mxu0 0.0
        %2708 = vmatpush1.msra.mxu0 %v2648
        %2709 = vmatprep.subr.mxu0 0.0
        %2710 = vmatpush1.msra.mxu0 %v2649
        %2711 = vmatprep.subr.mxu0 0.0
        %2712 = vmatpush1.msra.mxu0 %v2650
        %2713 = vmatprep.subr.mxu0 0.0
        %2714 = vmatpush1.msra.mxu0 %v2651
        %2715 = vmatprep.subr.mxu0 0.0
        %2716 = vmatpush1.msra.mxu0 %v2652
        %2717 = vmatprep.subr.mxu0 0.0
        %2718 = vmatpush1.msra.mxu0 %v2653
        %2719 = vmatprep.subr.mxu0 0.0
        %2720 = vmatpush1.msra.mxu0 %v2654
        %2721 = vmatprep.subr.mxu0 0.0
        %2722 = vmatpush1.msra.mxu0 %v2655
        %2723 = vmatprep.subr.mxu0 0.0
        %2724 = vmatpush1.msra.mxu0 %v2656
        %2725 = vmatprep.subr.mxu0 0.0
        %2726 = vmatpush1.msra.mxu0 %v2657
        %2727 = vmatprep.subr.mxu0 0.0
        %2728 = vmatpush1.msra.mxu0 %v2658
        %2729 = vmatprep.subr.mxu0 0.0
        %2730 = vmatpush1.msra.mxu0 %v2659
        %2731 = vmatprep.subr.mxu0 0.0
        %2732 = vmatpush1.msra.mxu0 0.0
        %2733 = vmatprep.subr.mxu0 0.0
        %2734 = vmatpush1.msra.mxu0 0.0
        %2735 = vmatprep.subr.mxu0 0.0
        %2736 = vmatpush1.msra.mxu0 0.0
        %2737 = vmatprep.subr.mxu0 0.0
        %2738 = vmatpush1.msra.mxu0 0.0
        %2739 = vmatprep.subr.mxu0 0.0
        %2740 = vmatpush1.msra.mxu0 0.0
        %2741 = vmatprep.subr.mxu0 0.0
        %2742 = vmatpush1.msra.mxu0 0.0
        %2743 = vmatprep.subr.mxu0 0.0
        %2744 = vmatpush1.msra.mxu0 0.0
        %2745 = vmatprep.subr.mxu0 0.0
        %2746 = vmatpush1.msra.mxu0 0.0
        %2747 = vmatprep.subr.mxu0 0.0
        %2748 = vmatpush1.msra.mxu0 0.0
        %2749 = vmatprep.subr.mxu0 0.0
        %2750 = vmatpush1.msra.mxu0 0.0
        %2751 = vmatprep.subr.mxu0 0.0
        %2752 = vmatpush1.msra.mxu0 0.0
        %2753 = vmatprep.subr.mxu0 0.0
        %2754 = vmatpush1.msra.mxu0 0.0
        %2755 = vmatprep.mubr.f32.mxu0 %v2662
        %2756 = vmatmul.mubr.f32.gmra.mrb[0].mxu0 %v2620
        %v2757 = vpop.f32.mrb[0].mxu0
        %v2758 = vadd.f32 0.0, %v2757
        %v2759 = vpop.f32.mrb[0].mxu0
        %2760 = vmatprep.mubr.f32.mxu0 %v2665
        %2761 = vmatmul.mubr.f32.gmra.mrb[0].mxu0 %v2622
        %v2762 = vpop.f32.mrb[0].mxu0
        %v2763 = vadd.f32 0.0, %v2762
        %v2764 = vpop.f32.mrb[0].mxu0
        %2765 = vmatprep.mubr.f32.mxu0 %v2668
        %2766 = vmatmul.mubr.f32.gmra.mrb[0].mxu0 %v2624
        %v2767 = vpop.f32.mrb[0].mxu0
        %v2768 = vadd.f32 0.0, %v2767
        %v2769 = vpop.f32.mrb[0].mxu0
        %2770 = vmatprep.mubr.f32.mxu0 %v2671
        %2771 = vmatmul.mubr.f32.gmra.mrb[0].mxu0 %v2626
        %v2772 = vpop.f32.mrb[0].mxu0
        %v2773 = vadd.f32 0.0, %v2772
        %v2774 = vpop.f32.mrb[0].mxu0
        %2775 = vmatprep.mubr.f32.mxu0 %v2674
        %2776 = vmatmul.mubr.f32.gmra.mrb[0].mxu0 %v2628
        %v2777 = vpop.f32.mrb[0].mxu0
        %v2778 = vadd.f32 0.0, %v2777
        %v2779 = vpop.f32.mrb[0].mxu0
        %2780 = vmatprep.mubr.f32.mxu0 %v2677
        %2781 = vmatmul.mubr.f32.gmra.mrb[0].mxu0 %v2630
        %v2782 = vpop.f32.mrb[0].mxu0
        %v2783 = vadd.f32 0.0, %v2782
        %v2784 = vpop.f32.mrb[0].mxu0
        %2785 = vmatprep.mubr.f32.mxu0 %v2680
        %2786 = vmatmul.mubr.f32.gmra.mrb[0].mxu0 %v2632
        %v2787 = vpop.f32.mrb[0].mxu0
        %v2788 = vadd.f32 0.0, %v2787
        %v2789 = vpop.f32.mrb[0].mxu0
        %2790 = vmatprep.mubr.f32.mxu0 %v2683
        %2791 = vmatmul.mubr.f32.gmra.mrb[0].mxu0 %v2634
        %v2792 = vpop.f32.mrb[0].mxu0
        %v2793 = vadd.f32 0.0, %v2792
        %v2794 = vpop.f32.mrb[0].mxu0
        %2795 = vmatprep.mubr.f32.mxu0 %v2686
        %2796 = vmatmul.mubr.f32.gmra.mrb[0].mxu0 %v2636
        %v2797 = vpop.f32.mrb[0].mxu0
        %v2798 = vadd.f32 0.0, %v2797
        %v2799 = vpop.f32.mrb[0].mxu0
        %2800 = vmatprep.mubr.f32.mxu0 %v2689
        %2801 = vmatmul.mubr.f32.gmra.mrb[0].mxu0 %v2638
        %v2802 = vpop.f32.mrb[0].mxu0
        %v2803 = vadd.f32 0.0, %v2802
        %v2804 = vpop.f32.mrb[0].mxu0
        %2805 = vdwg.mxu0
        %v2806 = vld [vmem:[%s8] sm:$0xff]
        %v2807 = vld [vmem:[%s8 + $0x8] sm:$0xff]
        %v2808 = vld [vmem:[%s8 + $0x10] sm:$0xff]
        %v2809 = vld [vmem:[%s8 + $0x18] sm:$0xff]
        %v2810 = vld [vmem:[%s8 + $0x20] sm:$0xff]
        %v2811 = vld [vmem:[%s8 + $0x28] sm:$0xff]
        %v2812 = vld [vmem:[%s8 + $0x30] sm:$0xff]
        %v2813 = vld [vmem:[%s8 + $0x38] sm:$0xff]
        %v2814 = vld [vmem:[%s8 + $0x40] sm:$0xff]
        %v2815 = vld [vmem:[%s8 + $0x48] sm:$0xff]
        %v2816 = vld [vmem:[%s8 + $0x50] sm:$0xff]
        %v2817 = vld [vmem:[%s8 + $0x58] sm:$0xff]
        %v2818 = vld [vmem:[%s8 + $0x60] sm:$0xff]
        %v2819 = vld [vmem:[%s8 + $0x68] sm:$0xff]
        %v2820 = vld [vmem:[%s8 + $0x70] sm:$0xff]
        %v2821 = vld [vmem:[%s8 + $0x78] sm:$0xff]
        %v2822 = vld [vmem:[%s8 + $0x80] sm:$0xff]
        %v2823 = vld [vmem:[%s8 + $0x88] sm:$0xff]
        %v2824 = vld [vmem:[%s8 + $0x90] sm:$0xff]
        %v2825 = vld [vmem:[%s8 + $0x98] sm:$0xff]
        %2826 = vmatprep.subr.mxu0 0.0
        %2827 = vmatpush1.msra.mxu0 %v2806
        %2828 = vmatprep.subr.mxu0 0.0
        %2829 = vmatpush1.msra.mxu0 %v2807
        %2830 = vmatprep.subr.mxu0 0.0
        %2831 = vmatpush1.msra.mxu0 %v2808
        %2832 = vmatprep.subr.mxu0 0.0
        %2833 = vmatpush1.msra.mxu0 %v2809
        %2834 = vmatprep.subr.mxu0 0.0
        %2835 = vmatpush1.msra.mxu0 %v2810
        %2836 = vmatprep.subr.mxu0 0.0
        %2837 = vmatpush1.msra.mxu0 %v2811
        %2838 = vmatprep.subr.mxu0 0.0
        %2839 = vmatpush1.msra.mxu0 %v2812
        %2840 = vmatprep.subr.mxu0 0.0
        %2841 = vmatpush1.msra.mxu0 %v2813
        %2842 = vmatprep.subr.mxu0 0.0
        %2843 = vmatpush1.msra.mxu0 %v2814
        %2844 = vmatprep.subr.mxu0 0.0
        %2845 = vmatpush1.msra.mxu0 %v2815
        %2846 = vmatprep.subr.mxu0 0.0
        %2847 = vmatpush1.msra.mxu0 %v2816
        %2848 = vmatprep.subr.mxu0 0.0
        %2849 = vmatpush1.msra.mxu0 %v2817
        %2850 = vmatprep.subr.mxu0 0.0
        %2851 = vmatpush1.msra.mxu0 %v2818
        %2852 = vmatprep.subr.mxu0 0.0
        %2853 = vmatpush1.msra.mxu0 %v2819
        %2854 = vmatprep.subr.mxu0 0.0
        %2855 = vmatpush1.msra.mxu0 %v2820
        %2856 = vmatprep.subr.mxu0 0.0
        %2857 = vmatpush1.msra.mxu0 %v2821
        %2858 = vmatprep.subr.mxu0 0.0
        %2859 = vmatpush1.msra.mxu0 %v2822
        %2860 = vmatprep.subr.mxu0 0.0
        %2861 = vmatpush1.msra.mxu0 %v2823
        %2862 = vmatprep.subr.mxu0 0.0
        %2863 = vmatpush1.msra.mxu0 %v2824
        %2864 = vmatprep.subr.mxu0 0.0
        %2865 = vmatpush1.msra.mxu0 %v2825
        %2866 = vmatprep.subr.mxu0 0.0
        %2867 = vmatpush1.msra.mxu0 0.0
        %2868 = vmatprep.subr.mxu0 0.0
        %2869 = vmatpush1.msra.mxu0 0.0
        %2870 = vmatprep.subr.mxu0 0.0
        %2871 = vmatpush1.msra.mxu0 0.0
        %2872 = vmatprep.subr.mxu0 0.0
        %2873 = vmatpush1.msra.mxu0 0.0
        %2874 = vmatprep.subr.mxu0 0.0
        %2875 = vmatpush1.msra.mxu0 0.0
        %2876 = vmatprep.subr.mxu0 0.0
        %2877 = vmatpush1.msra.mxu0 0.0
        %2878 = vmatprep.subr.mxu0 0.0
        %2879 = vmatpush1.msra.mxu0 0.0
        %2880 = vmatprep.subr.mxu0 0.0
        %2881 = vmatpush1.msra.mxu0 0.0
        %2882 = vmatprep.subr.mxu0 0.0
        %2883 = vmatpush1.msra.mxu0 0.0
        %2884 = vmatprep.subr.mxu0 0.0
        %2885 = vmatpush1.msra.mxu0 0.0
        %2886 = vmatprep.subr.mxu0 0.0
        %2887 = vmatpush1.msra.mxu0 0.0
        %2888 = vmatprep.subr.mxu0 0.0
        %2889 = vmatpush1.msra.mxu0 0.0
        %2890 = vmatprep.mubr.f32.mxu0 %v2662
        %2891 = vmatmul.mubr.f32.gmra.mrb[0].mxu0 %v2620
        %v2892 = vpop.f32.mrb[0].mxu0
        %v2893 = vadd.f32 0.0, %v2892
        %v2894 = vpop.f32.mrb[0].mxu0
        %2895 = vmatprep.mubr.f32.mxu0 %v2665
        %2896 = vmatmul.mubr.f32.gmra.mrb[0].mxu0 %v2622
        %v2897 = vpop.f32.mrb[0].mxu0
        %v2898 = vadd.f32 0.0, %v2897
        %v2899 = vpop.f32.mrb[0].mxu0
        %2900 = vmatprep.mubr.f32.mxu0 %v2668
        %2901 = vmatmul.mubr.f32.gmra.mrb[0].mxu0 %v2624
        %v2902 = vpop.f32.mrb[0].mxu0
        %v2903 = vadd.f32 0.0, %v2902
        %v2904 = vpop.f32.mrb[0].mxu0
        %2905 = vmatprep.mubr.f32.mxu0 %v2671
        %2906 = vmatmul.mubr.f32.gmra.mrb[0].mxu0 %v2626
        %v2907 = vpop.f32.mrb[0].mxu0
        %v2908 = vadd.f32 0.0, %v2907
        %v2909 = vpop.f32.mrb[0].mxu0
        %2910 = vmatprep.mubr.f32.mxu0 %v2674
        %2911 = vmatmul.mubr.f32.gmra.mrb[0].mxu0 %v2628
        %v2912 = vpop.f32.mrb[0].mxu0
        %v2913 = vadd.f32 0.0, %v2912
        %v2914 = vpop.f32.mrb[0].mxu0
        %2915 = vmatprep.mubr.f32.mxu0 %v2677
        %2916 = vmatmul.mubr.f32.gmra.mrb[0].mxu0 %v2630
        %v2917 = vpop.f32.mrb[0].mxu0
        %v2918 = vadd.f32 0.0, %v2917
        %v2919 = vpop.f32.mrb[0].mxu0
        %2920 = vmatprep.mubr.f32.mxu0 %v2680
        %2921 = vmatmul.mubr.f32.gmra.mrb[0].mxu0 %v2632
        %v2922 = vpop.f32.mrb[0].mxu0
        %v2923 = vadd.f32 0.0, %v2922
        %v2924 = vpop.f32.mrb[0].mxu0
        %2925 = vmatprep.mubr.f32.mxu0 %v2683
        %2926 = vmatmul.mubr.f32.gmra.mrb[0].mxu0 %v2634
        %v2927 = vpop.f32.mrb[0].mxu0
        %v2928 = vadd.f32 0.0, %v2927
        %v2929 = vpop.f32.mrb[0].mxu0
        %2930 = vmatprep.mubr.f32.mxu0 %v2686
        %2931 = vmatmul.mubr.f32.gmra.mrb[0].mxu0 %v2636
        %v2932 = vpop.f32.mrb[0].mxu0
        %v2933 = vadd.f32 0.0, %v2932
        %v2934 = vpop.f32.mrb[0].mxu0
        %2935 = vmatprep.mubr.f32.mxu0 %v2689
        %2936 = vmatmul.mubr.f32.gmra.mrb[0].mxu0 %v2638
        %v2937 = vpop.f32.mrb[0].mxu0
        %v2938 = vadd.f32 0.0, %v2937
        %v2939 = vpop.f32.mrb[0].mxu0
        %2940 = vdwg.mxu0
        %v2941 = vmax.f32 %v2758, %v2893
        %v2942 = vmax.f32 %v2763, %v2898
        %v2943 = vmax.f32 %v2768, %v2903
        %v2944 = vmax.f32 %v2773, %v2908
        %v2945 = vmax.f32 %v2778, %v2913
        %v2946 = vmax.f32 %v2783, %v2918
        %v2947 = vmax.f32 %v2788, %v2923
        %v2948 = vmax.f32 %v2793, %v2928
        %v2949 = vmax.f32 %v2798, %v2933
        %v2950 = vmax.f32 %v2803, %v2938
        %v2951 = vmax.f32 %v2941, %v2942
        %v2952 = vmax.f32 %v2943, %v2944
        %v2953 = vmax.f32 %v2945, %v2946
        %v2954 = vmax.f32 %v2947, %v2948
        %v2955 = vmax.f32 %v2949, %v2950
        %2957 = vrot.lane.b32.xlu0 %v2952, 80
        %v2958 = vpop.permute.xlu0 %2957
        %2961 = vrot.lane.b32.xlu0 %v2953, 32
        %v2962 = vpop.permute.xlu0 %2961
        %2965 = vrot.lane.b32.xlu0 %v2954, 112
        %v2966 = vpop.permute.xlu0 %2965
        %2969 = vrot.lane.b32.xlu0 %v2955, 64
        %v2970 = vpop.permute.xlu0 %2969
        %v2972 = vsel %vm2214, %v2951, %v2958
        %v2973 = vsel %vm2660, %v2958, %v2962
        %v2974 = vsel %vm1041, %v2973, %v2966
        %vm2975 = vcmask 523264
        %v2976 = vsel %vm2975, %v2966, %v2970
        %v2977 = vld [vmem:[%s9] sm:$0xff]
        %v2978 = vld [vmem:[%s9 + $0x8] sm:$0xff]
        %v2979 = vld [vmem:[%s9 + $0x10] sm:$0xff]
        %v2980 = vld [vmem:[%s9 + $0x18] sm:$0xff]
        %v2981 = vld [vmem:[%s9 + $0x20] sm:$0xff]
        %v2982 = vld [vmem:[%s9 + $0x28] sm:$0xff]
        %v2983 = vld [vmem:[%s9 + $0x30] sm:$0xff]
        %v2984 = vld [vmem:[%s9 + $0x38] sm:$0xff]
        %v2985 = vld [vmem:[%s9 + $0x40] sm:$0xff]
        %v2986 = vld [vmem:[%s9 + $0x48] sm:$0xff]
        %v2987 = vld [vmem:[%s9 + $0x50] sm:$0xff]
        %v2988 = vld [vmem:[%s9 + $0x58] sm:$0xff]
        %v2989 = vld [vmem:[%s9 + $0x60] sm:$0xff]
        %v2990 = vld [vmem:[%s9 + $0x68] sm:$0xff]
        %v2991 = vld [vmem:[%s9 + $0x70] sm:$0xff]
        %v2992 = vld [vmem:[%s9 + $0x78] sm:$0xff]
        %v2993 = vld [vmem:[%s9 + $0x80] sm:$0xff]
        %v2994 = vld [vmem:[%s9 + $0x88] sm:$0xff]
        %v2995 = vld [vmem:[%s9 + $0x90] sm:$0xff]
        %v2996 = vld [vmem:[%s9 + $0x98] sm:$0xff]
        %v2997 = vld [vmem:[%s9 + $0xa0] sm:$0xff]
        %v2998 = vld [vmem:[%s9 + $0xa8] sm:$0xff]
        %v2999 = vld [vmem:[%s9 + $0xb0] sm:$0xff]
        %v3000 = vld [vmem:[%s9 + $0xb8] sm:$0xff]
        %v3001 = vld [vmem:[%s9 + $0xc0] sm:$0xff]
        %v3002 = vld [vmem:[%s9 + $0xc8] sm:$0xff]
        %v3003 = vld [vmem:[%s9 + $0xd0] sm:$0xff]
        %v3004 = vld [vmem:[%s9 + $0xd8] sm:$0xff]
        %v3005 = vld [vmem:[%s9 + $0xe0] sm:$0xff]
        %v3006 = vld [vmem:[%s9 + $0xe8] sm:$0xff]
        %v3007 = vld [vmem:[%s9 + $0xf0] sm:$0xff]
        %v3008 = vld [vmem:[%s9 + $0xf8] sm:$0xff]
        %v3009 = vld [vmem:[%s9 + $0x100] sm:$0xff]
        %v3010 = vld [vmem:[%s9 + $0x108] sm:$0xff]
        %v3011 = vld [vmem:[%s9 + $0x110] sm:$0xff]
        %v3012 = vld [vmem:[%s9 + $0x118] sm:$0xff]
        %v3013 = vld [vmem:[%s9 + $0x120] sm:$0xff]
        %v3014 = vld [vmem:[%s9 + $0x128] sm:$0xff]
        %v3015 = vld [vmem:[%s9 + $0x130] sm:$0xff]
        %v3016 = vld [vmem:[%s9 + $0x138] sm:$0xff]
        %v3017 = vld [vmem:[%s9 + $0x140] sm:$0xff]
        %v3018 = vld [vmem:[%s9 + $0x148] sm:$0xff]
        %v3019 = vld [vmem:[%s9 + $0x150] sm:$0xff]
        %v3020 = vld [vmem:[%s9 + $0x158] sm:$0xff]
        %v3021 = vld [vmem:[%s9 + $0x160] sm:$0xff]
        %v3022 = vld [vmem:[%s9 + $0x168] sm:$0xff]
        %v3023 = vld [vmem:[%s9 + $0x170] sm:$0xff]
        %v3024 = vld [vmem:[%s9 + $0x178] sm:$0xff]
        %v3025 = vld [vmem:[%s9 + $0x180] sm:$0xff]
        %v3026 = vld [vmem:[%s9 + $0x188] sm:$0xff]
        %v3027 = vld [vmem:[%s10] sm:$0x1]
        %v3029 = vlaneseq
        %v3030 = vshrl.u32 %v3029, 7
        %v3031 = vsub.s32 0, %v3030
        %v3032 = vrot.slane %v3027, %v3031
        %vm3034 = vcmask 130048
        %v3035 = vsel %vm3034, %v2970, 0
        %3037 = vmatprep.subr.mxu0 0.0
        %3038 = vmatpush1.msra.mxu0 %v2977
        %3039 = vmatprep.subr.mxu0 0.0
        %3040 = vmatpush1.msra.mxu0 %v2978
        %3041 = vmatprep.subr.mxu0 0.0
        %3042 = vmatpush1.msra.mxu0 %v2979
        %3043 = vmatprep.subr.mxu0 0.0
        %3044 = vmatpush1.msra.mxu0 %v2980
        %3045 = vmatprep.subr.mxu0 0.0
        %3046 = vmatpush1.msra.mxu0 %v2981
        %3047 = vmatprep.subr.mxu0 0.0
        %3048 = vmatpush1.msra.mxu0 %v2982
        %3049 = vmatprep.subr.mxu0 0.0
        %3050 = vmatpush1.msra.mxu0 %v2983
        %3051 = vmatprep.subr.mxu0 0.0
        %3052 = vmatpush1.msra.mxu0 %v2984
        %3053 = vmatprep.subr.mxu0 0.0
        %3054 = vmatpush1.msra.mxu0 %v2985
        %3055 = vmatprep.subr.mxu0 0.0
        %3056 = vmatpush1.msra.mxu0 %v2986
        %3057 = vmatprep.subr.mxu0 0.0
        %3058 = vmatpush1.msra.mxu0 %v2987
        %3059 = vmatprep.subr.mxu0 0.0
        %3060 = vmatpush1.msra.mxu0 %v2988
        %3061 = vmatprep.subr.mxu0 0.0
        %3062 = vmatpush1.msra.mxu0 %v2989
        %3063 = vmatprep.subr.mxu0 0.0
        %3064 = vmatpush1.msra.mxu0 %v2990
        %3065 = vmatprep.subr.mxu0 0.0
        %3066 = vmatpush1.msra.mxu0 %v2991
        %3067 = vmatprep.subr.mxu0 0.0
        %3068 = vmatpush1.msra.mxu0 %v2992
        %3069 = vmatprep.subr.mxu0 0.0
        %3070 = vmatpush1.msra.mxu0 %v2993
        %3071 = vmatprep.subr.mxu0 0.0
        %3072 = vmatpush1.msra.mxu0 %v2994
        %3073 = vmatprep.subr.mxu0 0.0
        %3074 = vmatpush1.msra.mxu0 %v2995
        %3075 = vmatprep.subr.mxu0 0.0
        %3076 = vmatpush1.msra.mxu0 %v2996
        %3077 = vmatprep.subr.mxu0 0.0
        %3078 = vmatpush1.msra.mxu0 %v2997
        %3079 = vmatprep.subr.mxu0 0.0
        %3080 = vmatpush1.msra.mxu0 %v2998
        %3081 = vmatprep.subr.mxu0 0.0
        %3082 = vmatpush1.msra.mxu0 %v2999
        %3083 = vmatprep.subr.mxu0 0.0
        %3084 = vmatpush1.msra.mxu0 %v3000
        %3085 = vmatprep.subr.mxu0 0.0
        %3086 = vmatpush1.msra.mxu0 %v3001
        %3087 = vmatprep.subr.mxu0 0.0
        %3088 = vmatpush1.msra.mxu0 %v3002
        %3089 = vmatprep.subr.mxu0 0.0
        %3090 = vmatpush1.msra.mxu0 %v3003
        %3091 = vmatprep.subr.mxu0 0.0
        %3092 = vmatpush1.msra.mxu0 %v3004
        %3093 = vmatprep.subr.mxu0 0.0
        %3094 = vmatpush1.msra.mxu0 %v3005
        %3095 = vmatprep.subr.mxu0 0.0
        %3096 = vmatpush1.msra.mxu0 %v3006
        %3097 = vmatprep.subr.mxu0 0.0
        %3098 = vmatpush1.msra.mxu0 %v3007
        %3099 = vmatprep.subr.mxu0 0.0
        %3100 = vmatpush1.msra.mxu0 %v3008
        %3101 = vmatprep.mubr.f32.mxu0 %v2974
        %3102 = vmatmul.mubr.f32.gmra.mrb[0].mxu0 %v2972
        %v3103 = vpop.f32.mrb[0].mxu0
        %v3104 = vadd.f32 %v3032, %v3103
        %v3105 = vpop.f32.mrb[0].mxu0
        %3106 = vdwg.mxu0
        %3107 = vmatprep.subr.mxu0 0.0
        %3108 = vmatpush1.msra.mxu0 %v3009
        %3109 = vmatprep.subr.mxu0 0.0
        %3110 = vmatpush1.msra.mxu0 %v3010
        %3111 = vmatprep.subr.mxu0 0.0
        %3112 = vmatpush1.msra.mxu0 %v3011
        %3113 = vmatprep.subr.mxu0 0.0
        %3114 = vmatpush1.msra.mxu0 %v3012
        %3115 = vmatprep.subr.mxu0 0.0
        %3116 = vmatpush1.msra.mxu0 %v3013
        %3117 = vmatprep.subr.mxu0 0.0
        %3118 = vmatpush1.msra.mxu0 %v3014
        %3119 = vmatprep.subr.mxu0 0.0
        %3120 = vmatpush1.msra.mxu0 %v3015
        %3121 = vmatprep.subr.mxu0 0.0
        %3122 = vmatpush1.msra.mxu0 %v3016
        %3123 = vmatprep.subr.mxu0 0.0
        %3124 = vmatpush1.msra.mxu0 %v3017
        %3125 = vmatprep.subr.mxu0 0.0
        %3126 = vmatpush1.msra.mxu0 %v3018
        %3127 = vmatprep.subr.mxu0 0.0
        %3128 = vmatpush1.msra.mxu0 %v3019
        %3129 = vmatprep.subr.mxu0 0.0
        %3130 = vmatpush1.msra.mxu0 %v3020
        %3131 = vmatprep.subr.mxu0 0.0
        %3132 = vmatpush1.msra.mxu0 %v3021
        %3133 = vmatprep.subr.mxu0 0.0
        %3134 = vmatpush1.msra.mxu0 %v3022
        %3135 = vmatprep.subr.mxu0 0.0
        %3136 = vmatpush1.msra.mxu0 %v3023
        %3137 = vmatprep.subr.mxu0 0.0
        %3138 = vmatpush1.msra.mxu0 %v3024
        %3139 = vmatprep.subr.mxu0 0.0
        %3140 = vmatpush1.msra.mxu0 %v3025
        %3141 = vmatprep.subr.mxu0 0.0
        %3142 = vmatpush1.msra.mxu0 %v3026
        %3143 = vmatprep.subr.mxu0 0.0
        %3144 = vmatpush1.msra.mxu0 0.0
        %3145 = vmatprep.subr.mxu0 0.0
        %3146 = vmatpush1.msra.mxu0 0.0
        %3147 = vmatprep.subr.mxu0 0.0
        %3148 = vmatpush1.msra.mxu0 0.0
        %3149 = vmatprep.subr.mxu0 0.0
        %3150 = vmatpush1.msra.mxu0 0.0
        %3151 = vmatprep.subr.mxu0 0.0
        %3152 = vmatpush1.msra.mxu0 0.0
        %3153 = vmatprep.subr.mxu0 0.0
        %3154 = vmatpush1.msra.mxu0 0.0
        %3155 = vmatprep.subr.mxu0 0.0
        %3156 = vmatpush1.msra.mxu0 0.0
        %3157 = vmatprep.subr.mxu0 0.0
        %3158 = vmatpush1.msra.mxu0 0.0
        %3159 = vmatprep.subr.mxu0 0.0
        %3160 = vmatpush1.msra.mxu0 0.0
        %3161 = vmatprep.subr.mxu0 0.0
        %3162 = vmatpush1.msra.mxu0 0.0
        %3163 = vmatprep.subr.mxu0 0.0
        %3164 = vmatpush1.msra.mxu0 0.0
        %3165 = vmatprep.subr.mxu0 0.0
        %3166 = vmatpush1.msra.mxu0 0.0
        %3167 = vmatprep.subr.mxu0 0.0
        %3168 = vmatpush1.msra.mxu0 0.0
        %3169 = vmatprep.subr.mxu0 0.0
        %3170 = vmatpush1.msra.mxu0 0.0
        %3171 = vmatprep.mubr.f32.mxu0 %v3035
        %3172 = vmatmul.mubr.f32.gmra.mrb[0].mxu0 %v2976
        %v3173 = vpop.f32.mrb[0].mxu0
        %v3174 = vadd.f32 %v3104, %v3173
        %v3175 = vpop.f32.mrb[0].mxu0
        %3176 = vdwg.mxu0
        %v3177 = vmax.f32 %v3174, 0.0
        %v3178 = vld [vmem:[%s11] sm:$0xff]
        %v3179 = vld [vmem:[%s11 + $0x8] sm:$0xff]
        %v3180 = vld [vmem:[%s11 + $0x10] sm:$0xff]
        %v3181 = vld [vmem:[%s11 + $0x18] sm:$0xff]
        %v3182 = vld [vmem:[%s11 + $0x20] sm:$0xff]
        %v3183 = vld [vmem:[%s11 + $0x28] sm:$0xff]
        %v3184 = vld [vmem:[%s11 + $0x30] sm:$0xff]
        %v3185 = vld [vmem:[%s11 + $0x38] sm:$0xff]
        %v3186 = vld [vmem:[%s11 + $0x40] sm:$0xff]
        %v3187 = vld [vmem:[%s11 + $0x48] sm:$0xff]
        %v3188 = vld [vmem:[%s11 + $0x50] sm:$0xff]
        %v3189 = vld [vmem:[%s11 + $0x58] sm:$0xff]
        %v3190 = vld [vmem:[%s11 + $0x60] sm:$0xff]
        %v3191 = vld [vmem:[%s11 + $0x68] sm:$0xff]
        %v3192 = vld [vmem:[%s11 + $0x70] sm:$0xff]
        %v3193 = vld [vmem:[%s12] sm:$0x1]
        %v3195 = vlaneseq
        %v3196 = vshrl.u32 %v3195, 7
        %v3197 = vsub.s32 0, %v3196
        %v3198 = vrot.slane %v3193, %v3197
        %vm3200 = vcmask 982016
        %v3202 = vsel %vm3200, %v3177, 0
        %3204 = vmatprep.subr.mxu0 0.0
        %3205 = vmatpush1.msra.mxu0 %v3178
        %3206 = vmatprep.subr.mxu0 0.0
        %3207 = vmatpush1.msra.mxu0 %v3179
        %3208 = vmatprep.subr.mxu0 0.0
        %3209 = vmatpush1.msra.mxu0 %v3180
        %3210 = vmatprep.subr.mxu0 0.0
        %3211 = vmatpush1.msra.mxu0 %v3181
        %3212 = vmatprep.subr.mxu0 0.0
        %3213 = vmatpush1.msra.mxu0 %v3182
        %3214 = vmatprep.subr.mxu0 0.0
        %3215 = vmatpush1.msra.mxu0 %v3183
        %3216 = vmatprep.subr.mxu0 0.0
        %3217 = vmatpush1.msra.mxu0 %v3184
        %3218 = vmatprep.subr.mxu0 0.0
        %3219 = vmatpush1.msra.mxu0 %v3185
        %3220 = vmatprep.subr.mxu0 0.0
        %3221 = vmatpush1.msra.mxu0 %v3186
        %3222 = vmatprep.subr.mxu0 0.0
        %3223 = vmatpush1.msra.mxu0 %v3187
        %3224 = vmatprep.subr.mxu0 0.0
        %3225 = vmatpush1.msra.mxu0 %v3188
        %3226 = vmatprep.subr.mxu0 0.0
        %3227 = vmatpush1.msra.mxu0 %v3189
        %3228 = vmatprep.subr.mxu0 0.0
        %3229 = vmatpush1.msra.mxu0 %v3190
        %3230 = vmatprep.subr.mxu0 0.0
        %3231 = vmatpush1.msra.mxu0 %v3191
        %3232 = vmatprep.subr.mxu0 0.0
        %3233 = vmatpush1.msra.mxu0 %v3192
        %3234 = vmatprep.subr.mxu0 0.0
        %3235 = vmatpush1.msra.mxu0 0.0
        %3236 = vmatprep.subr.mxu0 0.0
        %3237 = vmatpush1.msra.mxu0 0.0
        %3238 = vmatprep.subr.mxu0 0.0
        %3239 = vmatpush1.msra.mxu0 0.0
        %3240 = vmatprep.subr.mxu0 0.0
        %3241 = vmatpush1.msra.mxu0 0.0
        %3242 = vmatprep.subr.mxu0 0.0
        %3243 = vmatpush1.msra.mxu0 0.0
        %3244 = vmatprep.subr.mxu0 0.0
        %3245 = vmatpush1.msra.mxu0 0.0
        %3246 = vmatprep.subr.mxu0 0.0
        %3247 = vmatpush1.msra.mxu0 0.0
        %3248 = vmatprep.subr.mxu0 0.0
        %3249 = vmatpush1.msra.mxu0 0.0
        %3250 = vmatprep.subr.mxu0 0.0
        %3251 = vmatpush1.msra.mxu0 0.0
        %3252 = vmatprep.subr.mxu0 0.0
        %3253 = vmatpush1.msra.mxu0 0.0
        %3254 = vmatprep.subr.mxu0 0.0
        %3255 = vmatpush1.msra.mxu0 0.0
        %3256 = vmatprep.subr.mxu0 0.0
        %3257 = vmatpush1.msra.mxu0 0.0
        %3258 = vmatprep.subr.mxu0 0.0
        %3259 = vmatpush1.msra.mxu0 0.0
        %3260 = vmatprep.subr.mxu0 0.0
        %3261 = vmatpush1.msra.mxu0 0.0
        %3262 = vmatprep.subr.mxu0 0.0
        %3263 = vmatpush1.msra.mxu0 0.0
        %3264 = vmatprep.subr.mxu0 0.0
        %3265 = vmatpush1.msra.mxu0 0.0
        %3266 = vmatprep.subr.mxu0 0.0
        %3267 = vmatpush1.msra.mxu0 0.0
        %3268 = vmatprep.mubr.f32.mxu0 0.0
        %3269 = vmatmul.mubr.f32.gmra.mrb[0].mxu0 %v3202
        %v3270 = vpop.f32.mrb[0].mxu0
        %v3271 = vadd.f32 %v3198, %v3270
        %v3272 = vpop.f32.mrb[0].mxu0
        %3273 = vdwg.mxu0
        %v3274 = vmax.f32 %v3271, 0.0
        %v3275 = vld [vmem:[%s13] sm:$0xff]
        %v3276 = vld [vmem:[%s13 + $0x8] sm:$0xff]
        %v3277 = vld [vmem:[%s13 + $0x10] sm:$0xff]
        %v3278 = vld [vmem:[%s13 + $0x18] sm:$0xff]
        %v3279 = vld [vmem:[%s13 + $0x20] sm:$0xff]
        %v3280 = vld [vmem:[%s13 + $0x28] sm:$0xff]
        %v3281 = vld [vmem:[%s13 + $0x30] sm:$0xff]
        %v3282 = vld [vmem:[%s13 + $0x38] sm:$0xff]
        %v3283 = vld [vmem:[%s13 + $0x40] sm:$0xff]
        %v3284 = vld [vmem:[%s13 + $0x48] sm:$0xff]
        %v3285 = vld [vmem:[%s13 + $0x50] sm:$0xf]
        %v3286 = vld [vmem:[%s14] sm:$0x1]
        %v3288 = vlaneseq
        %v3289 = vshrl.u32 %v3288, 7
        %v3290 = vsub.s32 0, %v3289
        %v3291 = vrot.slane %v3286, %v3290
        %v3294 = vsel %vm1012, %v3274, 0
        %v3297 = vsel %vm1175, %v3285, 0
        %3299 = vmatprep.subr.mxu0 0.0
        %3300 = vmatpush1.msra.mxu0 %v3275
        %3301 = vmatprep.subr.mxu0 0.0
        %3302 = vmatpush1.msra.mxu0 %v3276
        %3303 = vmatprep.subr.mxu0 0.0
        %3304 = vmatpush1.msra.mxu0 %v3277
        %3305 = vmatprep.subr.mxu0 0.0
        %3306 = vmatpush1.msra.mxu0 %v3278
        %3307 = vmatprep.subr.mxu0 0.0
        %3308 = vmatpush1.msra.mxu0 %v3279
        %3309 = vmatprep.subr.mxu0 0.0
        %3310 = vmatpush1.msra.mxu0 %v3280
        %3311 = vmatprep.subr.mxu0 0.0
        %3312 = vmatpush1.msra.mxu0 %v3281
        %3313 = vmatprep.subr.mxu0 0.0
        %3314 = vmatpush1.msra.mxu0 %v3282
        %3315 = vmatprep.subr.mxu0 0.0
        %3316 = vmatpush1.msra.mxu0 %v3283
        %3317 = vmatprep.subr.mxu0 0.0
        %3318 = vmatpush1.msra.mxu0 %v3284
        %3319 = vmatprep.subr.mxu0 0.0
        %3320 = vmatpush1.msra.mxu0 %v3297
        %3321 = vmatprep.subr.mxu0 0.0
        %3322 = vmatpush1.msra.mxu0 0.0
        %3323 = vmatprep.subr.mxu0 0.0
        %3324 = vmatpush1.msra.mxu0 0.0
        %3325 = vmatprep.subr.mxu0 0.0
        %3326 = vmatpush1.msra.mxu0 0.0
        %3327 = vmatprep.subr.mxu0 0.0
        %3328 = vmatpush1.msra.mxu0 0.0
        %3329 = vmatprep.subr.mxu0 0.0
        %3330 = vmatpush1.msra.mxu0 0.0
        %3331 = vmatprep.subr.mxu0 0.0
        %3332 = vmatpush1.msra.mxu0 0.0
        %3333 = vmatprep.subr.mxu0 0.0
        %3334 = vmatpush1.msra.mxu0 0.0
        %3335 = vmatprep.subr.mxu0 0.0
        %3336 = vmatpush1.msra.mxu0 0.0
        %3337 = vmatprep.subr.mxu0 0.0
        %3338 = vmatpush1.msra.mxu0 0.0
        %3339 = vmatprep.subr.mxu0 0.0
        %3340 = vmatpush1.msra.mxu0 0.0
        %3341 = vmatprep.subr.mxu0 0.0
        %3342 = vmatpush1.msra.mxu0 0.0
        %3343 = vmatprep.subr.mxu0 0.0
        %3344 = vmatpush1.msra.mxu0 0.0
        %3345 = vmatprep.subr.mxu0 0.0
        %3346 = vmatpush1.msra.mxu0 0.0
        %3347 = vmatprep.subr.mxu0 0.0
        %3348 = vmatpush1.msra.mxu0 0.0
        %3349 = vmatprep.subr.mxu0 0.0
        %3350 = vmatpush1.msra.mxu0 0.0
        %3351 = vmatprep.subr.mxu0 0.0
        %3352 = vmatpush1.msra.mxu0 0.0
        %3353 = vmatprep.subr.mxu0 0.0
        %3354 = vmatpush1.msra.mxu0 0.0
        %3355 = vmatprep.subr.mxu0 0.0
        %3356 = vmatpush1.msra.mxu0 0.0
        %3357 = vmatprep.subr.mxu0 0.0
        %3358 = vmatpush1.msra.mxu0 0.0
        %3359 = vmatprep.subr.mxu0 0.0
        %3360 = vmatpush1.msra.mxu0 0.0
        %3361 = vmatprep.subr.mxu0 0.0
        %3362 = vmatpush1.msra.mxu0 0.0
        %3363 = vmatprep.mubr.f32.mxu0 0.0
        %3364 = vmatmul.mubr.f32.gmra.mrb[0].mxu0 %v3294
        %v3365 = vpop.f32.mrb[0].mxu0
        %v3366 = vadd.f32 %v3291, %v3365
        %v3367 = vpop.f32.mrb[0].mxu0
        %3368 = vdwg.mxu0
        %3369 = vst [vmem:[%s488] sm:$0xff] %v3366
        %s3370 = sand.u32 %s357, 1
        %s3371 = scalar_lea.sflag [#allocation4], %s3370
        %s3372 = sand.u32 %s357, 1
        %s3373 = smul.addr %s3372, 8
        %s3374 = scalar_lea.vmem [#allocation3], %s3373
        // Predicated region
        $region81: #{lenet_forward.1} parent=79 // pred_check
          %p3375 = pneg %p367
        $region82: #{lenet_forward.1} parent=79 // pred_check_branch
          %3377 = sbr.rel (%p3375) target = $region84
        $region83: #{lenet_forward.1} parent=79 // pred_region
          %s3379 = ssub.s32 128, 128
          %3380 = vsyncadd %s3371, %s3379
          %s3381 = smul.addr %s29, 128
          %s3382 = scalar_lea.hbm %s15, %s3381
          %s3384 = sshll.u32 %s3374, 4
          %s3385 = int_to_ptr.vmem [resolvable:$true] %s3384
          %3387 = dma.vmem_to_hbm [thread:$0]  %s3385, 128, %s3382, %s3371
        $region84: #{lenet_forward.1} parent=79 // pred_fallthru
          _
      $region80: #{lenet_forward.1} parent=5 // pred_fallthru
        _
      %p3388 = scmp.le.s32.totalorder 2, %s24
      // Predicated region
      $region85: #{lenet_forward.1} parent=5 // pred_check
        %p3389 = pneg %p3388
      $region86: #{lenet_forward.1} parent=5 // pred_check_branch
        %3391 = sbr.rel (%p3389) target = $region88
      $region87: #{lenet_forward.1} parent=5 // pred_region
        %s3392 = ssub.s32 %s24, 2
        // Predicated region
        $region89: #{lenet_forward.1} parent=87 // pred_check
          %p3393 = pneg %p373
        $region90: #{lenet_forward.1} parent=87 // pred_check_branch
          %3395 = sbr.rel (%p3393) target = $region92
        $region91: #{lenet_forward.1} parent=87 // pred_region
          %s3396 = sand.u32 %s358, 1
          %s3397 = scalar_lea.sflag [#allocation4], %s3396
          %s3398 = sand.u32 %s358, 1
          %s3399 = smul.addr %s3398, 8
          %s3400 = scalar_lea.vmem [#allocation3], %s3399
          %3401 = dma.done %s3397, 128
        $region92: #{lenet_forward.1} parent=87 // pred_fallthru
          _
      $region88: #{lenet_forward.1} parent=5 // pred_fallthru
        _
    $region6: #{lenet_forward.1} parent=1 // loop_footer
      %s28 = sadd.s32 1, %s24
    $region7: #{lenet_forward.1} parent=1 // loop_footer_branch
      %23 = sbr.rel target = $region3
    $region8: #{lenet_forward.1} parent=1 // loop_exit
      _
    %3402 = vsyncpa [#allocation4], 1
    %s3403 = scalar_lea.sflag [#allocation4], 1
    %3404 = vsyncpa %s3403, 1

</llo_original>
